<compile_context>
chip_gen: v5e
topology: v5e:2x2
jax: 0.10.0
libtpu: 0.0.40
codegen_flags: <defaults>
</compile_context>

<pallas_src>
import functools
import math

import jax
import jax.numpy as jnp
from jax import lax
from jax.experimental import pallas as pl
from jax.experimental.pallas import tpu as pltpu


# ---------------------------------------------------------------------------
# Helpers
# ---------------------------------------------------------------------------
def _gelu_tanh(x):
    # tanh-approximate GELU.  torch.nn.GELU() default is the exact-erf form;
    # the tanh form keeps the transcendental on the otherwise-idle EUP slot
    # (max abs deviation ~1e-3).
    c = 0.7978845608028654  # sqrt(2/pi)
    return 0.5 * x * (1.0 + jnp.tanh(c * (x + 0.044715 * x * x * x)))


def _weight_spec(shape):
    """BlockSpec for a grid-invariant weight: constant index_map -> the block is
    DMA'd once and kept resident across the whole grid."""
    n = len(shape)
    return pl.BlockSpec(shape, lambda b, i: (0,) * n)


# ---------------------------------------------------------------------------
# Kernel 1: batched Linear   out[b, tile] = x[b, tile] @ W + bias
# ---------------------------------------------------------------------------
def _linear_kernel(x_ref, w_ref, b_ref, o_ref):
    x = x_ref[0]                                              # (tn, K)
    y = jnp.dot(x.astype(w_ref.dtype), w_ref[...],
                preferred_element_type=jnp.float32) + b_ref[...]
    o_ref[0] = y.astype(o_ref.dtype)


def linear(x, w, b, *, out_dtype, tn):
    """x: (B, N, K), w: (K, M) bf16, b: (1, M) f32 -> (B, N, M) out_dtype."""
    B, N, K = x.shape
    M = w.shape[1]
    assert N % tn == 0
    return pl.pallas_call(
        _linear_kernel,
        out_shape=jax.ShapeDtypeStruct((B, N, M), out_dtype),
        grid=(B, N // tn),
        in_specs=[
            pl.BlockSpec((1, tn, K), lambda b, i: (b, i, 0)),
            _weight_spec((K, M)),
            _weight_spec((1, M)),
        ],
        out_specs=pl.BlockSpec((1, tn, M), lambda b, i: (b, i, 0)),
        compiler_params=pltpu.CompilerParams(
            dimension_semantics=("parallel", "parallel")),
    )(x, w, b)


# ---------------------------------------------------------------------------
# Kernel 2: one GNN-like processor layer (conv1d -> LN -> GELU -> node MLP -> +res)
# ---------------------------------------------------------------------------
def _gnn_layer_kernel(x_ref, xl_ref, xr_ref, gb_ref,
                      convw_ref, convb_ref, gamma_ref, beta_ref,
                      w1a_ref, w2_ref, b2_ref, o_ref, *, tn, hdim):
    i = pl.program_id(1)
    nt = pl.num_programs(1)

    # Residual comes straight from the (only) activation tile -- no duplicate input.
    x = x_ref[0]                                              # (tn, H) bf16

    # 2-row replicate halos for the k=5 conv.  Interior tiles read the last/first
    # rows of the neighbouring 16-row halo blocks; edge tiles replicate their own
    # first/last row (matches PyTorch padding_mode='replicate').
    left = jnp.where(i == 0,
                     jnp.broadcast_to(x[0:1, :], (2, hdim)),
                     xl_ref[0, 14:16, :])
    right = jnp.where(i == nt - 1,
                      jnp.broadcast_to(x[tn - 1:tn, :], (2, hdim)),
                      xr_ref[0, 0:2, :])
    xp = jnp.concatenate([left, x, right], axis=0)            # (tn + 4, H)

    # Conv1d(H, H, kernel_size=5, padding=2, replicate) folded into ONE deep MXU
    # contraction: stack the 5 shifted windows along K, multiply by the (5H, H)
    # tap-stacked weight (fills the 256-deep v6e/v7x MXU; no zero-init / VPU adds).
    xs = jnp.concatenate([xp[k:k + tn, :] for k in range(5)], axis=1)   # (tn, 5H)
    agg = jnp.dot(xs.astype(convw_ref.dtype), convw_ref[...],
                  preferred_element_type=jnp.float32) + convb_ref[...]

    # LayerNorm over features, single reduction pass, eps = 1e-5 (biased var, like torch).
    mean = jnp.mean(agg, axis=-1, keepdims=True)
    var = jnp.maximum(jnp.mean(agg * agg, axis=-1, keepdims=True) - mean * mean, 0.0)
    y = (agg - mean) * lax.rsqrt(var + 1e-5)
    y = y * gamma_ref[...] + beta_ref[...]
    y = _gelu_tanh(y)

    # node MLP on cat([y, global_embed], -1) without materializing the concat:
    # [y | g] @ W1 == y @ W1a + (g @ W1b + b1); the second term is the per-batch
    # gb row, pre-folded once in the wrapper (not recomputed per N-tile).
    h1 = jnp.dot(y.astype(w1a_ref.dtype), w1a_ref[...],
                 preferred_element_type=jnp.float32) + gb_ref[0]
    h1 = _gelu_tanh(h1)
    # Dropout(p=0.1) inside node_mlp is an eval-mode identity.
    # TODO(synk): train-mode stochastic dropout mask not reproduced.
    h2 = jnp.dot(h1.astype(w2_ref.dtype), w2_ref[...],
                 preferred_element_type=jnp.float32) + b2_ref[...]

    o_ref[0] = (x.astype(jnp.float32) + h2).astype(o_ref.dtype)


def gnn_layer(x, g_bias, p, *, tn):
    """x: (B, N, H) bf16, g_bias: (B, 1, H) f32, p: per-layer params -> (B, N, H) bf16."""
    B, N, H = x.shape
    assert N % tn == 0 and tn % 16 == 0, "node tiles must be multiples of 16 rows"
    nt = N // tn
    nb = tn // 16          # tile size measured in 16-row halo-block units
    n16 = N // 16          # number of 16-row blocks along N

    kernel = functools.partial(_gnn_layer_kernel, tn=tn, hdim=H)
    return pl.pallas_call(
        kernel,
        out_shape=jax.ShapeDtypeStruct((B, N, H), jnp.bfloat16),
        grid=(B, nt),
        in_specs=[
            # activation tile (also serves as the residual -- no padded copy, no 2nd slab)
            pl.BlockSpec((1, tn, H), lambda b, i: (b, i, 0)),
            # 16-row halo blocks just before / after the tile, clamped at the edges
            pl.BlockSpec((1, 16, H),
                         lambda b, i: (b, jnp.maximum(i * nb - 1, 0), 0)),
            pl.BlockSpec((1, 16, H),
                         lambda b, i: (b, jnp.minimum((i + 1) * nb, n16 - 1), 0)),
            # per-batch pre-folded global-embed bias (g @ W1b + b1)
            pl.BlockSpec((1, 1, H), lambda b, i: (b, 0, 0)),
            _weight_spec((5 * H, H)),    # conv weight, taps stacked along K
            _weight_spec((1, H)),        # conv bias
            _weight_spec((1, H)),        # LN gamma
            _weight_spec((1, H)),        # LN beta
            _weight_spec((H, H)),        # node-MLP W1 (activation part)
            _weight_spec((H, H)),        # node-MLP W2
            _weight_spec((1, H)),        # node-MLP b2
        ],
        out_specs=pl.BlockSpec((1, tn, H), lambda b, i: (b, i, 0)),
        compiler_params=pltpu.CompilerParams(
            dimension_semantics=("parallel", "parallel")),
    )(x, x, x, g_bias,
      p["conv_w"], p["conv_b"], p["gamma"], p["beta"],
      p["w1a"], p["w2"], p["b2"])


# ---------------------------------------------------------------------------
# Full forward
# ---------------------------------------------------------------------------
def _pick_tn(n, target=512):
    """Largest multiple-of-16 divisor of n that is <= target (node-tile size)."""
    if n % 16:
        # TODO(synk): ragged / unaligned N would need a masked tail tile.
        raise ValueError("node count N must be a multiple of 16")
    tn = 16
    for cand in range(16, min(n, target) + 1, 16):
        if n % cand == 0:
            tn = cand
    return tn


def gnn_like_processor_forward(x, global_boundary_embed, params, *, tn=None):
    B, N, _ = x.shape
    if tn is None:
        tn = _pick_tn(N)
    h = linear(x, params["w_in"], params["b_in"], out_dtype=jnp.bfloat16, tn=tn)
    for lp in params["layers"]:
        # Tiny (B,G)@(G,H) fold of the global embed through the first node-MLP
        # linear, computed once per batch per layer (plain-JAX glue by design).
        gb = global_boundary_embed.astype(jnp.float32) @ lp["w1b"] + lp["b1"]
        h = gnn_layer(h, gb.reshape(B, 1, -1), lp, tn=tn)
    return linear(h, params["w_out"], params["b_out"], out_dtype=jnp.float32, tn=tn)


# ---------------------------------------------------------------------------
# Deterministic parameter init (shapes from GNNLikeProcessor.__init__)
# ---------------------------------------------------------------------------
def init_params(key, d_in, d_out, hidden, num_layers, g_dim):
    ks = jax.random.split(key, num_layers + 2)

    def lin(k, fan_in, fan_out):
        kw, kb = jax.random.split(k)
        bound = 1.0 / math.sqrt(fan_in)
        w = jax.random.uniform(kw, (fan_in, fan_out), jnp.float32, -bound, bound)
        b = jax.random.uniform(kb, (1, fan_out), jnp.float32, -bound, bound)
        return w, b

    w_in, b_in = lin(ks[0], d_in, hidden)
    layers = []
    for i in range(num_layers):
        kc, kcb, k1, k2 = jax.random.split(ks[1 + i], 4)
        cbound = 1.0 / math.sqrt(hidden * 5)
        # Conv1d weight: torch layout is (H_out, H_in, 5).  Kernel layout here is
        # tap-major (5, H_in, H_out) reshaped to (5H, H): from torch weights use
        # w.permute(2, 1, 0).reshape(5*H, H)  (tap k pairs with window row n+k).
        conv_w = jax.random.uniform(kc, (5, hidden, hidden), jnp.float32, -cbound, cbound)
        conv_b = jax.random.uniform(kcb, (1, hidden), jnp.float32, -cbound, cbound)
        w1, b1 = lin(k1, hidden + g_dim, hidden)    # node_mlp Linear(H+G -> H)
        w2, b2 = lin(k2, hidden, hidden)            # node_mlp Linear(H -> H)
        layers.append(dict(
            conv_w=conv_w.reshape(5 * hidden, hidden).astype(jnp.bfloat16),
            conv_b=conv_b,
            gamma=jnp.ones((1, hidden), jnp.float32),
            beta=jnp.zeros((1, hidden), jnp.float32),
            w1a=w1[:hidden].astype(jnp.bfloat16),   # activation part of W1 (H, H)
            w1b=w1[hidden:],                        # global-embed part (G, H), f32, folded in wrapper
            b1=b1,
            w2=w2.astype(jnp.bfloat16),
            b2=b2))
    w_out, b_out = lin(ks[-1], hidden, d_out)
    return dict(w_in=w_in.astype(jnp.bfloat16), b_in=b_in, layers=layers,
                w_out=w_out.astype(jnp.bfloat16), b_out=b_out)


# ---------------------------------------------------------------------------
# Pure-JAX reference (f32, same bf16-rounded weight values) for a sanity check
# ---------------------------------------------------------------------------
def _reference_forward(x, g, params):
    h = x @ params["w_in"].astype(jnp.float32) + params["b_in"]
    for lp in params["layers"]:
        res = h
        hp = jnp.pad(h, ((0, 0), (2, 2), (0, 0)), mode="edge")     # replicate pad
        B, N, H = h.shape
        xs = jnp.concatenate([hp[:, k:k + N, :] for k in range(5)], axis=-1)
        agg = xs @ lp["conv_w"].astype(jnp.float32) + lp["conv_b"]
        mean = agg.mean(-1, keepdims=True)
        var = jnp.maximum((agg * agg).mean(-1, keepdims=True) - mean * mean, 0.0)
        y = (agg - mean) * lax.rsqrt(var + 1e-5) * lp["gamma"] + lp["beta"]
        y = _gelu_tanh(y)
        gb = g @ lp["w1b"] + lp["b1"]                               # (B, H)
        h1 = _gelu_tanh(y @ lp["w1a"].astype(jnp.float32) + gb[:, None, :])
        h2 = h1 @ lp["w2"].astype(jnp.float32) + lp["b2"]
        h = res + h2
    return h @ params["w_out"].astype(jnp.float32) + params["b_out"]


if __name__ == "__main__":
    B, N = 2, 64                 # batch, number of nodes (sequence length)
    D_IN, D_OUT = 8, 4           # input_dim, output_dim
    H, G = 128, 16               # hidden_dim (lane-dense), global_embed_dim
    L = 2                        # num_layers
    TN = 16                      # node-tile size (small so the multi-tile halo path runs)

    key = jax.random.PRNGKey(0)
    k_x, k_g, k_p = jax.random.split(key, 3)
    x = jax.random.normal(k_x, (B, N, D_IN), jnp.float32)
    global_boundary_embed = jax.random.normal(k_g, (B, G), jnp.float32)
    params = init_params(k_p, D_IN, D_OUT, H, L, G)

    fwd = jax.jit(functools.partial(gnn_like_processor_forward, tn=TN))
    out = fwd(x, global_boundary_embed, params)
    jax.block_until_ready(out)
    assert out.shape == (B, N, D_OUT), out.shape
    assert out.dtype == jnp.float32

    # Loose tolerance: reference is pure f32, kernel path keeps bf16 activations
    # between layers and uses bf16 MXU matmuls with f32 accumulation.
    ref = _reference_forward(x, global_boundary_embed.astype(jnp.float32), params)
    max_err = float(jnp.max(jnp.abs(out - ref)))
    assert max_err < 0.3, f"kernel/reference mismatch: max abs err {max_err}"

    print("KERNEL_OK")
</pallas_src>

<mosaic_0001>
module attributes {stable_mosaic.version = 11 : i64} {
  func.func @_linear_kernel(%arg0: i32, %arg1: i32, %arg2: memref<1x16x8xf32, #tpu.memory_space<vmem>>, %arg3: memref<8x128xbf16, #tpu.memory_space<vmem>>, %arg4: memref<1x128xf32, #tpu.memory_space<vmem>>, %arg5: memref<1x16x128xbf16, #tpu.memory_space<vmem>>) attributes {dimension_semantics = [#tpu.dimension_semantics<parallel>, #tpu.dimension_semantics<parallel>], iteration_bounds = array<i64: 2, 4>, scalar_prefetch = 0 : i64, scratch_operands = 0 : i64, tpu.core_type = #tpu.core_type<tc>, window_params = [{transform_indices = @transform_0, window_bounds = array<i64: 1, 16, 8>}, {pipeline_mode = #tpu.pipeline_mode<synchronous>, transform_indices = @transform_1, window_bounds = array<i64: 8, 128>}, {pipeline_mode = #tpu.pipeline_mode<synchronous>, transform_indices = @transform_2, window_bounds = array<i64: 1, 128>}, {transform_indices = @transform_3, window_bounds = array<i64: 1, 16, 128>}]} {
    %c0 = arith.constant 0 : index
    %c0_0 = arith.constant 0 : index
    %c0_1 = arith.constant 0 : index
    %0 = vector.load %arg2[%c0, %c0_0, %c0_1] : memref<1x16x8xf32, #tpu.memory_space<vmem>>, vector<1x16x8xf32>
    %1 = vector.shape_cast %0 : vector<1x16x8xf32> to vector<16x8xf32>
    %2 = arith.truncf %1 : vector<16x8xf32> to vector<16x8xbf16>
    %c0_2 = arith.constant 0 : index
    %c0_3 = arith.constant 0 : index
    %3 = vector.load %arg3[%c0_2, %c0_3] : memref<8x128xbf16, #tpu.memory_space<vmem>>, vector<8x128xbf16>
    %cst = arith.constant dense<0.000000e+00> : vector<16x128xf32>
    %4 = tpu.matmul %2, %3, %cst {dimension_numbers = #tpu.dot_dimension_numbers<[1], [0], [0], [1], [0, 0, 1, 1], [], []>} : vector<16x8xbf16>, vector<8x128xbf16>, vector<16x128xf32> -> vector<16x128xf32>
    %c0_4 = arith.constant 0 : index
    %c0_5 = arith.constant 0 : index
    %5 = vector.load %arg4[%c0_4, %c0_5] : memref<1x128xf32, #tpu.memory_space<vmem>>, vector<1x128xf32>
    %6 = vector.broadcast %5 : vector<1x128xf32> to vector<16x128xf32>
    %7 = arith.addf %4, %6 : vector<16x128xf32>
    %8 = arith.truncf %7 : vector<16x128xf32> to vector<16x128xbf16>
    %c0_6 = arith.constant 0 : index
    %c0_7 = arith.constant 0 : index
    %c0_8 = arith.constant 0 : index
    %9 = vector.load %arg5[%c0_6, %c0_7, %c0_8] : memref<1x16x128xbf16, #tpu.memory_space<vmem>>, vector<1x16x128xbf16>
    %10 = vector.shape_cast %9 : vector<1x16x128xbf16> to vector<16x128xbf16>
    %11 = vector.shape_cast %8 : vector<16x128xbf16> to vector<1x16x128xbf16>
    tpu.vector_store %arg5[%c0_6, %c0_7, %c0_8], %11 {strides = array<i32>} : memref<1x16x128xbf16, #tpu.memory_space<vmem>>, vector<1x16x128xbf16>,
    return
  }
  func.func @transform_0(%arg0: i32, %arg1: i32) -> (i32, i32, i32) {
    %c0_i32 = arith.constant 0 : i32
    %c0_i32_0 = arith.constant 0 : i32
    return %arg0, %arg1, %c0_i32 : i32, i32, i32
  }
  func.func @transform_1(%arg0: i32, %arg1: i32) -> (i32, i32) {
    %c0_i32 = arith.constant 0 : i32
    %c0_i32_0 = arith.constant 0 : i32
    %c0_i32_1 = arith.constant 0 : i32
    return %c0_i32, %c0_i32_0 : i32, i32
  }
  func.func @transform_2(%arg0: i32, %arg1: i32) -> (i32, i32) {
    %c0_i32 = arith.constant 0 : i32
    %c0_i32_0 = arith.constant 0 : i32
    %c0_i32_1 = arith.constant 0 : i32
    return %c0_i32, %c0_i32_0 : i32, i32
  }
  func.func @transform_3(%arg0: i32, %arg1: i32) -> (i32, i32, i32) {
    %c0_i32 = arith.constant 0 : i32
    %c0_i32_0 = arith.constant 0 : i32
    return %arg0, %arg1, %c0_i32 : i32, i32, i32
  }
}

module attributes {stable_mosaic.version = 11 : i64} {
  func.func @_gnn_layer_kernel(%arg0: i32, %arg1: i32, %arg2: memref<1x16x128xbf16, #tpu.memory_space<vmem>>, %arg3: memref<1x16x128xbf16, #tpu.memory_space<vmem>>, %arg4: memref<1x16x128xbf16, #tpu.memory_space<vmem>>, %arg5: memref<1x1x128xf32, #tpu.memory_space<vmem>>, %arg6: memref<640x128xbf16, #tpu.memory_space<vmem>>, %arg7: memref<1x128xf32, #tpu.memory_space<vmem>>, %arg8: memref<1x128xf32, #tpu.memory_space<vmem>>, %arg9: memref<1x128xf32, #tpu.memory_space<vmem>>, %arg10: memref<128x128xbf16, #tpu.memory_space<vmem>>, %arg11: memref<128x128xbf16, #tpu.memory_space<vmem>>, %arg12: memref<1x128xf32, #tpu.memory_space<vmem>>, %arg13: memref<1x16x128xbf16, #tpu.memory_space<vmem>>) attributes {dimension_semantics = [#tpu.dimension_semantics<parallel>, #tpu.dimension_semantics<parallel>], iteration_bounds = array<i64: 2, 4>, scalar_prefetch = 0 : i64, scratch_operands = 0 : i64, tpu.core_type = #tpu.core_type<tc>, window_params = [{transform_indices = @transform_0, window_bounds = array<i64: 1, 16, 128>}, {transform_indices = @transform_1, window_bounds = array<i64: 1, 16, 128>}, {transform_indices = @transform_2, window_bounds = array<i64: 1, 16, 128>}, {transform_indices = @transform_3, window_bounds = array<i64: 1, 1, 128>}, {pipeline_mode = #tpu.pipeline_mode<synchronous>, transform_indices = @transform_4, window_bounds = array<i64: 640, 128>}, {pipeline_mode = #tpu.pipeline_mode<synchronous>, transform_indices = @transform_5, window_bounds = array<i64: 1, 128>}, {pipeline_mode = #tpu.pipeline_mode<synchronous>, transform_indices = @transform_6, window_bounds = array<i64: 1, 128>}, {pipeline_mode = #tpu.pipeline_mode<synchronous>, transform_indices = @transform_7, window_bounds = array<i64: 1, 128>}, {pipeline_mode = #tpu.pipeline_mode<synchronous>, transform_indices = @transform_8, window_bounds = array<i64: 128, 128>}, {pipeline_mode = #tpu.pipeline_mode<synchronous>, transform_indices = @transform_9, window_bounds = array<i64: 128, 128>}, {pipeline_mode = #tpu.pipeline_mode<synchronous>, transform_indices = @transform_10, window_bounds = array<i64: 1, 128>}, {transform_indices = @transform_11, window_bounds = array<i64: 1, 16, 128>}]} {
    %c0 = arith.constant 0 : index
    %c0_0 = arith.constant 0 : index
    %c0_1 = arith.constant 0 : index
    %0 = vector.load %arg2[%c0, %c0_0, %c0_1] : memref<1x16x128xbf16, #tpu.memory_space<vmem>>, vector<1x16x128xbf16>
    %1 = vector.shape_cast %0 : vector<1x16x128xbf16> to vector<16x128xbf16>
    %c0_i32 = arith.constant 0 : i32
    %2 = arith.cmpi eq, %arg1, %c0_i32 : i32
    %3 = vector.extract_strided_slice %1 {offsets = [0, 0], sizes = [1, 128], strides = [1, 1]} : vector<16x128xbf16> to vector<1x128xbf16>
    %4 = vector.shape_cast %3 : vector<1x128xbf16> to vector<1x128xbf16>
    %5 = vector.broadcast %4 : vector<1x128xbf16> to vector<2x128xbf16>
    %c0_2 = arith.constant 0 : index
    %c14 = arith.constant 14 : index
    %c0_3 = arith.constant 0 : index
    %6 = vector.load %arg3[%c0_2, %c14, %c0_3] : memref<1x16x128xbf16, #tpu.memory_space<vmem>>, vector<1x2x128xbf16>
    %7 = vector.shape_cast %6 : vector<1x2x128xbf16> to vector<2x128xbf16>
    %8 = arith.select %2, %5, %7 : vector<2x128xbf16>
    %c3_i32 = arith.constant 3 : i32
    %9 = arith.cmpi eq, %arg1, %c3_i32 : i32
    %10 = vector.extract_strided_slice %1 {offsets = [15, 0], sizes = [1, 128], strides = [1, 1]} : vector<16x128xbf16> to vector<1x128xbf16>
    %11 = vector.shape_cast %10 : vector<1x128xbf16> to vector<1x128xbf16>
    %12 = vector.broadcast %11 : vector<1x128xbf16> to vector<2x128xbf16>
    %c0_4 = arith.constant 0 : index
    %c0_5 = arith.constant 0 : index
    %c0_6 = arith.constant 0 : index
    %13 = vector.load %arg4[%c0_4, %c0_5, %c0_6] : memref<1x16x128xbf16, #tpu.memory_space<vmem>>, vector<1x2x128xbf16>
    %14 = vector.shape_cast %13 : vector<1x2x128xbf16> to vector<2x128xbf16>
    %15 = arith.select %9, %12, %14 : vector<2x128xbf16>
    %16 = tpu.concatenate %8, %1, %15 in 0 : vector<2x128xbf16>, vector<16x128xbf16>, vector<2x128xbf16> -> vector<20x128xbf16>
    %17 = vector.extract_strided_slice %16 {offsets = [0, 0], sizes = [16, 128], strides = [1, 1]} : vector<20x128xbf16> to vector<16x128xbf16>
    %18 = vector.extract_strided_slice %16 {offsets = [1, 0], sizes = [16, 128], strides = [1, 1]} : vector<20x128xbf16> to vector<16x128xbf16>
    %19 = vector.extract_strided_slice %16 {offsets = [2, 0], sizes = [16, 128], strides = [1, 1]} : vector<20x128xbf16> to vector<16x128xbf16>
    %20 = vector.extract_strided_slice %16 {offsets = [3, 0], sizes = [16, 128], strides = [1, 1]} : vector<20x128xbf16> to vector<16x128xbf16>
    %21 = vector.extract_strided_slice %16 {offsets = [4, 0], sizes = [16, 128], strides = [1, 1]} : vector<20x128xbf16> to vector<16x128xbf16>
    %22 = tpu.concatenate %17, %18, %19, %20, %21 in 1 : vector<16x128xbf16>, vector<16x128xbf16>, vector<16x128xbf16>, vector<16x128xbf16>, vector<16x128xbf16> -> vector<16x640xbf16>
    %c0_7 = arith.constant 0 : index
    %c0_8 = arith.constant 0 : index
    %23 = vector.load %arg6[%c0_7, %c0_8] : memref<640x128xbf16, #tpu.memory_space<vmem>>, vector<640x128xbf16>
    %cst = arith.constant dense<0.000000e+00> : vector<16x128xf32>
    %24 = tpu.matmul %22, %23, %cst {dimension_numbers = #tpu.dot_dimension_numbers<[1], [0], [0], [1], [0, 0, 1, 1], [], []>} : vector<16x640xbf16>, vector<640x128xbf16>, vector<16x128xf32> -> vector<16x128xf32>
    %c0_9 = arith.constant 0 : index
    %c0_10 = arith.constant 0 : index
    %25 = vector.load %arg7[%c0_9, %c0_10] : memref<1x128xf32, #tpu.memory_space<vmem>>, vector<1x128xf32>
    %26 = vector.broadcast %25 : vector<1x128xf32> to vector<16x128xf32>
    %27 = arith.addf %24, %26 : vector<16x128xf32>
    %cst_11 = arith.constant dense<0.000000e+00> : vector<16xf32>
    %28 = vector.multi_reduction <add>, %27, %cst_11 [1] : vector<16x128xf32> to vector<16xf32>
    %29 = vector.shape_cast %28 : vector<16xf32> to vector<16x1xf32>
    %cst_12 = arith.constant 1.280000e+02 : f32
    %30 = vector.broadcast %cst_12 : f32 to vector<16x1xf32>
    %31 = arith.divf %29, %30 : vector<16x1xf32>
    %32 = arith.mulf %27, %27 : vector<16x128xf32>
    %cst_13 = arith.constant dense<0.000000e+00> : vector<16xf32>
    %33 = vector.multi_reduction <add>, %32, %cst_13 [1] : vector<16x128xf32> to vector<16xf32>
    %34 = vector.shape_cast %33 : vector<16xf32> to vector<16x1xf32>
    %cst_14 = arith.constant 1.280000e+02 : f32
    %35 = vector.broadcast %cst_14 : f32 to vector<16x1xf32>
    %36 = arith.divf %34, %35 : vector<16x1xf32>
    %37 = arith.mulf %31, %31 : vector<16x1xf32>
    %38 = arith.subf %36, %37 : vector<16x1xf32>
    %cst_15 = arith.constant 0.000000e+00 : f32
    %39 = vector.broadcast %cst_15 : f32 to vector<16x1xf32>
    %40 = arith.maximumf %38, %39 : vector<16x1xf32>
    %41 = vector.broadcast %31 : vector<16x1xf32> to vector<16x128xf32>
    %42 = arith.subf %27, %41 : vector<16x128xf32>
    %cst_16 = arith.constant 9.99999974E-6 : f32
    %43 = vector.broadcast %cst_16 : f32 to vector<16x1xf32>
    %44 = arith.addf %40, %43 : vector<16x1xf32>
    %45 = math.rsqrt %44 : vector<16x1xf32>
    %46 = vector.broadcast %45 : vector<16x1xf32> to vector<16x128xf32>
    %47 = arith.mulf %42, %46 : vector<16x128xf32>
    %c0_17 = arith.constant 0 : index
    %c0_18 = arith.constant 0 : index
    %48 = vector.load %arg8[%c0_17, %c0_18] : memref<1x128xf32, #tpu.memory_space<vmem>>, vector<1x128xf32>
    %49 = vector.broadcast %48 : vector<1x128xf32> to vector<16x128xf32>
    %50 = arith.mulf %47, %49 : vector<16x128xf32>
    %c0_19 = arith.constant 0 : index
    %c0_20 = arith.constant 0 : index
    %51 = vector.load %arg9[%c0_19, %c0_20] : memref<1x128xf32, #tpu.memory_space<vmem>>, vector<1x128xf32>
    %52 = vector.broadcast %51 : vector<1x128xf32> to vector<16x128xf32>
    %53 = arith.addf %50, %52 : vector<16x128xf32>
    %cst_21 = arith.constant 5.000000e-01 : f32
    %54 = vector.broadcast %cst_21 : f32 to vector<16x128xf32>
    %55 = arith.mulf %54, %53 : vector<16x128xf32>
    %cst_22 = arith.constant 4.471500e-02 : f32
    %56 = vector.broadcast %cst_22 : f32 to vector<16x128xf32>
    %57 = arith.mulf %56, %53 : vector<16x128xf32>
    %58 = arith.mulf %57, %53 : vector<16x128xf32>
    %59 = arith.mulf %58, %53 : vector<16x128xf32>
    %60 = arith.addf %53, %59 : vector<16x128xf32>
    %cst_23 = arith.constant 0.797884583 : f32
    %61 = vector.broadcast %cst_23 : f32 to vector<16x128xf32>
    %62 = arith.mulf %61, %60 : vector<16x128xf32>
    %63 = math.tanh %62 : vector<16x128xf32>
    %cst_24 = arith.constant 1.000000e+00 : f32
    %64 = vector.broadcast %cst_24 : f32 to vector<16x128xf32>
    %65 = arith.addf %64, %63 : vector<16x128xf32>
    %66 = arith.mulf %55, %65 : vector<16x128xf32>
    %67 = arith.truncf %66 : vector<16x128xf32> to vector<16x128xbf16>
    %c0_25 = arith.constant 0 : index
    %c0_26 = arith.constant 0 : index
    %68 = vector.load %arg10[%c0_25, %c0_26] : memref<128x128xbf16, #tpu.memory_space<vmem>>, vector<128x128xbf16>
    %cst_27 = arith.constant dense<0.000000e+00> : vector<16x128xf32>
    %69 = tpu.matmul %67, %68, %cst_27 {dimension_numbers = #tpu.dot_dimension_numbers<[1], [0], [0], [1], [0, 0, 1, 1], [], []>} : vector<16x128xbf16>, vector<128x128xbf16>, vector<16x128xf32> -> vector<16x128xf32>
    %c0_28 = arith.constant 0 : index
    %c0_29 = arith.constant 0 : index
    %c0_30 = arith.constant 0 : index
    %70 = vector.load %arg5[%c0_28, %c0_29, %c0_30] : memref<1x1x128xf32, #tpu.memory_space<vmem>>, vector<1x1x128xf32>
    %71 = vector.shape_cast %70 : vector<1x1x128xf32> to vector<1x128xf32>
    %72 = vector.broadcast %71 : vector<1x128xf32> to vector<16x128xf32>
    %73 = arith.addf %69, %72 : vector<16x128xf32>
    %cst_31 = arith.constant 5.000000e-01 : f32
    %74 = vector.broadcast %cst_31 : f32 to vector<16x128xf32>
    %75 = arith.mulf %74, %73 : vector<16x128xf32>
    %cst_32 = arith.constant 4.471500e-02 : f32
    %76 = vector.broadcast %cst_32 : f32 to vector<16x128xf32>
    %77 = arith.mulf %76, %73 : vector<16x128xf32>
    %78 = arith.mulf %77, %73 : vector<16x128xf32>
    %79 = arith.mulf %78, %73 : vector<16x128xf32>
    %80 = arith.addf %73, %79 : vector<16x128xf32>
    %cst_33 = arith.constant 0.797884583 : f32
    %81 = vector.broadcast %cst_33 : f32 to vector<16x128xf32>
    %82 = arith.mulf %81, %80 : vector<16x128xf32>
    %83 = math.tanh %82 : vector<16x128xf32>
    %cst_34 = arith.constant 1.000000e+00 : f32
    %84 = vector.broadcast %cst_34 : f32 to vector<16x128xf32>
    %85 = arith.addf %84, %83 : vector<16x128xf32>
    %86 = arith.mulf %75, %85 : vector<16x128xf32>
    %87 = arith.truncf %86 : vector<16x128xf32> to vector<16x128xbf16>
    %c0_35 = arith.constant 0 : index
    %c0_36 = arith.constant 0 : index
    %88 = vector.load %arg11[%c0_35, %c0_36] : memref<128x128xbf16, #tpu.memory_space<vmem>>, vector<128x128xbf16>
    %cst_37 = arith.constant dense<0.000000e+00> : vector<16x128xf32>
    %89 = tpu.matmul %87, %88, %cst_37 {dimension_numbers = #tpu.dot_dimension_numbers<[1], [0], [0], [1], [0, 0, 1, 1], [], []>} : vector<16x128xbf16>, vector<128x128xbf16>, vector<16x128xf32> -> vector<16x128xf32>
    %c0_38 = arith.constant 0 : index
    %c0_39 = arith.constant 0 : index
    %90 = vector.load %arg12[%c0_38, %c0_39] : memref<1x128xf32, #tpu.memory_space<vmem>>, vector<1x128xf32>
    %91 = vector.broadcast %90 : vector<1x128xf32> to vector<16x128xf32>
    %92 = arith.addf %89, %91 : vector<16x128xf32>
    %93 = arith.extf %1 : vector<16x128xbf16> to vector<16x128xf32>
    %94 = arith.addf %93, %92 : vector<16x128xf32>
    %95 = arith.truncf %94 : vector<16x128xf32> to vector<16x128xbf16>
    %c0_40 = arith.constant 0 : index
    %c0_41 = arith.constant 0 : index
    %c0_42 = arith.constant 0 : index
    %96 = vector.load %arg13[%c0_40, %c0_41, %c0_42] : memref<1x16x128xbf16, #tpu.memory_space<vmem>>, vector<1x16x128xbf16>
    %97 = vector.shape_cast %96 : vector<1x16x128xbf16> to vector<16x128xbf16>
    %98 = vector.shape_cast %95 : vector<16x128xbf16> to vector<1x16x128xbf16>
    tpu.vector_store %arg13[%c0_40, %c0_41, %c0_42], %98 {strides = array<i32>} : memref<1x16x128xbf16, #tpu.memory_space<vmem>>, vector<1x16x128xbf16>,
    return
  }
  func.func @transform_0(%arg0: i32, %arg1: i32) -> (i32, i32, i32) {
    %c0_i32 = arith.constant 0 : i32
    %c0_i32_0 = arith.constant 0 : i32
    return %arg0, %arg1, %c0_i32 : i32, i32, i32
  }
  func.func @transform_1(%arg0: i32, %arg1: i32) -> (i32, i32, i32) {
    %c1_i32 = arith.constant 1 : i32
    %0 = arith.muli %arg1, %c1_i32 : i32
    %c1_i32_0 = arith.constant 1 : i32
    %1 = arith.subi %0, %c1_i32_0 : i32
    %c0_i32 = arith.constant 0 : i32
    %2 = arith.maxsi %1, %c0_i32 : i32
    %c0_i32_1 = arith.constant 0 : i32
    %c0_i32_2 = arith.constant 0 : i32
    return %arg0, %2, %c0_i32_1 : i32, i32, i32
  }
  func.func @transform_2(%arg0: i32, %arg1: i32) -> (i32, i32, i32) {
    %c1_i32 = arith.constant 1 : i32
    %0 = arith.addi %arg1, %c1_i32 : i32
    %c1_i32_0 = arith.constant 1 : i32
    %1 = arith.muli %0, %c1_i32_0 : i32
    %c3_i32 = arith.constant 3 : i32
    %2 = arith.minsi %1, %c3_i32 : i32
    %c0_i32 = arith.constant 0 : i32
    %c0_i32_1 = arith.constant 0 : i32
    return %arg0, %2, %c0_i32 : i32, i32, i32
  }
  func.func @transform_3(%arg0: i32, %arg1: i32) -> (i32, i32, i32) {
    %c0_i32 = arith.constant 0 : i32
    %c0_i32_0 = arith.constant 0 : i32
    %c0_i32_1 = arith.constant 0 : i32
    return %arg0, %c0_i32, %c0_i32_0 : i32, i32, i32
  }
  func.func @transform_4(%arg0: i32, %arg1: i32) -> (i32, i32) {
    %c0_i32 = arith.constant 0 : i32
    %c0_i32_0 = arith.constant 0 : i32
    %c0_i32_1 = arith.constant 0 : i32
    return %c0_i32, %c0_i32_0 : i32, i32
  }
  func.func @transform_5(%arg0: i32, %arg1: i32) -> (i32, i32) {
    %c0_i32 = arith.constant 0 : i32
    %c0_i32_0 = arith.constant 0 : i32
    %c0_i32_1 = arith.constant 0 : i32
    return %c0_i32, %c0_i32_0 : i32, i32
  }
  func.func @transform_6(%arg0: i32, %arg1: i32) -> (i32, i32) {
    %c0_i32 = arith.constant 0 : i32
    %c0_i32_0 = arith.constant 0 : i32
    %c0_i32_1 = arith.constant 0 : i32
    return %c0_i32, %c0_i32_0 : i32, i32
  }
  func.func @transform_7(%arg0: i32, %arg1: i32) -> (i32, i32) {
    %c0_i32 = arith.constant 0 : i32
    %c0_i32_0 = arith.constant 0 : i32
    %c0_i32_1 = arith.constant 0 : i32
    return %c0_i32, %c0_i32_0 : i32, i32
  }
  func.func @transform_8(%arg0: i32, %arg1: i32) -> (i32, i32) {
    %c0_i32 = arith.constant 0 : i32
    %c0_i32_0 = arith.constant 0 : i32
    %c0_i32_1 = arith.constant 0 : i32
    return %c0_i32, %c0_i32_0 : i32, i32
  }
  func.func @transform_9(%arg0: i32, %arg1: i32) -> (i32, i32) {
    %c0_i32 = arith.constant 0 : i32
    %c0_i32_0 = arith.constant 0 : i32
    %c0_i32_1 = arith.constant 0 : i32
    return %c0_i32, %c0_i32_0 : i32, i32
  }
  func.func @transform_10(%arg0: i32, %arg1: i32) -> (i32, i32) {
    %c0_i32 = arith.constant 0 : i32
    %c0_i32_0 = arith.constant 0 : i32
    %c0_i32_1 = arith.constant 0 : i32
    return %c0_i32, %c0_i32_0 : i32, i32
  }
  func.func @transform_11(%arg0: i32, %arg1: i32) -> (i32, i32, i32) {
    %c0_i32 = arith.constant 0 : i32
    %c0_i32_0 = arith.constant 0 : i32
    return %arg0, %arg1, %c0_i32 : i32, i32, i32
  }
}

module attributes {stable_mosaic.version = 11 : i64} {
  func.func @_gnn_layer_kernel(%arg0: i32, %arg1: i32, %arg2: memref<1x16x128xbf16, #tpu.memory_space<vmem>>, %arg3: memref<1x16x128xbf16, #tpu.memory_space<vmem>>, %arg4: memref<1x16x128xbf16, #tpu.memory_space<vmem>>, %arg5: memref<1x1x128xf32, #tpu.memory_space<vmem>>, %arg6: memref<640x128xbf16, #tpu.memory_space<vmem>>, %arg7: memref<1x128xf32, #tpu.memory_space<vmem>>, %arg8: memref<1x128xf32, #tpu.memory_space<vmem>>, %arg9: memref<1x128xf32, #tpu.memory_space<vmem>>, %arg10: memref<128x128xbf16, #tpu.memory_space<vmem>>, %arg11: memref<128x128xbf16, #tpu.memory_space<vmem>>, %arg12: memref<1x128xf32, #tpu.memory_space<vmem>>, %arg13: memref<1x16x128xbf16, #tpu.memory_space<vmem>>) attributes {dimension_semantics = [#tpu.dimension_semantics<parallel>, #tpu.dimension_semantics<parallel>], iteration_bounds = array<i64: 2, 4>, scalar_prefetch = 0 : i64, scratch_operands = 0 : i64, tpu.core_type = #tpu.core_type<tc>, window_params = [{transform_indices = @transform_0, window_bounds = array<i64: 1, 16, 128>}, {transform_indices = @transform_1, window_bounds = array<i64: 1, 16, 128>}, {transform_indices = @transform_2, window_bounds = array<i64: 1, 16, 128>}, {transform_indices = @transform_3, window_bounds = array<i64: 1, 1, 128>}, {pipeline_mode = #tpu.pipeline_mode<synchronous>, transform_indices = @transform_4, window_bounds = array<i64: 640, 128>}, {pipeline_mode = #tpu.pipeline_mode<synchronous>, transform_indices = @transform_5, window_bounds = array<i64: 1, 128>}, {pipeline_mode = #tpu.pipeline_mode<synchronous>, transform_indices = @transform_6, window_bounds = array<i64: 1, 128>}, {pipeline_mode = #tpu.pipeline_mode<synchronous>, transform_indices = @transform_7, window_bounds = array<i64: 1, 128>}, {pipeline_mode = #tpu.pipeline_mode<synchronous>, transform_indices = @transform_8, window_bounds = array<i64: 128, 128>}, {pipeline_mode = #tpu.pipeline_mode<synchronous>, transform_indices = @transform_9, window_bounds = array<i64: 128, 128>}, {pipeline_mode = #tpu.pipeline_mode<synchronous>, transform_indices = @transform_10, window_bounds = array<i64: 1, 128>}, {transform_indices = @transform_11, window_bounds = array<i64: 1, 16, 128>}]} {
    %c0 = arith.constant 0 : index
    %c0_0 = arith.constant 0 : index
    %c0_1 = arith.constant 0 : index
    %0 = vector.load %arg2[%c0, %c0_0, %c0_1] : memref<1x16x128xbf16, #tpu.memory_space<vmem>>, vector<1x16x128xbf16>
    %1 = vector.shape_cast %0 : vector<1x16x128xbf16> to vector<16x128xbf16>
    %c0_i32 = arith.constant 0 : i32
    %2 = arith.cmpi eq, %arg1, %c0_i32 : i32
    %3 = vector.extract_strided_slice %1 {offsets = [0, 0], sizes = [1, 128], strides = [1, 1]} : vector<16x128xbf16> to vector<1x128xbf16>
    %4 = vector.shape_cast %3 : vector<1x128xbf16> to vector<1x128xbf16>
    %5 = vector.broadcast %4 : vector<1x128xbf16> to vector<2x128xbf16>
    %c0_2 = arith.constant 0 : index
    %c14 = arith.constant 14 : index
    %c0_3 = arith.constant 0 : index
    %6 = vector.load %arg3[%c0_2, %c14, %c0_3] : memref<1x16x128xbf16, #tpu.memory_space<vmem>>, vector<1x2x128xbf16>
    %7 = vector.shape_cast %6 : vector<1x2x128xbf16> to vector<2x128xbf16>
    %8 = arith.select %2, %5, %7 : vector<2x128xbf16>
    %c3_i32 = arith.constant 3 : i32
    %9 = arith.cmpi eq, %arg1, %c3_i32 : i32
    %10 = vector.extract_strided_slice %1 {offsets = [15, 0], sizes = [1, 128], strides = [1, 1]} : vector<16x128xbf16> to vector<1x128xbf16>
    %11 = vector.shape_cast %10 : vector<1x128xbf16> to vector<1x128xbf16>
    %12 = vector.broadcast %11 : vector<1x128xbf16> to vector<2x128xbf16>
    %c0_4 = arith.constant 0 : index
    %c0_5 = arith.constant 0 : index
    %c0_6 = arith.constant 0 : index
    %13 = vector.load %arg4[%c0_4, %c0_5, %c0_6] : memref<1x16x128xbf16, #tpu.memory_space<vmem>>, vector<1x2x128xbf16>
    %14 = vector.shape_cast %13 : vector<1x2x128xbf16> to vector<2x128xbf16>
    %15 = arith.select %9, %12, %14 : vector<2x128xbf16>
    %16 = tpu.concatenate %8, %1, %15 in 0 : vector<2x128xbf16>, vector<16x128xbf16>, vector<2x128xbf16> -> vector<20x128xbf16>
    %17 = vector.extract_strided_slice %16 {offsets = [0, 0], sizes = [16, 128], strides = [1, 1]} : vector<20x128xbf16> to vector<16x128xbf16>
    %18 = vector.extract_strided_slice %16 {offsets = [1, 0], sizes = [16, 128], strides = [1, 1]} : vector<20x128xbf16> to vector<16x128xbf16>
    %19 = vector.extract_strided_slice %16 {offsets = [2, 0], sizes = [16, 128], strides = [1, 1]} : vector<20x128xbf16> to vector<16x128xbf16>
    %20 = vector.extract_strided_slice %16 {offsets = [3, 0], sizes = [16, 128], strides = [1, 1]} : vector<20x128xbf16> to vector<16x128xbf16>
    %21 = vector.extract_strided_slice %16 {offsets = [4, 0], sizes = [16, 128], strides = [1, 1]} : vector<20x128xbf16> to vector<16x128xbf16>
    %22 = tpu.concatenate %17, %18, %19, %20, %21 in 1 : vector<16x128xbf16>, vector<16x128xbf16>, vector<16x128xbf16>, vector<16x128xbf16>, vector<16x128xbf16> -> vector<16x640xbf16>
    %c0_7 = arith.constant 0 : index
    %c0_8 = arith.constant 0 : index
    %23 = vector.load %arg6[%c0_7, %c0_8] : memref<640x128xbf16, #tpu.memory_space<vmem>>, vector<640x128xbf16>
    %cst = arith.constant dense<0.000000e+00> : vector<16x128xf32>
    %24 = tpu.matmul %22, %23, %cst {dimension_numbers = #tpu.dot_dimension_numbers<[1], [0], [0], [1], [0, 0, 1, 1], [], []>} : vector<16x640xbf16>, vector<640x128xbf16>, vector<16x128xf32> -> vector<16x128xf32>
    %c0_9 = arith.constant 0 : index
    %c0_10 = arith.constant 0 : index
    %25 = vector.load %arg7[%c0_9, %c0_10] : memref<1x128xf32, #tpu.memory_space<vmem>>, vector<1x128xf32>
    %26 = vector.broadcast %25 : vector<1x128xf32> to vector<16x128xf32>
    %27 = arith.addf %24, %26 : vector<16x128xf32>
    %cst_11 = arith.constant dense<0.000000e+00> : vector<16xf32>
    %28 = vector.multi_reduction <add>, %27, %cst_11 [1] : vector<16x128xf32> to vector<16xf32>
    %29 = vector.shape_cast %28 : vector<16xf32> to vector<16x1xf32>
    %cst_12 = arith.constant 1.280000e+02 : f32
    %30 = vector.broadcast %cst_12 : f32 to vector<16x1xf32>
    %31 = arith.divf %29, %30 : vector<16x1xf32>
    %32 = arith.mulf %27, %27 : vector<16x128xf32>
    %cst_13 = arith.constant dense<0.000000e+00> : vector<16xf32>
    %33 = vector.multi_reduction <add>, %32, %cst_13 [1] : vector<16x128xf32> to vector<16xf32>
    %34 = vector.shape_cast %33 : vector<16xf32> to vector<16x1xf32>
    %cst_14 = arith.constant 1.280000e+02 : f32
    %35 = vector.broadcast %cst_14 : f32 to vector<16x1xf32>
    %36 = arith.divf %34, %35 : vector<16x1xf32>
    %37 = arith.mulf %31, %31 : vector<16x1xf32>
    %38 = arith.subf %36, %37 : vector<16x1xf32>
    %cst_15 = arith.constant 0.000000e+00 : f32
    %39 = vector.broadcast %cst_15 : f32 to vector<16x1xf32>
    %40 = arith.maximumf %38, %39 : vector<16x1xf32>
    %41 = vector.broadcast %31 : vector<16x1xf32> to vector<16x128xf32>
    %42 = arith.subf %27, %41 : vector<16x128xf32>
    %cst_16 = arith.constant 9.99999974E-6 : f32
    %43 = vector.broadcast %cst_16 : f32 to vector<16x1xf32>
    %44 = arith.addf %40, %43 : vector<16x1xf32>
    %45 = math.rsqrt %44 : vector<16x1xf32>
    %46 = vector.broadcast %45 : vector<16x1xf32> to vector<16x128xf32>
    %47 = arith.mulf %42, %46 : vector<16x128xf32>
    %c0_17 = arith.constant 0 : index
    %c0_18 = arith.constant 0 : index
    %48 = vector.load %arg8[%c0_17, %c0_18] : memref<1x128xf32, #tpu.memory_space<vmem>>, vector<1x128xf32>
    %49 = vector.broadcast %48 : vector<1x128xf32> to vector<16x128xf32>
    %50 = arith.mulf %47, %49 : vector<16x128xf32>
    %c0_19 = arith.constant 0 : index
    %c0_20 = arith.constant 0 : index
    %51 = vector.load %arg9[%c0_19, %c0_20] : memref<1x128xf32, #tpu.memory_space<vmem>>, vector<1x128xf32>
    %52 = vector.broadcast %51 : vector<1x128xf32> to vector<16x128xf32>
    %53 = arith.addf %50, %52 : vector<16x128xf32>
    %cst_21 = arith.constant 5.000000e-01 : f32
    %54 = vector.broadcast %cst_21 : f32 to vector<16x128xf32>
    %55 = arith.mulf %54, %53 : vector<16x128xf32>
    %cst_22 = arith.constant 4.471500e-02 : f32
    %56 = vector.broadcast %cst_22 : f32 to vector<16x128xf32>
    %57 = arith.mulf %56, %53 : vector<16x128xf32>
    %58 = arith.mulf %57, %53 : vector<16x128xf32>
    %59 = arith.mulf %58, %53 : vector<16x128xf32>
    %60 = arith.addf %53, %59 : vector<16x128xf32>
    %cst_23 = arith.constant 0.797884583 : f32
    %61 = vector.broadcast %cst_23 : f32 to vector<16x128xf32>
    %62 = arith.mulf %61, %60 : vector<16x128xf32>
    %63 = math.tanh %62 : vector<16x128xf32>
    %cst_24 = arith.constant 1.000000e+00 : f32
    %64 = vector.broadcast %cst_24 : f32 to vector<16x128xf32>
    %65 = arith.addf %64, %63 : vector<16x128xf32>
    %66 = arith.mulf %55, %65 : vector<16x128xf32>
    %67 = arith.truncf %66 : vector<16x128xf32> to vector<16x128xbf16>
    %c0_25 = arith.constant 0 : index
    %c0_26 = arith.constant 0 : index
    %68 = vector.load %arg10[%c0_25, %c0_26] : memref<128x128xbf16, #tpu.memory_space<vmem>>, vector<128x128xbf16>
    %cst_27 = arith.constant dense<0.000000e+00> : vector<16x128xf32>
    %69 = tpu.matmul %67, %68, %cst_27 {dimension_numbers = #tpu.dot_dimension_numbers<[1], [0], [0], [1], [0, 0, 1, 1], [], []>} : vector<16x128xbf16>, vector<128x128xbf16>, vector<16x128xf32> -> vector<16x128xf32>
    %c0_28 = arith.constant 0 : index
    %c0_29 = arith.constant 0 : index
    %c0_30 = arith.constant 0 : index
    %70 = vector.load %arg5[%c0_28, %c0_29, %c0_30] : memref<1x1x128xf32, #tpu.memory_space<vmem>>, vector<1x1x128xf32>
    %71 = vector.shape_cast %70 : vector<1x1x128xf32> to vector<1x128xf32>
    %72 = vector.broadcast %71 : vector<1x128xf32> to vector<16x128xf32>
    %73 = arith.addf %69, %72 : vector<16x128xf32>
    %cst_31 = arith.constant 5.000000e-01 : f32
    %74 = vector.broadcast %cst_31 : f32 to vector<16x128xf32>
    %75 = arith.mulf %74, %73 : vector<16x128xf32>
    %cst_32 = arith.constant 4.471500e-02 : f32
    %76 = vector.broadcast %cst_32 : f32 to vector<16x128xf32>
    %77 = arith.mulf %76, %73 : vector<16x128xf32>
    %78 = arith.mulf %77, %73 : vector<16x128xf32>
    %79 = arith.mulf %78, %73 : vector<16x128xf32>
    %80 = arith.addf %73, %79 : vector<16x128xf32>
    %cst_33 = arith.constant 0.797884583 : f32
    %81 = vector.broadcast %cst_33 : f32 to vector<16x128xf32>
    %82 = arith.mulf %81, %80 : vector<16x128xf32>
    %83 = math.tanh %82 : vector<16x128xf32>
    %cst_34 = arith.constant 1.000000e+00 : f32
    %84 = vector.broadcast %cst_34 : f32 to vector<16x128xf32>
    %85 = arith.addf %84, %83 : vector<16x128xf32>
    %86 = arith.mulf %75, %85 : vector<16x128xf32>
    %87 = arith.truncf %86 : vector<16x128xf32> to vector<16x128xbf16>
    %c0_35 = arith.constant 0 : index
    %c0_36 = arith.constant 0 : index
    %88 = vector.load %arg11[%c0_35, %c0_36] : memref<128x128xbf16, #tpu.memory_space<vmem>>, vector<128x128xbf16>
    %cst_37 = arith.constant dense<0.000000e+00> : vector<16x128xf32>
    %89 = tpu.matmul %87, %88, %cst_37 {dimension_numbers = #tpu.dot_dimension_numbers<[1], [0], [0], [1], [0, 0, 1, 1], [], []>} : vector<16x128xbf16>, vector<128x128xbf16>, vector<16x128xf32> -> vector<16x128xf32>
    %c0_38 = arith.constant 0 : index
    %c0_39 = arith.constant 0 : index
    %90 = vector.load %arg12[%c0_38, %c0_39] : memref<1x128xf32, #tpu.memory_space<vmem>>, vector<1x128xf32>
    %91 = vector.broadcast %90 : vector<1x128xf32> to vector<16x128xf32>
    %92 = arith.addf %89, %91 : vector<16x128xf32>
    %93 = arith.extf %1 : vector<16x128xbf16> to vector<16x128xf32>
    %94 = arith.addf %93, %92 : vector<16x128xf32>
    %95 = arith.truncf %94 : vector<16x128xf32> to vector<16x128xbf16>
    %c0_40 = arith.constant 0 : index
    %c0_41 = arith.constant 0 : index
    %c0_42 = arith.constant 0 : index
    %96 = vector.load %arg13[%c0_40, %c0_41, %c0_42] : memref<1x16x128xbf16, #tpu.memory_space<vmem>>, vector<1x16x128xbf16>
    %97 = vector.shape_cast %96 : vector<1x16x128xbf16> to vector<16x128xbf16>
    %98 = vector.shape_cast %95 : vector<16x128xbf16> to vector<1x16x128xbf16>
    tpu.vector_store %arg13[%c0_40, %c0_41, %c0_42], %98 {strides = array<i32>} : memref<1x16x128xbf16, #tpu.memory_space<vmem>>, vector<1x16x128xbf16>,
    return
  }
  func.func @transform_0(%arg0: i32, %arg1: i32) -> (i32, i32, i32) {
    %c0_i32 = arith.constant 0 : i32
    %c0_i32_0 = arith.constant 0 : i32
    return %arg0, %arg1, %c0_i32 : i32, i32, i32
  }
  func.func @transform_1(%arg0: i32, %arg1: i32) -> (i32, i32, i32) {
    %c1_i32 = arith.constant 1 : i32
    %0 = arith.muli %arg1, %c1_i32 : i32
    %c1_i32_0 = arith.constant 1 : i32
    %1 = arith.subi %0, %c1_i32_0 : i32
    %c0_i32 = arith.constant 0 : i32
    %2 = arith.maxsi %1, %c0_i32 : i32
    %c0_i32_1 = arith.constant 0 : i32
    %c0_i32_2 = arith.constant 0 : i32
    return %arg0, %2, %c0_i32_1 : i32, i32, i32
  }
  func.func @transform_2(%arg0: i32, %arg1: i32) -> (i32, i32, i32) {
    %c1_i32 = arith.constant 1 : i32
    %0 = arith.addi %arg1, %c1_i32 : i32
    %c1_i32_0 = arith.constant 1 : i32
    %1 = arith.muli %0, %c1_i32_0 : i32
    %c3_i32 = arith.constant 3 : i32
    %2 = arith.minsi %1, %c3_i32 : i32
    %c0_i32 = arith.constant 0 : i32
    %c0_i32_1 = arith.constant 0 : i32
    return %arg0, %2, %c0_i32 : i32, i32, i32
  }
  func.func @transform_3(%arg0: i32, %arg1: i32) -> (i32, i32, i32) {
    %c0_i32 = arith.constant 0 : i32
    %c0_i32_0 = arith.constant 0 : i32
    %c0_i32_1 = arith.constant 0 : i32
    return %arg0, %c0_i32, %c0_i32_0 : i32, i32, i32
  }
  func.func @transform_4(%arg0: i32, %arg1: i32) -> (i32, i32) {
    %c0_i32 = arith.constant 0 : i32
    %c0_i32_0 = arith.constant 0 : i32
    %c0_i32_1 = arith.constant 0 : i32
    return %c0_i32, %c0_i32_0 : i32, i32
  }
  func.func @transform_5(%arg0: i32, %arg1: i32) -> (i32, i32) {
    %c0_i32 = arith.constant 0 : i32
    %c0_i32_0 = arith.constant 0 : i32
    %c0_i32_1 = arith.constant 0 : i32
    return %c0_i32, %c0_i32_0 : i32, i32
  }
  func.func @transform_6(%arg0: i32, %arg1: i32) -> (i32, i32) {
    %c0_i32 = arith.constant 0 : i32
    %c0_i32_0 = arith.constant 0 : i32
    %c0_i32_1 = arith.constant 0 : i32
    return %c0_i32, %c0_i32_0 : i32, i32
  }
  func.func @transform_7(%arg0: i32, %arg1: i32) -> (i32, i32) {
    %c0_i32 = arith.constant 0 : i32
    %c0_i32_0 = arith.constant 0 : i32
    %c0_i32_1 = arith.constant 0 : i32
    return %c0_i32, %c0_i32_0 : i32, i32
  }
  func.func @transform_8(%arg0: i32, %arg1: i32) -> (i32, i32) {
    %c0_i32 = arith.constant 0 : i32
    %c0_i32_0 = arith.constant 0 : i32
    %c0_i32_1 = arith.constant 0 : i32
    return %c0_i32, %c0_i32_0 : i32, i32
  }
  func.func @transform_9(%arg0: i32, %arg1: i32) -> (i32, i32) {
    %c0_i32 = arith.constant 0 : i32
    %c0_i32_0 = arith.constant 0 : i32
    %c0_i32_1 = arith.constant 0 : i32
    return %c0_i32, %c0_i32_0 : i32, i32
  }
  func.func @transform_10(%arg0: i32, %arg1: i32) -> (i32, i32) {
    %c0_i32 = arith.constant 0 : i32
    %c0_i32_0 = arith.constant 0 : i32
    %c0_i32_1 = arith.constant 0 : i32
    return %c0_i32, %c0_i32_0 : i32, i32
  }
  func.func @transform_11(%arg0: i32, %arg1: i32) -> (i32, i32, i32) {
    %c0_i32 = arith.constant 0 : i32
    %c0_i32_0 = arith.constant 0 : i32
    return %arg0, %arg1, %c0_i32 : i32, i32, i32
  }
}

module attributes {stable_mosaic.version = 11 : i64} {
  func.func @_linear_kernel(%arg0: i32, %arg1: i32, %arg2: memref<1x16x128xbf16, #tpu.memory_space<vmem>>, %arg3: memref<128x4xbf16, #tpu.memory_space<vmem>>, %arg4: memref<1x4xf32, #tpu.memory_space<vmem>>, %arg5: memref<1x16x4xf32, #tpu.memory_space<vmem>>) attributes {dimension_semantics = [#tpu.dimension_semantics<parallel>, #tpu.dimension_semantics<parallel>], iteration_bounds = array<i64: 2, 4>, scalar_prefetch = 0 : i64, scratch_operands = 0 : i64, tpu.core_type = #tpu.core_type<tc>, window_params = [{transform_indices = @transform_0, window_bounds = array<i64: 1, 16, 128>}, {pipeline_mode = #tpu.pipeline_mode<synchronous>, transform_indices = @transform_1, window_bounds = array<i64: 128, 4>}, {pipeline_mode = #tpu.pipeline_mode<synchronous>, transform_indices = @transform_2, window_bounds = array<i64: 1, 4>}, {transform_indices = @transform_3, window_bounds = array<i64: 1, 16, 4>}]} {
    %c0 = arith.constant 0 : index
    %c0_0 = arith.constant 0 : index
    %c0_1 = arith.constant 0 : index
    %0 = vector.load %arg2[%c0, %c0_0, %c0_1] : memref<1x16x128xbf16, #tpu.memory_space<vmem>>, vector<1x16x128xbf16>
    %1 = vector.shape_cast %0 : vector<1x16x128xbf16> to vector<16x128xbf16>
    %c0_2 = arith.constant 0 : index
    %c0_3 = arith.constant 0 : index
    %2 = vector.load %arg3[%c0_2, %c0_3] : memref<128x4xbf16, #tpu.memory_space<vmem>>, vector<128x4xbf16>
    %cst = arith.constant dense<0.000000e+00> : vector<16x4xf32>
    %3 = tpu.matmul %1, %2, %cst {dimension_numbers = #tpu.dot_dimension_numbers<[1], [0], [0], [1], [0, 0, 1, 1], [], []>} : vector<16x128xbf16>, vector<128x4xbf16>, vector<16x4xf32> -> vector<16x4xf32>
    %c0_4 = arith.constant 0 : index
    %c0_5 = arith.constant 0 : index
    %4 = vector.load %arg4[%c0_4, %c0_5] : memref<1x4xf32, #tpu.memory_space<vmem>>, vector<1x4xf32>
    %5 = vector.broadcast %4 : vector<1x4xf32> to vector<16x4xf32>
    %6 = arith.addf %3, %5 : vector<16x4xf32>
    %c0_6 = arith.constant 0 : index
    %c0_7 = arith.constant 0 : index
    %c0_8 = arith.constant 0 : index
    %7 = vector.load %arg5[%c0_6, %c0_7, %c0_8] : memref<1x16x4xf32, #tpu.memory_space<vmem>>, vector<1x16x4xf32>
    %8 = vector.shape_cast %7 : vector<1x16x4xf32> to vector<16x4xf32>
    %9 = vector.shape_cast %6 : vector<16x4xf32> to vector<1x16x4xf32>
    tpu.vector_store %arg5[%c0_6, %c0_7, %c0_8], %9 {strides = array<i32>} : memref<1x16x4xf32, #tpu.memory_space<vmem>>, vector<1x16x4xf32>,
    return
  }
  func.func @transform_0(%arg0: i32, %arg1: i32) -> (i32, i32, i32) {
    %c0_i32 = arith.constant 0 : i32
    %c0_i32_0 = arith.constant 0 : i32
    return %arg0, %arg1, %c0_i32 : i32, i32, i32
  }
  func.func @transform_1(%arg0: i32, %arg1: i32) -> (i32, i32) {
    %c0_i32 = arith.constant 0 : i32
    %c0_i32_0 = arith.constant 0 : i32
    %c0_i32_1 = arith.constant 0 : i32
    return %c0_i32, %c0_i32_0 : i32, i32
  }
  func.func @transform_2(%arg0: i32, %arg1: i32) -> (i32, i32) {
    %c0_i32 = arith.constant 0 : i32
    %c0_i32_0 = arith.constant 0 : i32
    %c0_i32_1 = arith.constant 0 : i32
    return %c0_i32, %c0_i32_0 : i32, i32
  }
  func.func @transform_3(%arg0: i32, %arg1: i32) -> (i32, i32, i32) {
    %c0_i32 = arith.constant 0 : i32
    %c0_i32_0 = arith.constant 0 : i32
    return %arg0, %arg1, %c0_i32 : i32, i32, i32
  }
}

</mosaic_0001>

<llo_original>
// kernel: gnn_like_processor_forward.4
$region0: #{gnn_like_processor_forward.4}
  #allocation0 [shape = 'u32[]', space=smem, size = 0x4, offset = 0x4, fixed_abs, tag = 'smem constant byte address 0x4 - core index']
  #allocation1 [shape = 'u32[72,128]{1,0:T(1,128)}', space=vmem, size = 0x9000, scoped, tag = 'internal scratch']
  %s0 = inlined_call_operand.vmem [shape: f32[2,64,8], index: 0, kind: input, shape index: {}]
  %s1 = inlined_call_operand.vmem [shape: bf16[8,128], index: 1, kind: input, shape index: {}]
  %s2 = inlined_call_operand.vmem [shape: f32[1,128], index: 2, kind: input, shape index: {}]
  %s3 = inlined_call_operand.vmem [shape: bf16[2,64,128], index: 3, kind: output, shape index: {}]
  %s4 = sld [smem:[#allocation0]]
  $region45: #{gnn_like_processor_forward.4} parent=0
    _
  %s6 = ssub.s32 1, %s4
  %s7 = scalar_select 0, %s6, %s4
  loop: start=0, step=1, limit=10
  $region2: #{gnn_like_processor_forward.4} parent=0 // loop_pre_header
    _
  $region3: #{gnn_like_processor_forward.4} parent=0 // loop_header
    %s9 = sphi 0, %s13
    %p10 = scmp.ge.s32.totalorder %s9, 10
    %s16 = sphi 0, %s28
    %s17 = sphi 0, %s24
    %s18 = sphi 0, %s16
    %s19 = sphi 0, %s17
    %s20 = sphi 0, %s18
    %s21 = sphi 0, %s19
    %s33 = sphi 0, %s35
    %s36 = sphi 0, %s33
    %s37 = sphi 0, %s36
    %s53 = sphi 0, %s37
    %s57 = sphi 0, %s57
    %s59 = sphi 0, %s57
    %s60 = sphi 0, %s59
    %s74 = sphi 0, %s60
    %s78 = sphi 0, %s78
    %s80 = sphi 0, %s78
    %s81 = sphi 0, %s80
    %s95 = sphi 0, %s81
    %s103 = sphi 0, %s105
    %s106 = sphi 0, %s103
    %s107 = sphi 0, %s106
    %s123 = sphi 0, %s107
  $region4: #{gnn_like_processor_forward.4} parent=0 // loop_header_branch
    %12 = sbr.rel (%p10) target = $region8
  $region5: #{gnn_like_processor_forward.4} parent=0 // loop_body
    %s14 = ssub.s32 %s9, 1
    %s15 = ssub.s32 %s9, 2
    %s22 = sadd.s32 1, %s17
    %p23 = scmp.ge.s32.totalorder %s22, 4
    %s24 = scalar_select %p23, 0, %s22
    %s25 = sadd.s32 1, %s16
    %s26 = scalar_select %p23, %s25, %s16
    %p27 = scmp.ge.s32.totalorder %s26, 2
    %s28 = scalar_select %p27, 0, %s26
    %s29 = ssub.s32 %s16, %s28
    %s30 = ssub.s32 %s17, %s24
    %s31 = sor.u32 %s29, %s30
    %p32 = scmp.eq.s32.totalorder %s31, 0
    %s34 = sadd.s32 %s33, 1
    %s35 = scalar_select %p32, %s33, %s34
    %p38 = pneg %p32
    %p39 = scmp.eq.s32.totalorder %s9, 7
    %p40 = por %p38, %p39
    %p41 = scmp.ne.s32.totalorder %s33, %s36
    %p42 = scmp.eq.s32.totalorder %s9, 0
    %p43 = por %p41, %p42
    %p44 = scmp.ne.s32.totalorder %s33, %s36
    %p45 = scmp.eq.s32.totalorder %s14, 7
    %p46 = por %p44, %p45
    %p47 = scmp.ne.s32.totalorder %s36, %s37
    %p48 = scmp.eq.s32.totalorder %s14, 0
    %p49 = por %p47, %p48
    %p50 = scmp.ne.s32.totalorder %s36, %s37
    %p51 = scmp.eq.s32.totalorder %s15, 7
    %p52 = por %p50, %p51
    %p54 = scmp.ne.s32.totalorder %s37, %s53
    %p55 = scmp.eq.s32.totalorder %s15, 0
    %p56 = por %p54, %p55
    %s58 = sadd.s32 %s57, 1
    %p61 = scmp.eq.s32.totalorder %s9, 7
    %p62 = scmp.ne.s32.totalorder %s57, %s59
    %p63 = scmp.eq.s32.totalorder %s9, 0
    %p64 = por %p62, %p63
    %p65 = scmp.ne.s32.totalorder %s57, %s59
    %p66 = scmp.eq.s32.totalorder %s14, 7
    %p67 = por %p65, %p66
    %p68 = scmp.ne.s32.totalorder %s59, %s60
    %p69 = scmp.eq.s32.totalorder %s14, 0
    %p70 = por %p68, %p69
    %p71 = scmp.ne.s32.totalorder %s59, %s60
    %p72 = scmp.eq.s32.totalorder %s15, 7
    %p73 = por %p71, %p72
    %p75 = scmp.ne.s32.totalorder %s60, %s74
    %p76 = scmp.eq.s32.totalorder %s15, 0
    %p77 = por %p75, %p76
    %s79 = sadd.s32 %s78, 1
    %p82 = scmp.eq.s32.totalorder %s9, 7
    %p83 = scmp.ne.s32.totalorder %s78, %s80
    %p84 = scmp.eq.s32.totalorder %s9, 0
    %p85 = por %p83, %p84
    %p86 = scmp.ne.s32.totalorder %s78, %s80
    %p87 = scmp.eq.s32.totalorder %s14, 7
    %p88 = por %p86, %p87
    %p89 = scmp.ne.s32.totalorder %s80, %s81
    %p90 = scmp.eq.s32.totalorder %s14, 0
    %p91 = por %p89, %p90
    %p92 = scmp.ne.s32.totalorder %s80, %s81
    %p93 = scmp.eq.s32.totalorder %s15, 7
    %p94 = por %p92, %p93
    %p96 = scmp.ne.s32.totalorder %s81, %s95
    %p97 = scmp.eq.s32.totalorder %s15, 0
    %p98 = por %p96, %p97
    %s99 = ssub.s32 %s16, %s28
    %s100 = ssub.s32 %s17, %s24
    %s101 = sor.u32 %s99, %s100
    %p102 = scmp.eq.s32.totalorder %s101, 0
    %s104 = sadd.s32 %s103, 1
    %s105 = scalar_select %p102, %s103, %s104
    %p108 = pneg %p102
    %p109 = scmp.eq.s32.totalorder %s9, 7
    %p110 = por %p108, %p109
    %p111 = scmp.ne.s32.totalorder %s103, %s106
    %p112 = scmp.eq.s32.totalorder %s9, 0
    %p113 = por %p111, %p112
    %p114 = scmp.ne.s32.totalorder %s103, %s106
    %p115 = scmp.eq.s32.totalorder %s14, 7
    %p116 = por %p114, %p115
    %p117 = scmp.ne.s32.totalorder %s106, %s107
    %p118 = scmp.eq.s32.totalorder %s14, 0
    %p119 = por %p117, %p118
    %p120 = scmp.ne.s32.totalorder %s106, %s107
    %p121 = scmp.eq.s32.totalorder %s15, 7
    %p122 = por %p120, %p121
    %p124 = scmp.ne.s32.totalorder %s107, %s123
    %p125 = scmp.eq.s32.totalorder %s15, 0
    %p126 = por %p124, %p125
    %p127 = scmp.le.s32.totalorder 1, %s9
    %p128 = scmp.lt.s32.totalorder %s9, 9
    %p129 = pnand %p127, %p128
    %p130 = pneg %p129
    // Predicated region
    $region9: #{gnn_like_processor_forward.4} parent=5 // pred_check
      _
    $region10: #{gnn_like_processor_forward.4} parent=5 // pred_check_branch
      %132 = sbr.rel (%p129) target = $region12
    $region11: #{gnn_like_processor_forward.4} parent=5 // pred_region
      %s133 = ssub.s32 %s9, 1
      // Predicated region
      $region13: #{gnn_like_processor_forward.4} parent=11 // pred_check
        %p134 = pneg %p70
      $region14: #{gnn_like_processor_forward.4} parent=11 // pred_check_branch
        %136 = sbr.rel (%p134) target = $region16
      $region15: #{gnn_like_processor_forward.4} parent=11 // pred_region
        _
      $region16: #{gnn_like_processor_forward.4} parent=11 // pred_fallthru
        _
      // Predicated region
      $region17: #{gnn_like_processor_forward.4} parent=11 // pred_check
        %p137 = pneg %p91
      $region18: #{gnn_like_processor_forward.4} parent=11 // pred_check_branch
        %139 = sbr.rel (%p137) target = $region20
      $region19: #{gnn_like_processor_forward.4} parent=11 // pred_region
        _
      $region20: #{gnn_like_processor_forward.4} parent=11 // pred_fallthru
        _
    $region12: #{gnn_like_processor_forward.4} parent=5 // pred_fallthru
      _
    %p140 = scmp.lt.s32.totalorder %s9, 8
    // Predicated region
    $region21: #{gnn_like_processor_forward.4} parent=5 // pred_check
      %p141 = pneg %p140
    $region22: #{gnn_like_processor_forward.4} parent=5 // pred_check_branch
      %143 = sbr.rel (%p141) target = $region24
    $region23: #{gnn_like_processor_forward.4} parent=5 // pred_region
      // Predicated region
      $region25: #{gnn_like_processor_forward.4} parent=23 // pred_check
        %p144 = pneg %p43
      $region26: #{gnn_like_processor_forward.4} parent=23 // pred_check_branch
        %146 = sbr.rel (%p144) target = $region28
      $region27: #{gnn_like_processor_forward.4} parent=23 // pred_region
        %s147 = smul.u32 2, %s17
        %p148 = scmp.lt.s32.totalorder %s16, 1
        %s149 = scalar_select %p148, %s16, 1
        %p150 = scmp.lt.s32.totalorder %s147, 7
        %s151 = scalar_select %p150, %s147, 7
        %s152 = smul.addr %s149, 8
        %s153 = sadd.s32 %s151, %s152
        %s154 = smul.addr %s153, 8
        %s155 = scalar_lea.vmem %s0, %s154
        %s156 = smul.u32 2, %s17
      $region28: #{gnn_like_processor_forward.4} parent=23 // pred_fallthru
        _
    $region24: #{gnn_like_processor_forward.4} parent=5 // pred_fallthru
      _
    %p157 = scmp.le.s32.totalorder 1, %s9
    %p158 = scmp.lt.s32.totalorder %s9, 9
    %p159 = pnand %p157, %p158
    %p160 = pneg %p159
    // Predicated region
    $region29: #{gnn_like_processor_forward.4} parent=5 // pred_check
      _
    $region30: #{gnn_like_processor_forward.4} parent=5 // pred_check_branch
      %162 = sbr.rel (%p159) target = $region32
    $region31: #{gnn_like_processor_forward.4} parent=5 // pred_region
      %s163 = ssub.s32 %s9, 1
      %s164 = smul.u32 2, %s19
      %p165 = scmp.lt.s32.totalorder %s18, 1
      %s166 = scalar_select %p165, %s18, 1
      %p167 = scmp.lt.s32.totalorder %s164, 7
      %s168 = scalar_select %p167, %s164, 7
      %s169 = smul.addr %s166, 8
      %s170 = sadd.s32 %s168, %s169
      %s171 = smul.addr %s170, 8
      %s172 = scalar_lea.vmem %s0, %s171
      %p173 = pneg %p49
      %p174 = pneg %p46
      %p175 = pneg %p70
      %p176 = pneg %p67
      %p177 = pneg %p91
      %p178 = pneg %p88
      %p179 = pneg %p119
      %p180 = pneg %p116
      %s181 = smul.u32 2, %s19
      %p182 = scmp.lt.s32.totalorder %s18, 1
      %s183 = scalar_select %p182, %s18, 1
      %p184 = scmp.lt.s32.totalorder %s181, 7
      %s185 = scalar_select %p184, %s181, 7
      %s186 = smul.addr %s183, 8
      %s187 = sadd.s32 %s185, %s186
      %s188 = smul.addr %s187, 4
      %s189 = scalar_lea.vmem %s3, %s188
      %s190 = smul.u32 2, %s19
      %p191 = scmp.lt.s32.totalorder %s18, 1
      %s192 = scalar_select %p191, %s18, 1
      %p193 = scmp.lt.s32.totalorder %s190, 7
      %s194 = scalar_select %p193, %s190, 7
      %s195 = smul.addr %s192, 8
      %s196 = sadd.s32 %s194, %s195
      %s197 = smul.addr %s196, 8
      %s198 = scalar_lea.vmem %s0, %s197
      %s199 = smul.u32 2, %s19
      %s200 = smul.u32 2, %s19
      %p201 = scmp.lt.s32.totalorder %s18, 1
      %s202 = scalar_select %p201, %s18, 1
      %p203 = scmp.lt.s32.totalorder %s200, 7
      %s204 = scalar_select %p203, %s200, 7
      %s205 = smul.addr %s202, 8
      %s206 = sadd.s32 %s204, %s205
      %s207 = smul.addr %s206, 4
      %s208 = scalar_lea.vmem %s3, %s207
      %s209 = smul.u32 2, %s19
      %v211 = vld [vmem:[%s198] sm:$0xff]
      %v212 = vld [vmem:[%s198 + $0x8] sm:$0xff]
      %v213 = vpack.c.bf16 %v212, %v211
      %v214 = vld [vmem:[%s1] sm:$0xf]
      %v215 = vld [vmem:[%s2] sm:$0x1]
      %v217 = vperm.slane %v215, 0
      %vm219 = vcmask 64512
      %v221 = vsel %vm219, %v213, 0
      %vm223 = vcmask 1043456
      %v225 = vsel %vm223, %v214, 0
      %227 = vmatpush.bf16.msra.mxu0 0
      %228 = vmatpush.bf16.msra.mxu0 0
      %229 = vmatpush.bf16.msra.mxu0 0
      %230 = vmatpush.bf16.msra.mxu0 0
      %231 = vmatpush.bf16.msra.mxu0 0
      %232 = vmatpush.bf16.msra.mxu0 0
      %233 = vmatpush.bf16.msra.mxu0 0
      %234 = vmatpush.bf16.msra.mxu0 %v225
      %235 = vmatmul.bf16.gmra.mxu0 %v221
      %v236 = vpop.f32.mrf.mxu0
      %v237 = vadd.f32 %v217, %v236
      %v238 = vpop.f32.mrf.mxu0
      %v239 = vadd.f32 %v217, %v238
      %240 = vdwg.mxu0
      %v241 = vpack.c.bf16 %v237, %v237
      %v242 = vpack.c.bf16 %v239, %v239
      %243 = vst [vmem:[%s208] sm:$0xf] %v241
      %244 = vst [vmem:[%s208 + $0x4] sm:$0xf] %v242
      %s245 = smul.u32 2, %s19
      %p246 = scmp.lt.s32.totalorder %s18, 1
      %s247 = scalar_select %p246, %s18, 1
      %p248 = scmp.lt.s32.totalorder %s245, 7
      %s249 = scalar_select %p248, %s245, 7
      %s250 = smul.addr %s247, 8
      %s251 = sadd.s32 %s249, %s250
      %s252 = smul.addr %s251, 4
      %s253 = scalar_lea.vmem %s3, %s252
      // Predicated region
      $region33: #{gnn_like_processor_forward.4} parent=31 // pred_check
        %p254 = pneg %p116
      $region34: #{gnn_like_processor_forward.4} parent=31 // pred_check_branch
        %256 = sbr.rel (%p254) target = $region36
      $region35: #{gnn_like_processor_forward.4} parent=31 // pred_region
        %s257 = smul.u32 2, %s19
      $region36: #{gnn_like_processor_forward.4} parent=31 // pred_fallthru
        _
    $region32: #{gnn_like_processor_forward.4} parent=5 // pred_fallthru
      _
    %p258 = scmp.le.s32.totalorder 2, %s9
    // Predicated region
    $region37: #{gnn_like_processor_forward.4} parent=5 // pred_check
      %p259 = pneg %p258
    $region38: #{gnn_like_processor_forward.4} parent=5 // pred_check_branch
      %261 = sbr.rel (%p259) target = $region40
    $region39: #{gnn_like_processor_forward.4} parent=5 // pred_region
      %s262 = ssub.s32 %s9, 2
      // Predicated region
      $region41: #{gnn_like_processor_forward.4} parent=39 // pred_check
        %p263 = pneg %p122
      $region42: #{gnn_like_processor_forward.4} parent=39 // pred_check_branch
        %265 = sbr.rel (%p263) target = $region44
      $region43: #{gnn_like_processor_forward.4} parent=39 // pred_region
        %s266 = smul.u32 2, %s21
        %p267 = scmp.lt.s32.totalorder %s20, 1
        %s268 = scalar_select %p267, %s20, 1
        %p269 = scmp.lt.s32.totalorder %s266, 7
        %s270 = scalar_select %p269, %s266, 7
        %s271 = smul.addr %s268, 8
        %s272 = sadd.s32 %s270, %s271
        %s273 = smul.addr %s272, 4
        %s274 = scalar_lea.vmem %s3, %s273
      $region44: #{gnn_like_processor_forward.4} parent=39 // pred_fallthru
        _
    $region40: #{gnn_like_processor_forward.4} parent=5 // pred_fallthru
      _
  $region6: #{gnn_like_processor_forward.4} parent=0 // loop_footer
    %s13 = sadd.s32 1, %s9
  $region7: #{gnn_like_processor_forward.4} parent=0 // loop_footer_branch
    %8 = sbr.rel target = $region3
  $region8: #{gnn_like_processor_forward.4} parent=0 // loop_exit
    _

// kernel: gnn_like_processor_forward.7
$region0: #{gnn_like_processor_forward.7}
  #allocation0 [shape = 'u32[]', space=smem, size = 0x4, offset = 0x4, fixed_abs, tag = 'smem constant byte address 0x4 - core index']
  #allocation1 [shape = 'u32[72,128]{1,0:T(1,128)}', space=vmem, size = 0x9000, scoped, tag = 'internal scratch']
  %s0 = inlined_call_operand.vmem [shape: bf16[2,64,128], index: 0, kind: input, shape index: {}]
  %s1 = inlined_call_operand.vmem [shape: bf16[128,4], index: 1, kind: input, shape index: {}]
  %s2 = inlined_call_operand.vmem [shape: f32[1,4], index: 2, kind: input, shape index: {}]
  %s3 = inlined_call_operand.vmem [shape: f32[2,64,4], index: 3, kind: output, shape index: {}]
  %s4 = sld [smem:[#allocation0]]
  $region45: #{gnn_like_processor_forward.7} parent=0
    _
  %s6 = ssub.s32 1, %s4
  %s7 = scalar_select 0, %s6, %s4
  loop: start=0, step=1, limit=10
  $region2: #{gnn_like_processor_forward.7} parent=0 // loop_pre_header
    _
  $region3: #{gnn_like_processor_forward.7} parent=0 // loop_header
    %s9 = sphi 0, %s13
    %p10 = scmp.ge.s32.totalorder %s9, 10
    %s16 = sphi 0, %s28
    %s17 = sphi 0, %s24
    %s18 = sphi 0, %s16
    %s19 = sphi 0, %s17
    %s20 = sphi 0, %s18
    %s21 = sphi 0, %s19
    %s33 = sphi 0, %s35
    %s36 = sphi 0, %s33
    %s37 = sphi 0, %s36
    %s53 = sphi 0, %s37
    %s57 = sphi 0, %s57
    %s59 = sphi 0, %s57
    %s60 = sphi 0, %s59
    %s74 = sphi 0, %s60
    %s78 = sphi 0, %s78
    %s80 = sphi 0, %s78
    %s81 = sphi 0, %s80
    %s95 = sphi 0, %s81
    %s103 = sphi 0, %s105
    %s106 = sphi 0, %s103
    %s107 = sphi 0, %s106
    %s123 = sphi 0, %s107
  $region4: #{gnn_like_processor_forward.7} parent=0 // loop_header_branch
    %12 = sbr.rel (%p10) target = $region8
  $region5: #{gnn_like_processor_forward.7} parent=0 // loop_body
    %s14 = ssub.s32 %s9, 1
    %s15 = ssub.s32 %s9, 2
    %s22 = sadd.s32 1, %s17
    %p23 = scmp.ge.s32.totalorder %s22, 4
    %s24 = scalar_select %p23, 0, %s22
    %s25 = sadd.s32 1, %s16
    %s26 = scalar_select %p23, %s25, %s16
    %p27 = scmp.ge.s32.totalorder %s26, 2
    %s28 = scalar_select %p27, 0, %s26
    %s29 = ssub.s32 %s16, %s28
    %s30 = ssub.s32 %s17, %s24
    %s31 = sor.u32 %s29, %s30
    %p32 = scmp.eq.s32.totalorder %s31, 0
    %s34 = sadd.s32 %s33, 1
    %s35 = scalar_select %p32, %s33, %s34
    %p38 = pneg %p32
    %p39 = scmp.eq.s32.totalorder %s9, 7
    %p40 = por %p38, %p39
    %p41 = scmp.ne.s32.totalorder %s33, %s36
    %p42 = scmp.eq.s32.totalorder %s9, 0
    %p43 = por %p41, %p42
    %p44 = scmp.ne.s32.totalorder %s33, %s36
    %p45 = scmp.eq.s32.totalorder %s14, 7
    %p46 = por %p44, %p45
    %p47 = scmp.ne.s32.totalorder %s36, %s37
    %p48 = scmp.eq.s32.totalorder %s14, 0
    %p49 = por %p47, %p48
    %p50 = scmp.ne.s32.totalorder %s36, %s37
    %p51 = scmp.eq.s32.totalorder %s15, 7
    %p52 = por %p50, %p51
    %p54 = scmp.ne.s32.totalorder %s37, %s53
    %p55 = scmp.eq.s32.totalorder %s15, 0
    %p56 = por %p54, %p55
    %s58 = sadd.s32 %s57, 1
    %p61 = scmp.eq.s32.totalorder %s9, 7
    %p62 = scmp.ne.s32.totalorder %s57, %s59
    %p63 = scmp.eq.s32.totalorder %s9, 0
    %p64 = por %p62, %p63
    %p65 = scmp.ne.s32.totalorder %s57, %s59
    %p66 = scmp.eq.s32.totalorder %s14, 7
    %p67 = por %p65, %p66
    %p68 = scmp.ne.s32.totalorder %s59, %s60
    %p69 = scmp.eq.s32.totalorder %s14, 0
    %p70 = por %p68, %p69
    %p71 = scmp.ne.s32.totalorder %s59, %s60
    %p72 = scmp.eq.s32.totalorder %s15, 7
    %p73 = por %p71, %p72
    %p75 = scmp.ne.s32.totalorder %s60, %s74
    %p76 = scmp.eq.s32.totalorder %s15, 0
    %p77 = por %p75, %p76
    %s79 = sadd.s32 %s78, 1
    %p82 = scmp.eq.s32.totalorder %s9, 7
    %p83 = scmp.ne.s32.totalorder %s78, %s80
    %p84 = scmp.eq.s32.totalorder %s9, 0
    %p85 = por %p83, %p84
    %p86 = scmp.ne.s32.totalorder %s78, %s80
    %p87 = scmp.eq.s32.totalorder %s14, 7
    %p88 = por %p86, %p87
    %p89 = scmp.ne.s32.totalorder %s80, %s81
    %p90 = scmp.eq.s32.totalorder %s14, 0
    %p91 = por %p89, %p90
    %p92 = scmp.ne.s32.totalorder %s80, %s81
    %p93 = scmp.eq.s32.totalorder %s15, 7
    %p94 = por %p92, %p93
    %p96 = scmp.ne.s32.totalorder %s81, %s95
    %p97 = scmp.eq.s32.totalorder %s15, 0
    %p98 = por %p96, %p97
    %s99 = ssub.s32 %s16, %s28
    %s100 = ssub.s32 %s17, %s24
    %s101 = sor.u32 %s99, %s100
    %p102 = scmp.eq.s32.totalorder %s101, 0
    %s104 = sadd.s32 %s103, 1
    %s105 = scalar_select %p102, %s103, %s104
    %p108 = pneg %p102
    %p109 = scmp.eq.s32.totalorder %s9, 7
    %p110 = por %p108, %p109
    %p111 = scmp.ne.s32.totalorder %s103, %s106
    %p112 = scmp.eq.s32.totalorder %s9, 0
    %p113 = por %p111, %p112
    %p114 = scmp.ne.s32.totalorder %s103, %s106
    %p115 = scmp.eq.s32.totalorder %s14, 7
    %p116 = por %p114, %p115
    %p117 = scmp.ne.s32.totalorder %s106, %s107
    %p118 = scmp.eq.s32.totalorder %s14, 0
    %p119 = por %p117, %p118
    %p120 = scmp.ne.s32.totalorder %s106, %s107
    %p121 = scmp.eq.s32.totalorder %s15, 7
    %p122 = por %p120, %p121
    %p124 = scmp.ne.s32.totalorder %s107, %s123
    %p125 = scmp.eq.s32.totalorder %s15, 0
    %p126 = por %p124, %p125
    %p127 = scmp.le.s32.totalorder 1, %s9
    %p128 = scmp.lt.s32.totalorder %s9, 9
    %p129 = pnand %p127, %p128
    %p130 = pneg %p129
    // Predicated region
    $region9: #{gnn_like_processor_forward.7} parent=5 // pred_check
      _
    $region10: #{gnn_like_processor_forward.7} parent=5 // pred_check_branch
      %132 = sbr.rel (%p129) target = $region12
    $region11: #{gnn_like_processor_forward.7} parent=5 // pred_region
      %s133 = ssub.s32 %s9, 1
      // Predicated region
      $region13: #{gnn_like_processor_forward.7} parent=11 // pred_check
        %p134 = pneg %p70
      $region14: #{gnn_like_processor_forward.7} parent=11 // pred_check_branch
        %136 = sbr.rel (%p134) target = $region16
      $region15: #{gnn_like_processor_forward.7} parent=11 // pred_region
        _
      $region16: #{gnn_like_processor_forward.7} parent=11 // pred_fallthru
        _
      // Predicated region
      $region17: #{gnn_like_processor_forward.7} parent=11 // pred_check
        %p137 = pneg %p91
      $region18: #{gnn_like_processor_forward.7} parent=11 // pred_check_branch
        %139 = sbr.rel (%p137) target = $region20
      $region19: #{gnn_like_processor_forward.7} parent=11 // pred_region
        _
      $region20: #{gnn_like_processor_forward.7} parent=11 // pred_fallthru
        _
    $region12: #{gnn_like_processor_forward.7} parent=5 // pred_fallthru
      _
    %p140 = scmp.lt.s32.totalorder %s9, 8
    // Predicated region
    $region21: #{gnn_like_processor_forward.7} parent=5 // pred_check
      %p141 = pneg %p140
    $region22: #{gnn_like_processor_forward.7} parent=5 // pred_check_branch
      %143 = sbr.rel (%p141) target = $region24
    $region23: #{gnn_like_processor_forward.7} parent=5 // pred_region
      // Predicated region
      $region25: #{gnn_like_processor_forward.7} parent=23 // pred_check
        %p144 = pneg %p43
      $region26: #{gnn_like_processor_forward.7} parent=23 // pred_check_branch
        %146 = sbr.rel (%p144) target = $region28
      $region27: #{gnn_like_processor_forward.7} parent=23 // pred_region
        %s147 = smul.u32 2, %s17
        %p148 = scmp.lt.s32.totalorder %s16, 1
        %s149 = scalar_select %p148, %s16, 1
        %p150 = scmp.lt.s32.totalorder %s147, 7
        %s151 = scalar_select %p150, %s147, 7
        %s152 = smul.addr %s149, 8
        %s153 = sadd.s32 %s151, %s152
        %s154 = smul.addr %s153, 4
        %s155 = scalar_lea.vmem %s0, %s154
        %s156 = smul.u32 2, %s17
      $region28: #{gnn_like_processor_forward.7} parent=23 // pred_fallthru
        _
    $region24: #{gnn_like_processor_forward.7} parent=5 // pred_fallthru
      _
    %p157 = scmp.le.s32.totalorder 1, %s9
    %p158 = scmp.lt.s32.totalorder %s9, 9
    %p159 = pnand %p157, %p158
    %p160 = pneg %p159
    // Predicated region
    $region29: #{gnn_like_processor_forward.7} parent=5 // pred_check
      _
    $region30: #{gnn_like_processor_forward.7} parent=5 // pred_check_branch
      %162 = sbr.rel (%p159) target = $region32
    $region31: #{gnn_like_processor_forward.7} parent=5 // pred_region
      %s163 = ssub.s32 %s9, 1
      %s164 = smul.u32 2, %s19
      %p165 = scmp.lt.s32.totalorder %s18, 1
      %s166 = scalar_select %p165, %s18, 1
      %p167 = scmp.lt.s32.totalorder %s164, 7
      %s168 = scalar_select %p167, %s164, 7
      %s169 = smul.addr %s166, 8
      %s170 = sadd.s32 %s168, %s169
      %s171 = smul.addr %s170, 4
      %s172 = scalar_lea.vmem %s0, %s171
      %p173 = pneg %p49
      %p174 = pneg %p46
      %p175 = pneg %p70
      %p176 = pneg %p67
      %p177 = pneg %p91
      %p178 = pneg %p88
      %p179 = pneg %p119
      %p180 = pneg %p116
      %s181 = smul.u32 2, %s19
      %p182 = scmp.lt.s32.totalorder %s18, 1
      %s183 = scalar_select %p182, %s18, 1
      %p184 = scmp.lt.s32.totalorder %s181, 7
      %s185 = scalar_select %p184, %s181, 7
      %s186 = smul.addr %s183, 8
      %s187 = sadd.s32 %s185, %s186
      %s188 = smul.addr %s187, 8
      %s189 = scalar_lea.vmem %s3, %s188
      %s190 = smul.u32 2, %s19
      %p191 = scmp.lt.s32.totalorder %s18, 1
      %s192 = scalar_select %p191, %s18, 1
      %p193 = scmp.lt.s32.totalorder %s190, 7
      %s194 = scalar_select %p193, %s190, 7
      %s195 = smul.addr %s192, 8
      %s196 = sadd.s32 %s194, %s195
      %s197 = smul.addr %s196, 4
      %s198 = scalar_lea.vmem %s0, %s197
      %s199 = smul.u32 2, %s19
      %s200 = smul.u32 2, %s19
      %p201 = scmp.lt.s32.totalorder %s18, 1
      %s202 = scalar_select %p201, %s18, 1
      %p203 = scmp.lt.s32.totalorder %s200, 7
      %s204 = scalar_select %p203, %s200, 7
      %s205 = smul.addr %s202, 8
      %s206 = sadd.s32 %s204, %s205
      %s207 = smul.addr %s206, 8
      %s208 = scalar_lea.vmem %s3, %s207
      %s209 = smul.u32 2, %s19
      %v210 = vld [vmem:[%s198] sm:$0xf]
      %v211 = vld [vmem:[%s198 + $0x4] sm:$0xf]
      %v212 = vld [vmem:[%s1] sm:$0xf]
      %v213 = vld [vmem:[%s1 + $0x4] sm:$0xf]
      %v214 = vld [vmem:[%s1 + $0x8] sm:$0xf]
      %v215 = vld [vmem:[%s1 + $0xc] sm:$0xf]
      %v216 = vld [vmem:[%s1 + $0x10] sm:$0xf]
      %v217 = vld [vmem:[%s1 + $0x14] sm:$0xf]
      %v218 = vld [vmem:[%s1 + $0x18] sm:$0xf]
      %v219 = vld [vmem:[%s1 + $0x1c] sm:$0xf]
      %v220 = vld [vmem:[%s1 + $0x20] sm:$0xf]
      %v221 = vld [vmem:[%s1 + $0x24] sm:$0xf]
      %v222 = vld [vmem:[%s1 + $0x28] sm:$0xf]
      %v223 = vld [vmem:[%s1 + $0x2c] sm:$0xf]
      %v224 = vld [vmem:[%s1 + $0x30] sm:$0xf]
      %v225 = vld [vmem:[%s1 + $0x34] sm:$0xf]
      %v226 = vld [vmem:[%s1 + $0x38] sm:$0xf]
      %v227 = vld [vmem:[%s1 + $0x3c] sm:$0xf]
      %v228 = vld [vmem:[%s2] sm:$0x1]
      %v230 = vperm.slane %v228, 0
      %v234 = vunpack.c.l.b16 %v210
      %v235 = vunpack.c.l.b16 %v211
      %v236 = vpack.c.b16 %v235, %v234
      %v254 = vunpack.c.l.b16 %v212
      %v255 = vunpack.c.l.b16 %v213
      %v256 = vunpack.c.l.b16 %v214
      %v257 = vunpack.c.l.b16 %v215
      %v258 = vunpack.c.l.b16 %v216
      %v259 = vunpack.c.l.b16 %v217
      %v260 = vunpack.c.l.b16 %v218
      %v261 = vunpack.c.l.b16 %v219
      %v262 = vunpack.c.l.b16 %v220
      %v263 = vunpack.c.l.b16 %v221
      %v264 = vunpack.c.l.b16 %v222
      %v265 = vunpack.c.l.b16 %v223
      %v266 = vunpack.c.l.b16 %v224
      %v267 = vunpack.c.l.b16 %v225
      %v268 = vunpack.c.l.b16 %v226
      %v269 = vunpack.c.l.b16 %v227
      %v270 = vpack.c.b16 %v255, %v254
      %v271 = vpack.c.b16 %v257, %v256
      %v272 = vpack.c.b16 %v259, %v258
      %v273 = vpack.c.b16 %v261, %v260
      %v274 = vpack.c.b16 %v263, %v262
      %v275 = vpack.c.b16 %v265, %v264
      %v276 = vpack.c.b16 %v267, %v266
      %v277 = vpack.c.b16 %v269, %v268
      %286 = vmatpush.bf16.msra.mxu0 %v277
      %287 = vmatpush.bf16.msra.mxu0 %v276
      %288 = vmatpush.bf16.msra.mxu0 %v275
      %289 = vmatpush.bf16.msra.mxu0 %v274
      %290 = vmatpush.bf16.msra.mxu0 %v273
      %291 = vmatpush.bf16.msra.mxu0 %v272
      %292 = vmatpush.bf16.msra.mxu0 %v271
      %293 = vmatpush.bf16.msra.mxu0 %v270
      %294 = vmatmul.bf16.gmra.mxu0 %v236
      %v295 = vpop.f32.mrf.mxu0
      %v296 = vadd.f32 %v230, %v295
      %v297 = vpop.f32.mrf.mxu0
      %v298 = vadd.f32 %v230, %v297
      %299 = vdwg.mxu0
      %vm300 = vcmask 31744
      %301 = vst.msk [vmem:[%s208] sm:$0xff] %vm300, %v296
      %302 = vst.msk [vmem:[%s208 + $0x8] sm:$0xff] %vm300, %v298
      %s303 = smul.u32 2, %s19
      %p304 = scmp.lt.s32.totalorder %s18, 1
      %s305 = scalar_select %p304, %s18, 1
      %p306 = scmp.lt.s32.totalorder %s303, 7
      %s307 = scalar_select %p306, %s303, 7
      %s308 = smul.addr %s305, 8
      %s309 = sadd.s32 %s307, %s308
      %s310 = smul.addr %s309, 8
      %s311 = scalar_lea.vmem %s3, %s310
      // Predicated region
      $region33: #{gnn_like_processor_forward.7} parent=31 // pred_check
        %p312 = pneg %p116
      $region34: #{gnn_like_processor_forward.7} parent=31 // pred_check_branch
        %314 = sbr.rel (%p312) target = $region36
      $region35: #{gnn_like_processor_forward.7} parent=31 // pred_region
        %s315 = smul.u32 2, %s19
      $region36: #{gnn_like_processor_forward.7} parent=31 // pred_fallthru
        _
    $region32: #{gnn_like_processor_forward.7} parent=5 // pred_fallthru
      _
    %p316 = scmp.le.s32.totalorder 2, %s9
    // Predicated region
    $region37: #{gnn_like_processor_forward.7} parent=5 // pred_check
      %p317 = pneg %p316
    $region38: #{gnn_like_processor_forward.7} parent=5 // pred_check_branch
      %319 = sbr.rel (%p317) target = $region40
    $region39: #{gnn_like_processor_forward.7} parent=5 // pred_region
      %s320 = ssub.s32 %s9, 2
      // Predicated region
      $region41: #{gnn_like_processor_forward.7} parent=39 // pred_check
        %p321 = pneg %p122
      $region42: #{gnn_like_processor_forward.7} parent=39 // pred_check_branch
        %323 = sbr.rel (%p321) target = $region44
      $region43: #{gnn_like_processor_forward.7} parent=39 // pred_region
        %s324 = smul.u32 2, %s21
        %p325 = scmp.lt.s32.totalorder %s20, 1
        %s326 = scalar_select %p325, %s20, 1
        %p327 = scmp.lt.s32.totalorder %s324, 7
        %s328 = scalar_select %p327, %s324, 7
        %s329 = smul.addr %s326, 8
        %s330 = sadd.s32 %s328, %s329
        %s331 = smul.addr %s330, 8
        %s332 = scalar_lea.vmem %s3, %s331
      $region44: #{gnn_like_processor_forward.7} parent=39 // pred_fallthru
        _
    $region40: #{gnn_like_processor_forward.7} parent=5 // pred_fallthru
      _
  $region6: #{gnn_like_processor_forward.7} parent=0 // loop_footer
    %s13 = sadd.s32 1, %s9
  $region7: #{gnn_like_processor_forward.7} parent=0 // loop_footer_branch
    %8 = sbr.rel target = $region3
  $region8: #{gnn_like_processor_forward.7} parent=0 // loop_exit
    _

// kernel: gnn_like_processor_forward.5
$region0: #{gnn_like_processor_forward.5}
  #allocation0 [shape = 'u32[]', space=smem, size = 0x4, offset = 0x4, fixed_abs, tag = 'smem constant byte address 0x4 - core index']
  #allocation1 [shape = 'u32[72,128]{1,0:T(1,128)}', space=vmem, size = 0x9000, scoped, tag = 'internal scratch']
  %s0 = inlined_call_operand.vmem [shape: bf16[2,64,128], index: 0, kind: input, shape index: {}, may-alias: {0,1,2}]
  %s1 = inlined_call_operand.vmem [shape: bf16[2,64,128], index: 1, kind: input, shape index: {}, may-alias: {0,1,2}]
  %s2 = inlined_call_operand.vmem [shape: bf16[2,64,128], index: 2, kind: input, shape index: {}, may-alias: {0,1,2}]
  %s3 = inlined_call_operand.vmem [shape: f32[2,1,128], index: 3, kind: input, shape index: {}]
  %s4 = inlined_call_operand.hbm [shape: bf16[640,128], index: 4, kind: input, shape index: {}]
  %s5 = inlined_call_operand.vmem [shape: f32[1,128], index: 5, kind: input, shape index: {}]
  %s6 = inlined_call_operand.vmem [shape: f32[1,128], index: 6, kind: input, shape index: {}]
  %s7 = inlined_call_operand.vmem [shape: f32[1,128], index: 7, kind: input, shape index: {}]
  %s8 = inlined_call_operand.vmem [shape: bf16[128,128], index: 8, kind: input, shape index: {}]
  %s9 = inlined_call_operand.vmem [shape: bf16[128,128], index: 9, kind: input, shape index: {}]
  %s10 = inlined_call_operand.vmem [shape: f32[1,128], index: 10, kind: input, shape index: {}]
  %s11 = inlined_call_operand.vmem [shape: bf16[2,64,128], index: 11, kind: output, shape index: {}]
  %s12 = sld [smem:[#allocation0]]
  $region81: #{gnn_like_processor_forward.5} parent=0
    _
  %s14 = ssub.s32 1, %s12
  %s15 = scalar_select 0, %s14, %s12
  $region1: #{gnn_like_processor_forward.5} parent=0
    #allocation2 [shape = 'u8[163840]{0}', space=vmem, size = 0x28000, scoped, tag = 'input window, operand 4, single buffered']
    #allocation3 [shape = 's32[2]{0}', space=sflag, size = 0x8, scoped, tag = 'scoped memory for gnn_like_processor_forward.5']
    %16 = vsyncpa [#allocation3], 0
    loop: start=0, step=1, limit=10
    $region2: #{gnn_like_processor_forward.5} parent=1 // loop_pre_header
      _
    $region3: #{gnn_like_processor_forward.5} parent=1 // loop_header
      %s18 = sphi 0, %s22
      %p19 = scmp.ge.s32.totalorder %s18, 10
      %s25 = sphi 0, %s37
      %s26 = sphi 0, %s33
      %s27 = sphi 0, %s25
      %s28 = sphi 0, %s26
      %s29 = sphi 0, %s27
      %s30 = sphi 0, %s28
      %s42 = sphi 0, %s44
      %s45 = sphi 0, %s42
      %s46 = sphi 0, %s45
      %s62 = sphi 0, %s46
      %s76 = sphi 0, %s78
      %s79 = sphi 0, %s76
      %s80 = sphi 0, %s79
      %s96 = sphi 0, %s80
      %s110 = sphi 0, %s112
      %s113 = sphi 0, %s110
      %s114 = sphi 0, %s113
      %s130 = sphi 0, %s114
      %s136 = sphi 0, %s138
      %s139 = sphi 0, %s136
      %s140 = sphi 0, %s139
      %s156 = sphi 0, %s140
      %s160 = sphi 0, %s160
      %s162 = sphi 0, %s160
      %s163 = sphi 0, %s162
      %s177 = sphi 0, %s163
      %s181 = sphi 0, %s181
      %s183 = sphi 0, %s181
      %s184 = sphi 0, %s183
      %s198 = sphi 0, %s184
      %s202 = sphi 0, %s202
      %s204 = sphi 0, %s202
      %s205 = sphi 0, %s204
      %s219 = sphi 0, %s205
      %s223 = sphi 0, %s223
      %s225 = sphi 0, %s223
      %s226 = sphi 0, %s225
      %s240 = sphi 0, %s226
      %s244 = sphi 0, %s244
      %s246 = sphi 0, %s244
      %s247 = sphi 0, %s246
      %s261 = sphi 0, %s247
      %s265 = sphi 0, %s265
      %s267 = sphi 0, %s265
      %s268 = sphi 0, %s267
      %s282 = sphi 0, %s268
      %s286 = sphi 0, %s286
      %s288 = sphi 0, %s286
      %s289 = sphi 0, %s288
      %s303 = sphi 0, %s289
      %s311 = sphi 0, %s313
      %s314 = sphi 0, %s311
      %s315 = sphi 0, %s314
      %s331 = sphi 0, %s315
    $region4: #{gnn_like_processor_forward.5} parent=1 // loop_header_branch
      %21 = sbr.rel (%p19) target = $region8
    $region5: #{gnn_like_processor_forward.5} parent=1 // loop_body
      %s23 = ssub.s32 %s18, 1
      %s24 = ssub.s32 %s18, 2
      %s31 = sadd.s32 1, %s26
      %p32 = scmp.ge.s32.totalorder %s31, 4
      %s33 = scalar_select %p32, 0, %s31
      %s34 = sadd.s32 1, %s25
      %s35 = scalar_select %p32, %s34, %s25
      %p36 = scmp.ge.s32.totalorder %s35, 2
      %s37 = scalar_select %p36, 0, %s35
      %s38 = ssub.s32 %s25, %s37
      %s39 = ssub.s32 %s26, %s33
      %s40 = sor.u32 %s38, %s39
      %p41 = scmp.eq.s32.totalorder %s40, 0
      %s43 = sadd.s32 %s42, 1
      %s44 = scalar_select %p41, %s42, %s43
      %p47 = pneg %p41
      %p48 = scmp.eq.s32.totalorder %s18, 7
      %p49 = por %p47, %p48
      %p50 = scmp.ne.s32.totalorder %s42, %s45
      %p51 = scmp.eq.s32.totalorder %s18, 0
      %p52 = por %p50, %p51
      %p53 = scmp.ne.s32.totalorder %s42, %s45
      %p54 = scmp.eq.s32.totalorder %s23, 7
      %p55 = por %p53, %p54
      %p56 = scmp.ne.s32.totalorder %s45, %s46
      %p57 = scmp.eq.s32.totalorder %s23, 0
      %p58 = por %p56, %p57
      %p59 = scmp.ne.s32.totalorder %s45, %s46
      %p60 = scmp.eq.s32.totalorder %s24, 7
      %p61 = por %p59, %p60
      %p63 = scmp.ne.s32.totalorder %s46, %s62
      %p64 = scmp.eq.s32.totalorder %s24, 0
      %p65 = por %p63, %p64
      %s66 = ssub.s32 %s26, 1
      %p67 = scmp.gt.s32.totalorder %s66, 0
      %s68 = scalar_select %p67, %s66, 0
      %s69 = ssub.s32 %s33, 1
      %p70 = scmp.gt.s32.totalorder %s69, 0
      %s71 = scalar_select %p70, %s69, 0
      %s72 = ssub.s32 %s25, %s37
      %s73 = ssub.s32 %s68, %s71
      %s74 = sor.u32 %s72, %s73
      %p75 = scmp.eq.s32.totalorder %s74, 0
      %s77 = sadd.s32 %s76, 1
      %s78 = scalar_select %p75, %s76, %s77
      %p81 = pneg %p75
      %p82 = scmp.eq.s32.totalorder %s18, 7
      %p83 = por %p81, %p82
      %p84 = scmp.ne.s32.totalorder %s76, %s79
      %p85 = scmp.eq.s32.totalorder %s18, 0
      %p86 = por %p84, %p85
      %p87 = scmp.ne.s32.totalorder %s76, %s79
      %p88 = scmp.eq.s32.totalorder %s23, 7
      %p89 = por %p87, %p88
      %p90 = scmp.ne.s32.totalorder %s79, %s80
      %p91 = scmp.eq.s32.totalorder %s23, 0
      %p92 = por %p90, %p91
      %p93 = scmp.ne.s32.totalorder %s79, %s80
      %p94 = scmp.eq.s32.totalorder %s24, 7
      %p95 = por %p93, %p94
      %p97 = scmp.ne.s32.totalorder %s80, %s96
      %p98 = scmp.eq.s32.totalorder %s24, 0
      %p99 = por %p97, %p98
      %s100 = sadd.s32 %s26, 1
      %p101 = scmp.lt.s32.totalorder %s100, 3
      %s102 = scalar_select %p101, %s100, 3
      %s103 = sadd.s32 %s33, 1
      %p104 = scmp.lt.s32.totalorder %s103, 3
      %s105 = scalar_select %p104, %s103, 3
      %s106 = ssub.s32 %s25, %s37
      %s107 = ssub.s32 %s102, %s105
      %s108 = sor.u32 %s106, %s107
      %p109 = scmp.eq.s32.totalorder %s108, 0
      %s111 = sadd.s32 %s110, 1
      %s112 = scalar_select %p109, %s110, %s111
      %p115 = pneg %p109
      %p116 = scmp.eq.s32.totalorder %s18, 7
      %p117 = por %p115, %p116
      %p118 = scmp.ne.s32.totalorder %s110, %s113
      %p119 = scmp.eq.s32.totalorder %s18, 0
      %p120 = por %p118, %p119
      %p121 = scmp.ne.s32.totalorder %s110, %s113
      %p122 = scmp.eq.s32.totalorder %s23, 7
      %p123 = por %p121, %p122
      %p124 = scmp.ne.s32.totalorder %s113, %s114
      %p125 = scmp.eq.s32.totalorder %s23, 0
      %p126 = por %p124, %p125
      %p127 = scmp.ne.s32.totalorder %s113, %s114
      %p128 = scmp.eq.s32.totalorder %s24, 7
      %p129 = por %p127, %p128
      %p131 = scmp.ne.s32.totalorder %s114, %s130
      %p132 = scmp.eq.s32.totalorder %s24, 0
      %p133 = por %p131, %p132
      %s134 = ssub.s32 %s25, %s37
      %p135 = scmp.eq.s32.totalorder %s134, 0
      %s137 = sadd.s32 %s136, 1
      %s138 = scalar_select %p135, %s136, %s137
      %p141 = pneg %p135
      %p142 = scmp.eq.s32.totalorder %s18, 7
      %p143 = por %p141, %p142
      %p144 = scmp.ne.s32.totalorder %s136, %s139
      %p145 = scmp.eq.s32.totalorder %s18, 0
      %p146 = por %p144, %p145
      %p147 = scmp.ne.s32.totalorder %s136, %s139
      %p148 = scmp.eq.s32.totalorder %s23, 7
      %p149 = por %p147, %p148
      %p150 = scmp.ne.s32.totalorder %s139, %s140
      %p151 = scmp.eq.s32.totalorder %s23, 0
      %p152 = por %p150, %p151
      %p153 = scmp.ne.s32.totalorder %s139, %s140
      %p154 = scmp.eq.s32.totalorder %s24, 7
      %p155 = por %p153, %p154
      %p157 = scmp.ne.s32.totalorder %s140, %s156
      %p158 = scmp.eq.s32.totalorder %s24, 0
      %p159 = por %p157, %p158
      %s161 = sadd.s32 %s160, 1
      %p164 = scmp.eq.s32.totalorder %s18, 7
      %p165 = scmp.ne.s32.totalorder %s160, %s162
      %p166 = scmp.eq.s32.totalorder %s18, 0
      %p167 = por %p165, %p166
      %p168 = scmp.ne.s32.totalorder %s160, %s162
      %p169 = scmp.eq.s32.totalorder %s23, 7
      %p170 = por %p168, %p169
      %p171 = scmp.ne.s32.totalorder %s162, %s163
      %p172 = scmp.eq.s32.totalorder %s23, 0
      %p173 = por %p171, %p172
      %p174 = scmp.ne.s32.totalorder %s162, %s163
      %p175 = scmp.eq.s32.totalorder %s24, 7
      %p176 = por %p174, %p175
      %p178 = scmp.ne.s32.totalorder %s163, %s177
      %p179 = scmp.eq.s32.totalorder %s24, 0
      %p180 = por %p178, %p179
      %s182 = sadd.s32 %s181, 1
      %p185 = scmp.eq.s32.totalorder %s18, 7
      %p186 = scmp.ne.s32.totalorder %s181, %s183
      %p187 = scmp.eq.s32.totalorder %s18, 0
      %p188 = por %p186, %p187
      %p189 = scmp.ne.s32.totalorder %s181, %s183
      %p190 = scmp.eq.s32.totalorder %s23, 7
      %p191 = por %p189, %p190
      %p192 = scmp.ne.s32.totalorder %s183, %s184
      %p193 = scmp.eq.s32.totalorder %s23, 0
      %p194 = por %p192, %p193
      %p195 = scmp.ne.s32.totalorder %s183, %s184
      %p196 = scmp.eq.s32.totalorder %s24, 7
      %p197 = por %p195, %p196
      %p199 = scmp.ne.s32.totalorder %s184, %s198
      %p200 = scmp.eq.s32.totalorder %s24, 0
      %p201 = por %p199, %p200
      %s203 = sadd.s32 %s202, 1
      %p206 = scmp.eq.s32.totalorder %s18, 7
      %p207 = scmp.ne.s32.totalorder %s202, %s204
      %p208 = scmp.eq.s32.totalorder %s18, 0
      %p209 = por %p207, %p208
      %p210 = scmp.ne.s32.totalorder %s202, %s204
      %p211 = scmp.eq.s32.totalorder %s23, 7
      %p212 = por %p210, %p211
      %p213 = scmp.ne.s32.totalorder %s204, %s205
      %p214 = scmp.eq.s32.totalorder %s23, 0
      %p215 = por %p213, %p214
      %p216 = scmp.ne.s32.totalorder %s204, %s205
      %p217 = scmp.eq.s32.totalorder %s24, 7
      %p218 = por %p216, %p217
      %p220 = scmp.ne.s32.totalorder %s205, %s219
      %p221 = scmp.eq.s32.totalorder %s24, 0
      %p222 = por %p220, %p221
      %s224 = sadd.s32 %s223, 1
      %p227 = scmp.eq.s32.totalorder %s18, 7
      %p228 = scmp.ne.s32.totalorder %s223, %s225
      %p229 = scmp.eq.s32.totalorder %s18, 0
      %p230 = por %p228, %p229
      %p231 = scmp.ne.s32.totalorder %s223, %s225
      %p232 = scmp.eq.s32.totalorder %s23, 7
      %p233 = por %p231, %p232
      %p234 = scmp.ne.s32.totalorder %s225, %s226
      %p235 = scmp.eq.s32.totalorder %s23, 0
      %p236 = por %p234, %p235
      %p237 = scmp.ne.s32.totalorder %s225, %s226
      %p238 = scmp.eq.s32.totalorder %s24, 7
      %p239 = por %p237, %p238
      %p241 = scmp.ne.s32.totalorder %s226, %s240
      %p242 = scmp.eq.s32.totalorder %s24, 0
      %p243 = por %p241, %p242
      %s245 = sadd.s32 %s244, 1
      %p248 = scmp.eq.s32.totalorder %s18, 7
      %p249 = scmp.ne.s32.totalorder %s244, %s246
      %p250 = scmp.eq.s32.totalorder %s18, 0
      %p251 = por %p249, %p250
      %p252 = scmp.ne.s32.totalorder %s244, %s246
      %p253 = scmp.eq.s32.totalorder %s23, 7
      %p254 = por %p252, %p253
      %p255 = scmp.ne.s32.totalorder %s246, %s247
      %p256 = scmp.eq.s32.totalorder %s23, 0
      %p257 = por %p255, %p256
      %p258 = scmp.ne.s32.totalorder %s246, %s247
      %p259 = scmp.eq.s32.totalorder %s24, 7
      %p260 = por %p258, %p259
      %p262 = scmp.ne.s32.totalorder %s247, %s261
      %p263 = scmp.eq.s32.totalorder %s24, 0
      %p264 = por %p262, %p263
      %s266 = sadd.s32 %s265, 1
      %p269 = scmp.eq.s32.totalorder %s18, 7
      %p270 = scmp.ne.s32.totalorder %s265, %s267
      %p271 = scmp.eq.s32.totalorder %s18, 0
      %p272 = por %p270, %p271
      %p273 = scmp.ne.s32.totalorder %s265, %s267
      %p274 = scmp.eq.s32.totalorder %s23, 7
      %p275 = por %p273, %p274
      %p276 = scmp.ne.s32.totalorder %s267, %s268
      %p277 = scmp.eq.s32.totalorder %s23, 0
      %p278 = por %p276, %p277
      %p279 = scmp.ne.s32.totalorder %s267, %s268
      %p280 = scmp.eq.s32.totalorder %s24, 7
      %p281 = por %p279, %p280
      %p283 = scmp.ne.s32.totalorder %s268, %s282
      %p284 = scmp.eq.s32.totalorder %s24, 0
      %p285 = por %p283, %p284
      %s287 = sadd.s32 %s286, 1
      %p290 = scmp.eq.s32.totalorder %s18, 7
      %p291 = scmp.ne.s32.totalorder %s286, %s288
      %p292 = scmp.eq.s32.totalorder %s18, 0
      %p293 = por %p291, %p292
      %p294 = scmp.ne.s32.totalorder %s286, %s288
      %p295 = scmp.eq.s32.totalorder %s23, 7
      %p296 = por %p294, %p295
      %p297 = scmp.ne.s32.totalorder %s288, %s289
      %p298 = scmp.eq.s32.totalorder %s23, 0
      %p299 = por %p297, %p298
      %p300 = scmp.ne.s32.totalorder %s288, %s289
      %p301 = scmp.eq.s32.totalorder %s24, 7
      %p302 = por %p300, %p301
      %p304 = scmp.ne.s32.totalorder %s289, %s303
      %p305 = scmp.eq.s32.totalorder %s24, 0
      %p306 = por %p304, %p305
      %s307 = ssub.s32 %s25, %s37
      %s308 = ssub.s32 %s26, %s33
      %s309 = sor.u32 %s307, %s308
      %p310 = scmp.eq.s32.totalorder %s309, 0
      %s312 = sadd.s32 %s311, 1
      %s313 = scalar_select %p310, %s311, %s312
      %p316 = pneg %p310
      %p317 = scmp.eq.s32.totalorder %s18, 7
      %p318 = por %p316, %p317
      %p319 = scmp.ne.s32.totalorder %s311, %s314
      %p320 = scmp.eq.s32.totalorder %s18, 0
      %p321 = por %p319, %p320
      %p322 = scmp.ne.s32.totalorder %s311, %s314
      %p323 = scmp.eq.s32.totalorder %s23, 7
      %p324 = por %p322, %p323
      %p325 = scmp.ne.s32.totalorder %s314, %s315
      %p326 = scmp.eq.s32.totalorder %s23, 0
      %p327 = por %p325, %p326
      %p328 = scmp.ne.s32.totalorder %s314, %s315
      %p329 = scmp.eq.s32.totalorder %s24, 7
      %p330 = por %p328, %p329
      %p332 = scmp.ne.s32.totalorder %s315, %s331
      %p333 = scmp.eq.s32.totalorder %s24, 0
      %p334 = por %p332, %p333
      %p335 = scmp.le.s32.totalorder 1, %s18
      %p336 = scmp.lt.s32.totalorder %s18, 9
      %p337 = pnand %p335, %p336
      %p338 = pneg %p337
      // Predicated region
      $region9: #{gnn_like_processor_forward.5} parent=5 // pred_check
        _
      $region10: #{gnn_like_processor_forward.5} parent=5 // pred_check_branch
        %340 = sbr.rel (%p337) target = $region12
      $region11: #{gnn_like_processor_forward.5} parent=5 // pred_region
        %s341 = ssub.s32 %s18, 1
        // Predicated region
        $region13: #{gnn_like_processor_forward.5} parent=11 // pred_check
          %p342 = pneg %p173
        $region14: #{gnn_like_processor_forward.5} parent=11 // pred_check_branch
          %344 = sbr.rel (%p342) target = $region16
        $region15: #{gnn_like_processor_forward.5} parent=11 // pred_region
          %346 = vsyncadd [#allocation3], 0
          %s347 = sshll.u32 %s4, 4
          %s348 = int_to_ptr.hbm [resolvable:$true] %s347
          %s349 = sshll.u32 [#allocation2], 4
          %s350 = int_to_ptr.vmem [resolvable:$true] %s349
          %355 = dma.hbm_to_vmem [thread:$0]  %s348, 5120, %s350, [#allocation3], 64, 64, 4
        $region16: #{gnn_like_processor_forward.5} parent=11 // pred_fallthru
          _
        // Predicated region
        $region17: #{gnn_like_processor_forward.5} parent=11 // pred_check
          %p356 = pneg %p194
        $region18: #{gnn_like_processor_forward.5} parent=11 // pred_check_branch
          %358 = sbr.rel (%p356) target = $region20
        $region19: #{gnn_like_processor_forward.5} parent=11 // pred_region
          _
        $region20: #{gnn_like_processor_forward.5} parent=11 // pred_fallthru
          _
        // Predicated region
        $region21: #{gnn_like_processor_forward.5} parent=11 // pred_check
          %p359 = pneg %p215
        $region22: #{gnn_like_processor_forward.5} parent=11 // pred_check_branch
          %361 = sbr.rel (%p359) target = $region24
        $region23: #{gnn_like_processor_forward.5} parent=11 // pred_region
          _
        $region24: #{gnn_like_processor_forward.5} parent=11 // pred_fallthru
          _
        // Predicated region
        $region25: #{gnn_like_processor_forward.5} parent=11 // pred_check
          %p362 = pneg %p236
        $region26: #{gnn_like_processor_forward.5} parent=11 // pred_check_branch
          %364 = sbr.rel (%p362) target = $region28
        $region27: #{gnn_like_processor_forward.5} parent=11 // pred_region
          _
        $region28: #{gnn_like_processor_forward.5} parent=11 // pred_fallthru
          _
        // Predicated region
        $region29: #{gnn_like_processor_forward.5} parent=11 // pred_check
          %p365 = pneg %p257
        $region30: #{gnn_like_processor_forward.5} parent=11 // pred_check_branch
          %367 = sbr.rel (%p365) target = $region32
        $region31: #{gnn_like_processor_forward.5} parent=11 // pred_region
          _
        $region32: #{gnn_like_processor_forward.5} parent=11 // pred_fallthru
          _
        // Predicated region
        $region33: #{gnn_like_processor_forward.5} parent=11 // pred_check
          %p368 = pneg %p278
        $region34: #{gnn_like_processor_forward.5} parent=11 // pred_check_branch
          %370 = sbr.rel (%p368) target = $region36
        $region35: #{gnn_like_processor_forward.5} parent=11 // pred_region
          _
        $region36: #{gnn_like_processor_forward.5} parent=11 // pred_fallthru
          _
        // Predicated region
        $region37: #{gnn_like_processor_forward.5} parent=11 // pred_check
          %p371 = pneg %p299
        $region38: #{gnn_like_processor_forward.5} parent=11 // pred_check_branch
          %373 = sbr.rel (%p371) target = $region40
        $region39: #{gnn_like_processor_forward.5} parent=11 // pred_region
          _
        $region40: #{gnn_like_processor_forward.5} parent=11 // pred_fallthru
          _
      $region12: #{gnn_like_processor_forward.5} parent=5 // pred_fallthru
        _
      %p374 = scmp.lt.s32.totalorder %s18, 8
      // Predicated region
      $region41: #{gnn_like_processor_forward.5} parent=5 // pred_check
        %p375 = pneg %p374
      $region42: #{gnn_like_processor_forward.5} parent=5 // pred_check_branch
        %377 = sbr.rel (%p375) target = $region44
      $region43: #{gnn_like_processor_forward.5} parent=5 // pred_region
        // Predicated region
        $region45: #{gnn_like_processor_forward.5} parent=43 // pred_check
          %p378 = pneg %p52
        $region46: #{gnn_like_processor_forward.5} parent=43 // pred_check_branch
          %380 = sbr.rel (%p378) target = $region48
        $region47: #{gnn_like_processor_forward.5} parent=43 // pred_region
          %s381 = smul.u32 2, %s26
          %p382 = scmp.lt.s32.totalorder %s25, 1
          %s383 = scalar_select %p382, %s25, 1
          %p384 = scmp.lt.s32.totalorder %s381, 7
          %s385 = scalar_select %p384, %s381, 7
          %s386 = smul.addr %s383, 8
          %s387 = sadd.s32 %s385, %s386
          %s388 = smul.addr %s387, 4
          %s389 = scalar_lea.vmem %s0, %s388
          %s390 = smul.u32 2, %s26
        $region48: #{gnn_like_processor_forward.5} parent=43 // pred_fallthru
          _
        // Predicated region
        $region49: #{gnn_like_processor_forward.5} parent=43 // pred_check
          %p391 = pneg %p86
        $region50: #{gnn_like_processor_forward.5} parent=43 // pred_check_branch
          %393 = sbr.rel (%p391) target = $region52
        $region51: #{gnn_like_processor_forward.5} parent=43 // pred_region
          %s394 = ssub.s32 %s26, 1
          %p395 = scmp.gt.s32.totalorder %s394, 0
          %s396 = scalar_select %p395, %s394, 0
          %s397 = smul.u32 2, %s396
          %p398 = scmp.lt.s32.totalorder %s25, 1
          %s399 = scalar_select %p398, %s25, 1
          %p400 = scmp.lt.s32.totalorder %s397, 7
          %s401 = scalar_select %p400, %s397, 7
          %s402 = smul.addr %s399, 8
          %s403 = sadd.s32 %s401, %s402
          %s404 = smul.addr %s403, 4
          %s405 = scalar_lea.vmem %s1, %s404
          %s406 = ssub.s32 %s26, 1
          %p407 = scmp.gt.s32.totalorder %s406, 0
          %s408 = scalar_select %p407, %s406, 0
          %s409 = smul.u32 2, %s408
        $region52: #{gnn_like_processor_forward.5} parent=43 // pred_fallthru
          _
        // Predicated region
        $region53: #{gnn_like_processor_forward.5} parent=43 // pred_check
          %p410 = pneg %p120
        $region54: #{gnn_like_processor_forward.5} parent=43 // pred_check_branch
          %412 = sbr.rel (%p410) target = $region56
        $region55: #{gnn_like_processor_forward.5} parent=43 // pred_region
          %s413 = sadd.s32 %s26, 1
          %p414 = scmp.lt.s32.totalorder %s413, 3
          %s415 = scalar_select %p414, %s413, 3
          %s416 = smul.u32 2, %s415
          %p417 = scmp.lt.s32.totalorder %s25, 1
          %s418 = scalar_select %p417, %s25, 1
          %p419 = scmp.lt.s32.totalorder %s416, 7
          %s420 = scalar_select %p419, %s416, 7
          %s421 = smul.addr %s418, 8
          %s422 = sadd.s32 %s420, %s421
          %s423 = smul.addr %s422, 4
          %s424 = scalar_lea.vmem %s2, %s423
          %s425 = sadd.s32 %s26, 1
          %p426 = scmp.lt.s32.totalorder %s425, 3
          %s427 = scalar_select %p426, %s425, 3
          %s428 = smul.u32 2, %s427
        $region56: #{gnn_like_processor_forward.5} parent=43 // pred_fallthru
          _
        // Predicated region
        $region57: #{gnn_like_processor_forward.5} parent=43 // pred_check
          %p429 = pneg %p146
        $region58: #{gnn_like_processor_forward.5} parent=43 // pred_check_branch
          %431 = sbr.rel (%p429) target = $region60
        $region59: #{gnn_like_processor_forward.5} parent=43 // pred_region
          %p432 = scmp.lt.s32.totalorder %s25, 1
          %s433 = scalar_select %p432, %s25, 1
          %s434 = scalar_lea.vmem %s3, %s433
        $region60: #{gnn_like_processor_forward.5} parent=43 // pred_fallthru
          _
      $region44: #{gnn_like_processor_forward.5} parent=5 // pred_fallthru
        _
      %p435 = scmp.le.s32.totalorder 1, %s18
      %p436 = scmp.lt.s32.totalorder %s18, 9
      %p437 = pnand %p435, %p436
      %p438 = pneg %p437
      // Predicated region
      $region61: #{gnn_like_processor_forward.5} parent=5 // pred_check
        _
      $region62: #{gnn_like_processor_forward.5} parent=5 // pred_check_branch
        %440 = sbr.rel (%p437) target = $region64
      $region63: #{gnn_like_processor_forward.5} parent=5 // pred_region
        %s441 = ssub.s32 %s18, 1
        // Predicated region
        $region65: #{gnn_like_processor_forward.5} parent=63 // pred_check
          %p442 = pneg %p173
        $region66: #{gnn_like_processor_forward.5} parent=63 // pred_check_branch
          %444 = sbr.rel (%p442) target = $region68
        $region67: #{gnn_like_processor_forward.5} parent=63 // pred_region
          %446 = dma.done [#allocation3], 5120
        $region68: #{gnn_like_processor_forward.5} parent=63 // pred_fallthru
          _
        %s447 = smul.u32 2, %s28
        %p448 = scmp.lt.s32.totalorder %s27, 1
        %s449 = scalar_select %p448, %s27, 1
        %p450 = scmp.lt.s32.totalorder %s447, 7
        %s451 = scalar_select %p450, %s447, 7
        %s452 = smul.addr %s449, 8
        %s453 = sadd.s32 %s451, %s452
        %s454 = smul.addr %s453, 4
        %s455 = scalar_lea.vmem %s0, %s454
        %p456 = pneg %p58
        %p457 = pneg %p55
        %s458 = ssub.s32 %s28, 1
        %p459 = scmp.gt.s32.totalorder %s458, 0
        %s460 = scalar_select %p459, %s458, 0
        %s461 = smul.u32 2, %s460
        %p462 = scmp.lt.s32.totalorder %s27, 1
        %s463 = scalar_select %p462, %s27, 1
        %p464 = scmp.lt.s32.totalorder %s461, 7
        %s465 = scalar_select %p464, %s461, 7
        %s466 = smul.addr %s463, 8
        %s467 = sadd.s32 %s465, %s466
        %s468 = smul.addr %s467, 4
        %s469 = scalar_lea.vmem %s1, %s468
        %p470 = pneg %p92
        %p471 = pneg %p89
        %s472 = sadd.s32 %s28, 1
        %p473 = scmp.lt.s32.totalorder %s472, 3
        %s474 = scalar_select %p473, %s472, 3
        %s475 = smul.u32 2, %s474
        %p476 = scmp.lt.s32.totalorder %s27, 1
        %s477 = scalar_select %p476, %s27, 1
        %p478 = scmp.lt.s32.totalorder %s475, 7
        %s479 = scalar_select %p478, %s475, 7
        %s480 = smul.addr %s477, 8
        %s481 = sadd.s32 %s479, %s480
        %s482 = smul.addr %s481, 4
        %s483 = scalar_lea.vmem %s2, %s482
        %p484 = pneg %p126
        %p485 = pneg %p123
        %p486 = scmp.lt.s32.totalorder %s27, 1
        %s487 = scalar_select %p486, %s27, 1
        %s488 = scalar_lea.vmem %s3, %s487
        %p489 = pneg %p152
        %p490 = pneg %p149
        %p491 = pneg %p173
        %p492 = pneg %p170
        %p493 = pneg %p194
        %p494 = pneg %p191
        %p495 = pneg %p215
        %p496 = pneg %p212
        %p497 = pneg %p236
        %p498 = pneg %p233
        %p499 = pneg %p257
        %p500 = pneg %p254
        %p501 = pneg %p278
        %p502 = pneg %p275
        %p503 = pneg %p299
        %p504 = pneg %p296
        %p505 = pneg %p327
        %p506 = pneg %p324
        %s507 = smul.u32 2, %s28
        %p508 = scmp.lt.s32.totalorder %s27, 1
        %s509 = scalar_select %p508, %s27, 1
        %p510 = scmp.lt.s32.totalorder %s507, 7
        %s511 = scalar_select %p510, %s507, 7
        %s512 = smul.addr %s509, 8
        %s513 = sadd.s32 %s511, %s512
        %s514 = smul.addr %s513, 4
        %s515 = scalar_lea.vmem %s11, %s514
        %s516 = smul.u32 2, %s28
        %p517 = scmp.lt.s32.totalorder %s27, 1
        %s518 = scalar_select %p517, %s27, 1
        %p519 = scmp.lt.s32.totalorder %s516, 7
        %s520 = scalar_select %p519, %s516, 7
        %s521 = smul.addr %s518, 8
        %s522 = sadd.s32 %s520, %s521
        %s523 = smul.addr %s522, 4
        %s524 = scalar_lea.vmem %s0, %s523
        %s525 = smul.u32 2, %s28
        %s526 = ssub.s32 %s28, 1
        %p527 = scmp.gt.s32.totalorder %s526, 0
        %s528 = scalar_select %p527, %s526, 0
        %s529 = smul.u32 2, %s528
        %p530 = scmp.lt.s32.totalorder %s27, 1
        %s531 = scalar_select %p530, %s27, 1
        %p532 = scmp.lt.s32.totalorder %s529, 7
        %s533 = scalar_select %p532, %s529, 7
        %s534 = smul.addr %s531, 8
        %s535 = sadd.s32 %s533, %s534
        %s536 = smul.addr %s535, 4
        %s537 = scalar_lea.vmem %s1, %s536
        %s538 = ssub.s32 %s28, 1
        %p539 = scmp.gt.s32.totalorder %s538, 0
        %s540 = scalar_select %p539, %s538, 0
        %s541 = smul.u32 2, %s540
        %s542 = sadd.s32 %s28, 1
        %p543 = scmp.lt.s32.totalorder %s542, 3
        %s544 = scalar_select %p543, %s542, 3
        %s545 = smul.u32 2, %s544
        %p546 = scmp.lt.s32.totalorder %s27, 1
        %s547 = scalar_select %p546, %s27, 1
        %p548 = scmp.lt.s32.totalorder %s545, 7
        %s549 = scalar_select %p548, %s545, 7
        %s550 = smul.addr %s547, 8
        %s551 = sadd.s32 %s549, %s550
        %s552 = smul.addr %s551, 4
        %s553 = scalar_lea.vmem %s2, %s552
        %s554 = sadd.s32 %s28, 1
        %p555 = scmp.lt.s32.totalorder %s554, 3
        %s556 = scalar_select %p555, %s554, 3
        %s557 = smul.u32 2, %s556
        %p558 = scmp.lt.s32.totalorder %s27, 1
        %s559 = scalar_select %p558, %s27, 1
        %s560 = scalar_lea.vmem %s3, %s559
        %s561 = smul.u32 2, %s28
        %p562 = scmp.lt.s32.totalorder %s27, 1
        %s563 = scalar_select %p562, %s27, 1
        %p564 = scmp.lt.s32.totalorder %s561, 7
        %s565 = scalar_select %p564, %s561, 7
        %s566 = smul.addr %s563, 8
        %s567 = sadd.s32 %s565, %s566
        %s568 = smul.addr %s567, 4
        %s569 = scalar_lea.vmem %s11, %s568
        %s570 = smul.u32 2, %s28
        %v571 = vld [vmem:[%s524] sm:$0xf]
        %v572 = vld [vmem:[%s524 + $0x4] sm:$0xf]
        %p573 = scmp.eq.s32.totalorder %s28, 0
        %v575 = vpack.i.b16 %v571, %v571
        %v577 = vperm.slane %v575, 0
        %v578 = vld [vmem:[%s537 + $0x4] sm:$0x8]
        %s579 = scalar_select %p573, 1, 0
        %v580 = vstv %s579
        %vm581 = vcmp.eq.s32.totalorder %v580, 1
        %v583 = vunpack.c.l.b16 %v578
        %v584 = vpack.c.b16 %v583, %v583
        %v585 = vrot.slane %v584, 3
        %v587 = vsel %vm581, %v577, %v585
        %p588 = scmp.eq.s32.totalorder %s28, 3
        %v590 = vshrl.u32 %v572, 16
        %v591 = vpack.i.b16 %v590, %v590
        %v593 = vperm.slane %v591, 3
        %v594 = vld [vmem:[%s553] sm:$0x1]
        %s595 = scalar_select %p588, 1, 0
        %v596 = vstv %s595
        %vm597 = vcmp.eq.s32.totalorder %v596, 1
        %v598 = vsel %vm597, %v593, %v594
        %v601 = vunpack.c.l.b16 %v571
        %v602 = vunpack.c.l.b16 %v572
        %v603 = vpack.c.b16 %v602, %v601
        %v604 = vrot.slane %v603, 7
        %v606 = vrot.slane %v598, 7
        %vm607 = vcmask 1040384
        %v610 = vsel %vm607, %v587, %v604
        %v613 = vsel %vm607, %v604, %v606
        %vm614 = vsmask.f32 7424
        %v615 = vshrl.u32 %v610, 16
        %v617 = vshll.u32 %v610, 16
        %v619 = vrot.slane %v617, 1
        %v620 = vor.u32 %v615, %v619
        %v621 = vshll.u32 %v613, 16
        %v623 = vrot.slane %v621, 1
        %v624 = vsel %vm614, %v620, %v623
        %vm628 = vcmask 1046528
        %v629 = vrot.slane %v610, 1
        %v630 = vrot.slane %v613, 1
        %v631 = vsel %vm628, %v629, %v630
        %vm633 = vsmask.f32 6400
        %v634 = vrot.slane %v615, 1
        %v635 = vrot.slane %v617, 2
        %v636 = vor.u32 %v634, %v635
        %v637 = vshrl.u32 %v613, 16
        %v639 = vrot.slane %v637, 1
        %v640 = vrot.slane %v621, 2
        %v641 = vor.u32 %v639, %v640
        %v642 = vsel %vm633, %v636, %v641
        %vm644 = vcmask 1045504
        %v645 = vrot.slane %v610, 2
        %v646 = vrot.slane %v613, 2
        %v647 = vsel %vm644, %v645, %v646
        %v649 = vld [vmem:[#allocation2] sm:$0xf]
        %v650 = vld [vmem:[#allocation2 + $0x4] sm:$0xf]
        %v651 = vld [vmem:[#allocation2 + $0x8] sm:$0xf]
        %v652 = vld [vmem:[#allocation2 + $0xc] sm:$0xf]
        %v653 = vld [vmem:[#allocation2 + $0x10] sm:$0xf]
        %v654 = vld [vmem:[#allocation2 + $0x14] sm:$0xf]
        %v655 = vld [vmem:[#allocation2 + $0x18] sm:$0xf]
        %v656 = vld [vmem:[#allocation2 + $0x1c] sm:$0xf]
        %v657 = vld [vmem:[#allocation2 + $0x20] sm:$0xf]
        %v658 = vld [vmem:[#allocation2 + $0x24] sm:$0xf]
        %v659 = vld [vmem:[#allocation2 + $0x28] sm:$0xf]
        %v660 = vld [vmem:[#allocation2 + $0x2c] sm:$0xf]
        %v661 = vld [vmem:[#allocation2 + $0x30] sm:$0xf]
        %v662 = vld [vmem:[#allocation2 + $0x34] sm:$0xf]
        %v663 = vld [vmem:[#allocation2 + $0x38] sm:$0xf]
        %v664 = vld [vmem:[#allocation2 + $0x3c] sm:$0xf]
        %v665 = vld [vmem:[#allocation2 + $0x40] sm:$0xf]
        %v666 = vld [vmem:[#allocation2 + $0x44] sm:$0xf]
        %v667 = vld [vmem:[#allocation2 + $0x48] sm:$0xf]
        %v668 = vld [vmem:[#allocation2 + $0x4c] sm:$0xf]
        %v669 = vld [vmem:[#allocation2 + $0x50] sm:$0xf]
        %v670 = vld [vmem:[#allocation2 + $0x54] sm:$0xf]
        %v671 = vld [vmem:[#allocation2 + $0x58] sm:$0xf]
        %v672 = vld [vmem:[#allocation2 + $0x5c] sm:$0xf]
        %v673 = vld [vmem:[#allocation2 + $0x60] sm:$0xf]
        %v674 = vld [vmem:[#allocation2 + $0x64] sm:$0xf]
        %v675 = vld [vmem:[#allocation2 + $0x68] sm:$0xf]
        %v676 = vld [vmem:[#allocation2 + $0x6c] sm:$0xf]
        %v677 = vld [vmem:[#allocation2 + $0x70] sm:$0xf]
        %v678 = vld [vmem:[#allocation2 + $0x74] sm:$0xf]
        %v679 = vld [vmem:[#allocation2 + $0x78] sm:$0xf]
        %v680 = vld [vmem:[#allocation2 + $0x7c] sm:$0xf]
        %v681 = vld [vmem:[#allocation2 + $0x80] sm:$0xf]
        %v682 = vld [vmem:[#allocation2 + $0x84] sm:$0xf]
        %v683 = vld [vmem:[#allocation2 + $0x88] sm:$0xf]
        %v684 = vld [vmem:[#allocation2 + $0x8c] sm:$0xf]
        %v685 = vld [vmem:[#allocation2 + $0x90] sm:$0xf]
        %v686 = vld [vmem:[#allocation2 + $0x94] sm:$0xf]
        %v687 = vld [vmem:[#allocation2 + $0x98] sm:$0xf]
        %v688 = vld [vmem:[#allocation2 + $0x9c] sm:$0xf]
        %v689 = vld [vmem:[#allocation2 + $0xa0] sm:$0xf]
        %v690 = vld [vmem:[#allocation2 + $0xa4] sm:$0xf]
        %v691 = vld [vmem:[#allocation2 + $0xa8] sm:$0xf]
        %v692 = vld [vmem:[#allocation2 + $0xac] sm:$0xf]
        %v693 = vld [vmem:[#allocation2 + $0xb0] sm:$0xf]
        %v694 = vld [vmem:[#allocation2 + $0xb4] sm:$0xf]
        %v695 = vld [vmem:[#allocation2 + $0xb8] sm:$0xf]
        %v696 = vld [vmem:[#allocation2 + $0xbc] sm:$0xf]
        %v697 = vld [vmem:[#allocation2 + $0xc0] sm:$0xf]
        %v698 = vld [vmem:[#allocation2 + $0xc4] sm:$0xf]
        %v699 = vld [vmem:[#allocation2 + $0xc8] sm:$0xf]
        %v700 = vld [vmem:[#allocation2 + $0xcc] sm:$0xf]
        %v701 = vld [vmem:[#allocation2 + $0xd0] sm:$0xf]
        %v702 = vld [vmem:[#allocation2 + $0xd4] sm:$0xf]
        %v703 = vld [vmem:[#allocation2 + $0xd8] sm:$0xf]
        %v704 = vld [vmem:[#allocation2 + $0xdc] sm:$0xf]
        %v705 = vld [vmem:[#allocation2 + $0xe0] sm:$0xf]
        %v706 = vld [vmem:[#allocation2 + $0xe4] sm:$0xf]
        %v707 = vld [vmem:[#allocation2 + $0xe8] sm:$0xf]
        %v708 = vld [vmem:[#allocation2 + $0xec] sm:$0xf]
        %v709 = vld [vmem:[#allocation2 + $0xf0] sm:$0xf]
        %v710 = vld [vmem:[#allocation2 + $0xf4] sm:$0xf]
        %v711 = vld [vmem:[#allocation2 + $0xf8] sm:$0xf]
        %v712 = vld [vmem:[#allocation2 + $0xfc] sm:$0xf]
        %v713 = vld [vmem:[#allocation2 + $0x100] sm:$0xf]
        %v714 = vld [vmem:[#allocation2 + $0x104] sm:$0xf]
        %v715 = vld [vmem:[#allocation2 + $0x108] sm:$0xf]
        %v716 = vld [vmem:[#allocation2 + $0x10c] sm:$0xf]
        %v717 = vld [vmem:[#allocation2 + $0x110] sm:$0xf]
        %v718 = vld [vmem:[#allocation2 + $0x114] sm:$0xf]
        %v719 = vld [vmem:[#allocation2 + $0x118] sm:$0xf]
        %v720 = vld [vmem:[#allocation2 + $0x11c] sm:$0xf]
        %v721 = vld [vmem:[#allocation2 + $0x120] sm:$0xf]
        %v722 = vld [vmem:[#allocation2 + $0x124] sm:$0xf]
        %v723 = vld [vmem:[#allocation2 + $0x128] sm:$0xf]
        %v724 = vld [vmem:[#allocation2 + $0x12c] sm:$0xf]
        %v725 = vld [vmem:[#allocation2 + $0x130] sm:$0xf]
        %v726 = vld [vmem:[#allocation2 + $0x134] sm:$0xf]
        %v727 = vld [vmem:[#allocation2 + $0x138] sm:$0xf]
        %v728 = vld [vmem:[#allocation2 + $0x13c] sm:$0xf]
        %v729 = vld [vmem:[%s5] sm:$0x1]
        %v731 = vperm.slane %v729, 0
        %v813 = vunpack.c.l.b16 %v649
        %v814 = vunpack.c.l.b16 %v650
        %v815 = vunpack.c.l.b16 %v651
        %v816 = vunpack.c.l.b16 %v652
        %v817 = vunpack.c.l.b16 %v653
        %v818 = vunpack.c.l.b16 %v654
        %v819 = vunpack.c.l.b16 %v655
        %v820 = vunpack.c.l.b16 %v656
        %v821 = vunpack.c.l.b16 %v657
        %v822 = vunpack.c.l.b16 %v658
        %v823 = vunpack.c.l.b16 %v659
        %v824 = vunpack.c.l.b16 %v660
        %v825 = vunpack.c.l.b16 %v661
        %v826 = vunpack.c.l.b16 %v662
        %v827 = vunpack.c.l.b16 %v663
        %v828 = vunpack.c.l.b16 %v664
        %v829 = vunpack.c.l.b16 %v665
        %v830 = vunpack.c.l.b16 %v666
        %v831 = vunpack.c.l.b16 %v667
        %v832 = vunpack.c.l.b16 %v668
        %v833 = vunpack.c.l.b16 %v669
        %v834 = vunpack.c.l.b16 %v670
        %v835 = vunpack.c.l.b16 %v671
        %v836 = vunpack.c.l.b16 %v672
        %v837 = vunpack.c.l.b16 %v673
        %v838 = vunpack.c.l.b16 %v674
        %v839 = vunpack.c.l.b16 %v675
        %v840 = vunpack.c.l.b16 %v676
        %v841 = vunpack.c.l.b16 %v677
        %v842 = vunpack.c.l.b16 %v678
        %v843 = vunpack.c.l.b16 %v679
        %v844 = vunpack.c.l.b16 %v680
        %v845 = vunpack.c.l.b16 %v681
        %v846 = vunpack.c.l.b16 %v682
        %v847 = vunpack.c.l.b16 %v683
        %v848 = vunpack.c.l.b16 %v684
        %v849 = vunpack.c.l.b16 %v685
        %v850 = vunpack.c.l.b16 %v686
        %v851 = vunpack.c.l.b16 %v687
        %v852 = vunpack.c.l.b16 %v688
        %v853 = vunpack.c.l.b16 %v689
        %v854 = vunpack.c.l.b16 %v690
        %v855 = vunpack.c.l.b16 %v691
        %v856 = vunpack.c.l.b16 %v692
        %v857 = vunpack.c.l.b16 %v693
        %v858 = vunpack.c.l.b16 %v694
        %v859 = vunpack.c.l.b16 %v695
        %v860 = vunpack.c.l.b16 %v696
        %v861 = vunpack.c.l.b16 %v697
        %v862 = vunpack.c.l.b16 %v698
        %v863 = vunpack.c.l.b16 %v699
        %v864 = vunpack.c.l.b16 %v700
        %v865 = vunpack.c.l.b16 %v701
        %v866 = vunpack.c.l.b16 %v702
        %v867 = vunpack.c.l.b16 %v703
        %v868 = vunpack.c.l.b16 %v704
        %v869 = vunpack.c.l.b16 %v705
        %v870 = vunpack.c.l.b16 %v706
        %v871 = vunpack.c.l.b16 %v707
        %v872 = vunpack.c.l.b16 %v708
        %v873 = vunpack.c.l.b16 %v709
        %v874 = vunpack.c.l.b16 %v710
        %v875 = vunpack.c.l.b16 %v711
        %v876 = vunpack.c.l.b16 %v712
        %v877 = vunpack.c.l.b16 %v713
        %v878 = vunpack.c.l.b16 %v714
        %v879 = vunpack.c.l.b16 %v715
        %v880 = vunpack.c.l.b16 %v716
        %v881 = vunpack.c.l.b16 %v717
        %v882 = vunpack.c.l.b16 %v718
        %v883 = vunpack.c.l.b16 %v719
        %v884 = vunpack.c.l.b16 %v720
        %v885 = vunpack.c.l.b16 %v721
        %v886 = vunpack.c.l.b16 %v722
        %v887 = vunpack.c.l.b16 %v723
        %v888 = vunpack.c.l.b16 %v724
        %v889 = vunpack.c.l.b16 %v725
        %v890 = vunpack.c.l.b16 %v726
        %v891 = vunpack.c.l.b16 %v727
        %v892 = vunpack.c.l.b16 %v728
        %v893 = vpack.c.b16 %v814, %v813
        %v894 = vpack.c.b16 %v816, %v815
        %v895 = vpack.c.b16 %v818, %v817
        %v896 = vpack.c.b16 %v820, %v819
        %v897 = vpack.c.b16 %v822, %v821
        %v898 = vpack.c.b16 %v824, %v823
        %v899 = vpack.c.b16 %v826, %v825
        %v900 = vpack.c.b16 %v828, %v827
        %v901 = vpack.c.b16 %v830, %v829
        %v902 = vpack.c.b16 %v832, %v831
        %v903 = vpack.c.b16 %v834, %v833
        %v904 = vpack.c.b16 %v836, %v835
        %v905 = vpack.c.b16 %v838, %v837
        %v906 = vpack.c.b16 %v840, %v839
        %v907 = vpack.c.b16 %v842, %v841
        %v908 = vpack.c.b16 %v844, %v843
        %v909 = vpack.c.b16 %v846, %v845
        %v910 = vpack.c.b16 %v848, %v847
        %v911 = vpack.c.b16 %v850, %v849
        %v912 = vpack.c.b16 %v852, %v851
        %v913 = vpack.c.b16 %v854, %v853
        %v914 = vpack.c.b16 %v856, %v855
        %v915 = vpack.c.b16 %v858, %v857
        %v916 = vpack.c.b16 %v860, %v859
        %v917 = vpack.c.b16 %v862, %v861
        %v918 = vpack.c.b16 %v864, %v863
        %v919 = vpack.c.b16 %v866, %v865
        %v920 = vpack.c.b16 %v868, %v867
        %v921 = vpack.c.b16 %v870, %v869
        %v922 = vpack.c.b16 %v872, %v871
        %v923 = vpack.c.b16 %v874, %v873
        %v924 = vpack.c.b16 %v876, %v875
        %v925 = vpack.c.b16 %v878, %v877
        %v926 = vpack.c.b16 %v880, %v879
        %v927 = vpack.c.b16 %v882, %v881
        %v928 = vpack.c.b16 %v884, %v883
        %v929 = vpack.c.b16 %v886, %v885
        %v930 = vpack.c.b16 %v888, %v887
        %v931 = vpack.c.b16 %v890, %v889
        %v932 = vpack.c.b16 %v892, %v891
        %973 = vmatpush.bf16.msra.mxu0 %v900
        %974 = vmatpush.bf16.msra.mxu0 %v899
        %975 = vmatpush.bf16.msra.mxu0 %v898
        %976 = vmatpush.bf16.msra.mxu0 %v897
        %977 = vmatpush.bf16.msra.mxu0 %v896
        %978 = vmatpush.bf16.msra.mxu0 %v895
        %979 = vmatpush.bf16.msra.mxu0 %v894
        %980 = vmatpush.bf16.msra.mxu0 %v893
        %981 = vmatmul.bf16.gmra.mxu0 %v610
        %v982 = vpop.f32.mrf.mxu0
        %v983 = vadd.f32 %v731, %v982
        %v984 = vpop.f32.mrf.mxu0
        %v985 = vadd.f32 %v731, %v984
        %986 = vdwg.mxu0
        %987 = vmatpush.bf16.msra.mxu0 %v908
        %988 = vmatpush.bf16.msra.mxu0 %v907
        %989 = vmatpush.bf16.msra.mxu0 %v906
        %990 = vmatpush.bf16.msra.mxu0 %v905
        %991 = vmatpush.bf16.msra.mxu0 %v904
        %992 = vmatpush.bf16.msra.mxu0 %v903
        %993 = vmatpush.bf16.msra.mxu0 %v902
        %994 = vmatpush.bf16.msra.mxu0 %v901
        %995 = vmatmul.bf16.gmra.mxu0 %v624
        %v996 = vpop.f32.mrf.mxu0
        %v997 = vadd.f32 %v983, %v996
        %v998 = vpop.f32.mrf.mxu0
        %v999 = vadd.f32 %v985, %v998
        %1000 = vdwg.mxu0
        %1001 = vmatpush.bf16.msra.mxu0 %v916
        %1002 = vmatpush.bf16.msra.mxu0 %v915
        %1003 = vmatpush.bf16.msra.mxu0 %v914
        %1004 = vmatpush.bf16.msra.mxu0 %v913
        %1005 = vmatpush.bf16.msra.mxu0 %v912
        %1006 = vmatpush.bf16.msra.mxu0 %v911
        %1007 = vmatpush.bf16.msra.mxu0 %v910
        %1008 = vmatpush.bf16.msra.mxu0 %v909
        %1009 = vmatmul.bf16.gmra.mxu0 %v631
        %v1010 = vpop.f32.mrf.mxu0
        %v1011 = vadd.f32 %v997, %v1010
        %v1012 = vpop.f32.mrf.mxu0
        %v1013 = vadd.f32 %v999, %v1012
        %1014 = vdwg.mxu0
        %1015 = vmatpush.bf16.msra.mxu0 %v924
        %1016 = vmatpush.bf16.msra.mxu0 %v923
        %1017 = vmatpush.bf16.msra.mxu0 %v922
        %1018 = vmatpush.bf16.msra.mxu0 %v921
        %1019 = vmatpush.bf16.msra.mxu0 %v920
        %1020 = vmatpush.bf16.msra.mxu0 %v919
        %1021 = vmatpush.bf16.msra.mxu0 %v918
        %1022 = vmatpush.bf16.msra.mxu0 %v917
        %1023 = vmatmul.bf16.gmra.mxu0 %v642
        %v1024 = vpop.f32.mrf.mxu0
        %v1025 = vadd.f32 %v1011, %v1024
        %v1026 = vpop.f32.mrf.mxu0
        %v1027 = vadd.f32 %v1013, %v1026
        %1028 = vdwg.mxu0
        %1029 = vmatpush.bf16.msra.mxu0 %v932
        %1030 = vmatpush.bf16.msra.mxu0 %v931
        %1031 = vmatpush.bf16.msra.mxu0 %v930
        %1032 = vmatpush.bf16.msra.mxu0 %v929
        %1033 = vmatpush.bf16.msra.mxu0 %v928
        %1034 = vmatpush.bf16.msra.mxu0 %v927
        %1035 = vmatpush.bf16.msra.mxu0 %v926
        %1036 = vmatpush.bf16.msra.mxu0 %v925
        %1037 = vmatmul.bf16.gmra.mxu0 %v647
        %v1038 = vpop.f32.mrf.mxu0
        %v1039 = vadd.f32 %v1025, %v1038
        %v1040 = vpop.f32.mrf.mxu0
        %v1041 = vadd.f32 %v1027, %v1040
        %1042 = vdwg.mxu0
        %1043 = vadd.xlane.f32.xlu0 %v1039
        %v1044 = vpop.xlane.xlu0 %1043
        %1045 = vadd.xlane.f32.xlu0 %v1041
        %v1046 = vpop.xlane.xlu0 %1045
        %v1047 = vrcp.pop 128.0
        %v1048 = vmul.f32 128.0, %v1047
        %v1049 = vsub.f32 1.0, %v1048
        %v1050 = vmul.f32 %v1047, %v1049
        %v1051 = vadd.f32 %v1047, %v1050
        %vm1052 = vweird.f32 %v1047
        %v1053 = vsel %vm1052, %v1047, %v1051
        %v1054 = vmul.f32 %v1044, %v1053
        %v1055 = vmul.f32 %v1046, %v1053
        %v1056 = vmul.f32 %v1039, %v1039
        %v1057 = vmul.f32 %v1041, %v1041
        %1058 = vadd.xlane.f32.xlu0 %v1056
        %v1059 = vpop.xlane.xlu0 %1058
        %1060 = vadd.xlane.f32.xlu0 %v1057
        %v1061 = vpop.xlane.xlu0 %1060
        %v1062 = vmul.f32 %v1059, %v1053
        %v1063 = vmul.f32 %v1061, %v1053
        %v1064 = vmul.f32 %v1054, %v1054
        %v1065 = vmul.f32 %v1055, %v1055
        %v1066 = vsub.f32 %v1062, %v1064
        %v1067 = vsub.f32 %v1063, %v1065
        %v1068 = vmax.f32 %v1066, 0.0
        %v1069 = vmax.f32 %v1067, 0.0
        %v1070 = vsub.f32 %v1039, %v1054
        %v1071 = vsub.f32 %v1041, %v1055
        %v1072 = vadd.f32 %v1068, 1e-05
        %v1073 = vadd.f32 %v1069, 1e-05
        %v1074 = vrsqrt.pop %v1072
        %v1075 = vmul.f32 %v1074, %v1072
        %v1076 = vmul.f32 %v1075, %v1074
        %v1077 = vmul.f32 0.5, %v1076
        %v1078 = vsub.f32 1.5, %v1077
        %v1079 = vmul.f32 %v1074, %v1078
        %vm1080 = vweird.f32 %v1072
        %vm1081 = vweird.f32 %v1074
        %vm1082 = vmor %vm1080, %vm1081
        %v1083 = vsel %vm1082, %v1074, %v1079
        %v1084 = vrsqrt.pop %v1073
        %v1085 = vmul.f32 %v1084, %v1073
        %v1086 = vmul.f32 %v1085, %v1084
        %v1087 = vmul.f32 0.5, %v1086
        %v1088 = vsub.f32 1.5, %v1087
        %v1089 = vmul.f32 %v1084, %v1088
        %vm1090 = vweird.f32 %v1073
        %vm1091 = vweird.f32 %v1084
        %vm1092 = vmor %vm1090, %vm1091
        %v1093 = vsel %vm1092, %v1084, %v1089
        %v1094 = vmul.f32 %v1070, %v1083
        %v1095 = vmul.f32 %v1071, %v1093
        %v1096 = vld [vmem:[%s6] sm:$0x1]
        %v1098 = vperm.slane %v1096, 0
        %v1100 = vmul.f32 %v1094, %v1098
        %v1101 = vmul.f32 %v1095, %v1098
        %v1102 = vld [vmem:[%s7] sm:$0x1]
        %v1104 = vperm.slane %v1102, 0
        %v1106 = vadd.f32 %v1100, %v1104
        %v1107 = vadd.f32 %v1101, %v1104
        %v1108 = vmul.f32 %v1106, 0.5
        %v1109 = vmul.f32 %v1107, 0.5
        %v1110 = vmul.f32 %v1106, 0.044715
        %v1111 = vmul.f32 %v1107, 0.044715
        %v1112 = vmul.f32 %v1110, %v1106
        %v1113 = vmul.f32 %v1111, %v1107
        %v1114 = vmul.f32 %v1112, %v1106
        %v1115 = vmul.f32 %v1113, %v1107
        %v1116 = vadd.f32 %v1106, %v1114
        %v1117 = vadd.f32 %v1107, %v1115
        %v1118 = vmul.f32 %v1116, 0.7978846
        %v1119 = vmul.f32 %v1117, 0.7978846
        %v1120 = vtanh.pop %v1118
        %v1121 = vtanh.pop %v1119
        %v1122 = vadd.f32 %v1120, 1.0
        %v1123 = vadd.f32 %v1121, 1.0
        %v1124 = vmul.f32 %v1108, %v1122
        %v1125 = vmul.f32 %v1109, %v1123
        %v1126 = vpack.c.bf16 %v1125, %v1124
        %v1127 = vld [vmem:[%s8] sm:$0xf]
        %v1128 = vld [vmem:[%s8 + $0x4] sm:$0xf]
        %v1129 = vld [vmem:[%s8 + $0x8] sm:$0xf]
        %v1130 = vld [vmem:[%s8 + $0xc] sm:$0xf]
        %v1131 = vld [vmem:[%s8 + $0x10] sm:$0xf]
        %v1132 = vld [vmem:[%s8 + $0x14] sm:$0xf]
        %v1133 = vld [vmem:[%s8 + $0x18] sm:$0xf]
        %v1134 = vld [vmem:[%s8 + $0x1c] sm:$0xf]
        %v1135 = vld [vmem:[%s8 + $0x20] sm:$0xf]
        %v1136 = vld [vmem:[%s8 + $0x24] sm:$0xf]
        %v1137 = vld [vmem:[%s8 + $0x28] sm:$0xf]
        %v1138 = vld [vmem:[%s8 + $0x2c] sm:$0xf]
        %v1139 = vld [vmem:[%s8 + $0x30] sm:$0xf]
        %v1140 = vld [vmem:[%s8 + $0x34] sm:$0xf]
        %v1141 = vld [vmem:[%s8 + $0x38] sm:$0xf]
        %v1142 = vld [vmem:[%s8 + $0x3c] sm:$0xf]
        %v1143 = vld [vmem:[%s560] sm:$0x1]
        %v1145 = vperm.slane %v1143, 0
        %v1163 = vunpack.c.l.b16 %v1127
        %v1164 = vunpack.c.l.b16 %v1128
        %v1165 = vunpack.c.l.b16 %v1129
        %v1166 = vunpack.c.l.b16 %v1130
        %v1167 = vunpack.c.l.b16 %v1131
        %v1168 = vunpack.c.l.b16 %v1132
        %v1169 = vunpack.c.l.b16 %v1133
        %v1170 = vunpack.c.l.b16 %v1134
        %v1171 = vunpack.c.l.b16 %v1135
        %v1172 = vunpack.c.l.b16 %v1136
        %v1173 = vunpack.c.l.b16 %v1137
        %v1174 = vunpack.c.l.b16 %v1138
        %v1175 = vunpack.c.l.b16 %v1139
        %v1176 = vunpack.c.l.b16 %v1140
        %v1177 = vunpack.c.l.b16 %v1141
        %v1178 = vunpack.c.l.b16 %v1142
        %v1179 = vpack.c.b16 %v1164, %v1163
        %v1180 = vpack.c.b16 %v1166, %v1165
        %v1181 = vpack.c.b16 %v1168, %v1167
        %v1182 = vpack.c.b16 %v1170, %v1169
        %v1183 = vpack.c.b16 %v1172, %v1171
        %v1184 = vpack.c.b16 %v1174, %v1173
        %v1185 = vpack.c.b16 %v1176, %v1175
        %v1186 = vpack.c.b16 %v1178, %v1177
        %1195 = vmatpush.bf16.msra.mxu0 %v1186
        %1196 = vmatpush.bf16.msra.mxu0 %v1185
        %1197 = vmatpush.bf16.msra.mxu0 %v1184
        %1198 = vmatpush.bf16.msra.mxu0 %v1183
        %1199 = vmatpush.bf16.msra.mxu0 %v1182
        %1200 = vmatpush.bf16.msra.mxu0 %v1181
        %1201 = vmatpush.bf16.msra.mxu0 %v1180
        %1202 = vmatpush.bf16.msra.mxu0 %v1179
        %1203 = vmatmul.bf16.gmra.mxu0 %v1126
        %v1204 = vpop.f32.mrf.mxu0
        %v1205 = vadd.f32 %v1145, %v1204
        %v1206 = vpop.f32.mrf.mxu0
        %v1207 = vadd.f32 %v1145, %v1206
        %1208 = vdwg.mxu0
        %v1209 = vmul.f32 %v1205, 0.5
        %v1210 = vmul.f32 %v1207, 0.5
        %v1211 = vmul.f32 %v1205, 0.044715
        %v1212 = vmul.f32 %v1207, 0.044715
        %v1213 = vmul.f32 %v1211, %v1205
        %v1214 = vmul.f32 %v1212, %v1207
        %v1215 = vmul.f32 %v1213, %v1205
        %v1216 = vmul.f32 %v1214, %v1207
        %v1217 = vadd.f32 %v1205, %v1215
        %v1218 = vadd.f32 %v1207, %v1216
        %v1219 = vmul.f32 %v1217, 0.7978846
        %v1220 = vmul.f32 %v1218, 0.7978846
        %v1221 = vtanh.pop %v1219
        %v1222 = vtanh.pop %v1220
        %v1223 = vadd.f32 %v1221, 1.0
        %v1224 = vadd.f32 %v1222, 1.0
        %v1225 = vmul.f32 %v1209, %v1223
        %v1226 = vmul.f32 %v1210, %v1224
        %v1227 = vpack.c.bf16 %v1226, %v1225
        %v1228 = vld [vmem:[%s9] sm:$0xf]
        %v1229 = vld [vmem:[%s9 + $0x4] sm:$0xf]
        %v1230 = vld [vmem:[%s9 + $0x8] sm:$0xf]
        %v1231 = vld [vmem:[%s9 + $0xc] sm:$0xf]
        %v1232 = vld [vmem:[%s9 + $0x10] sm:$0xf]
        %v1233 = vld [vmem:[%s9 + $0x14] sm:$0xf]
        %v1234 = vld [vmem:[%s9 + $0x18] sm:$0xf]
        %v1235 = vld [vmem:[%s9 + $0x1c] sm:$0xf]
        %v1236 = vld [vmem:[%s9 + $0x20] sm:$0xf]
        %v1237 = vld [vmem:[%s9 + $0x24] sm:$0xf]
        %v1238 = vld [vmem:[%s9 + $0x28] sm:$0xf]
        %v1239 = vld [vmem:[%s9 + $0x2c] sm:$0xf]
        %v1240 = vld [vmem:[%s9 + $0x30] sm:$0xf]
        %v1241 = vld [vmem:[%s9 + $0x34] sm:$0xf]
        %v1242 = vld [vmem:[%s9 + $0x38] sm:$0xf]
        %v1243 = vld [vmem:[%s9 + $0x3c] sm:$0xf]
        %v1244 = vld [vmem:[%s10] sm:$0x1]
        %v1246 = vperm.slane %v1244, 0
        %v1264 = vunpack.c.l.b16 %v1228
        %v1265 = vunpack.c.l.b16 %v1229
        %v1266 = vunpack.c.l.b16 %v1230
        %v1267 = vunpack.c.l.b16 %v1231
        %v1268 = vunpack.c.l.b16 %v1232
        %v1269 = vunpack.c.l.b16 %v1233
        %v1270 = vunpack.c.l.b16 %v1234
        %v1271 = vunpack.c.l.b16 %v1235
        %v1272 = vunpack.c.l.b16 %v1236
        %v1273 = vunpack.c.l.b16 %v1237
        %v1274 = vunpack.c.l.b16 %v1238
        %v1275 = vunpack.c.l.b16 %v1239
        %v1276 = vunpack.c.l.b16 %v1240
        %v1277 = vunpack.c.l.b16 %v1241
        %v1278 = vunpack.c.l.b16 %v1242
        %v1279 = vunpack.c.l.b16 %v1243
        %v1280 = vpack.c.b16 %v1265, %v1264
        %v1281 = vpack.c.b16 %v1267, %v1266
        %v1282 = vpack.c.b16 %v1269, %v1268
        %v1283 = vpack.c.b16 %v1271, %v1270
        %v1284 = vpack.c.b16 %v1273, %v1272
        %v1285 = vpack.c.b16 %v1275, %v1274
        %v1286 = vpack.c.b16 %v1277, %v1276
        %v1287 = vpack.c.b16 %v1279, %v1278
        %1296 = vmatpush.bf16.msra.mxu0 %v1287
        %1297 = vmatpush.bf16.msra.mxu0 %v1286
        %1298 = vmatpush.bf16.msra.mxu0 %v1285
        %1299 = vmatpush.bf16.msra.mxu0 %v1284
        %1300 = vmatpush.bf16.msra.mxu0 %v1283
        %1301 = vmatpush.bf16.msra.mxu0 %v1282
        %1302 = vmatpush.bf16.msra.mxu0 %v1281
        %1303 = vmatpush.bf16.msra.mxu0 %v1280
        %1304 = vmatmul.bf16.gmra.mxu0 %v1227
        %v1305 = vpop.f32.mrf.mxu0
        %v1306 = vadd.f32 %v1246, %v1305
        %v1307 = vpop.f32.mrf.mxu0
        %v1308 = vadd.f32 %v1246, %v1307
        %1309 = vdwg.mxu0
        %v1310 = vunpack.c.l.bf16 %v571
        %v1311 = vunpack.c.l.bf16 %v572
        %v1312 = vadd.f32 %v1310, %v1306
        %v1313 = vadd.f32 %v1311, %v1308
        %v1314 = vpack.c.bf16 %v1312, %v1312
        %v1315 = vpack.c.bf16 %v1313, %v1313
        %1316 = vst [vmem:[%s569] sm:$0xf] %v1314
        %1317 = vst [vmem:[%s569 + $0x4] sm:$0xf] %v1315
        %s1318 = smul.u32 2, %s28
        %p1319 = scmp.lt.s32.totalorder %s27, 1
        %s1320 = scalar_select %p1319, %s27, 1
        %p1321 = scmp.lt.s32.totalorder %s1318, 7
        %s1322 = scalar_select %p1321, %s1318, 7
        %s1323 = smul.addr %s1320, 8
        %s1324 = sadd.s32 %s1322, %s1323
        %s1325 = smul.addr %s1324, 4
        %s1326 = scalar_lea.vmem %s11, %s1325
        // Predicated region
        $region69: #{gnn_like_processor_forward.5} parent=63 // pred_check
          %p1327 = pneg %p324
        $region70: #{gnn_like_processor_forward.5} parent=63 // pred_check_branch
          %1329 = sbr.rel (%p1327) target = $region72
        $region71: #{gnn_like_processor_forward.5} parent=63 // pred_region
          %s1330 = smul.u32 2, %s28
        $region72: #{gnn_like_processor_forward.5} parent=63 // pred_fallthru
          _
      $region64: #{gnn_like_processor_forward.5} parent=5 // pred_fallthru
        _
      %p1331 = scmp.le.s32.totalorder 2, %s18
      // Predicated region
      $region73: #{gnn_like_processor_forward.5} parent=5 // pred_check
        %p1332 = pneg %p1331
      $region74: #{gnn_like_processor_forward.5} parent=5 // pred_check_branch
        %1334 = sbr.rel (%p1332) target = $region76
      $region75: #{gnn_like_processor_forward.5} parent=5 // pred_region
        %s1335 = ssub.s32 %s18, 2
        // Predicated region
        $region77: #{gnn_like_processor_forward.5} parent=75 // pred_check
          %p1336 = pneg %p330
        $region78: #{gnn_like_processor_forward.5} parent=75 // pred_check_branch
          %1338 = sbr.rel (%p1336) target = $region80
        $region79: #{gnn_like_processor_forward.5} parent=75 // pred_region
          %s1339 = smul.u32 2, %s30
          %p1340 = scmp.lt.s32.totalorder %s29, 1
          %s1341 = scalar_select %p1340, %s29, 1
          %p1342 = scmp.lt.s32.totalorder %s1339, 7
          %s1343 = scalar_select %p1342, %s1339, 7
          %s1344 = smul.addr %s1341, 8
          %s1345 = sadd.s32 %s1343, %s1344
          %s1346 = smul.addr %s1345, 4
          %s1347 = scalar_lea.vmem %s11, %s1346
        $region80: #{gnn_like_processor_forward.5} parent=75 // pred_fallthru
          _
      $region76: #{gnn_like_processor_forward.5} parent=5 // pred_fallthru
        _
    $region6: #{gnn_like_processor_forward.5} parent=1 // loop_footer
      %s22 = sadd.s32 1, %s18
    $region7: #{gnn_like_processor_forward.5} parent=1 // loop_footer_branch
      %17 = sbr.rel target = $region3
    $region8: #{gnn_like_processor_forward.5} parent=1 // loop_exit
      _
    %1348 = vsyncpa [#allocation3], 1
    %s1349 = scalar_lea.sflag [#allocation3], 1
    %1350 = vsyncpa %s1349, 1

// kernel: gnn_like_processor_forward.6
$region0: #{gnn_like_processor_forward.6}
  #allocation0 [shape = 'u32[]', space=smem, size = 0x4, offset = 0x4, fixed_abs, tag = 'smem constant byte address 0x4 - core index']
  #allocation1 [shape = 'u32[72,128]{1,0:T(1,128)}', space=vmem, size = 0x9000, scoped, tag = 'internal scratch']
  %s0 = inlined_call_operand.vmem [shape: bf16[2,64,128], index: 0, kind: input, shape index: {}, may-alias: {0,1,2}]
  %s1 = inlined_call_operand.vmem [shape: bf16[2,64,128], index: 1, kind: input, shape index: {}, may-alias: {0,1,2}]
  %s2 = inlined_call_operand.vmem [shape: bf16[2,64,128], index: 2, kind: input, shape index: {}, may-alias: {0,1,2}]
  %s3 = inlined_call_operand.vmem [shape: f32[2,1,128], index: 3, kind: input, shape index: {}]
  %s4 = inlined_call_operand.hbm [shape: bf16[640,128], index: 4, kind: input, shape index: {}]
  %s5 = inlined_call_operand.vmem [shape: f32[1,128], index: 5, kind: input, shape index: {}]
  %s6 = inlined_call_operand.vmem [shape: f32[1,128], index: 6, kind: input, shape index: {}]
  %s7 = inlined_call_operand.vmem [shape: f32[1,128], index: 7, kind: input, shape index: {}]
  %s8 = inlined_call_operand.hbm [shape: bf16[128,128], index: 8, kind: input, shape index: {}]
  %s9 = inlined_call_operand.hbm [shape: bf16[128,128], index: 9, kind: input, shape index: {}]
  %s10 = inlined_call_operand.vmem [shape: f32[1,128], index: 10, kind: input, shape index: {}]
  %s11 = inlined_call_operand.vmem [shape: bf16[2,64,128], index: 11, kind: output, shape index: {}]
  %s12 = sld [smem:[#allocation0]]
  $region89: #{gnn_like_processor_forward.6} parent=0
    _
  %s14 = ssub.s32 1, %s12
  %s15 = scalar_select 0, %s14, %s12
  $region1: #{gnn_like_processor_forward.6} parent=0
    #allocation2 [shape = 'u8[163840]{0}', space=vmem, size = 0x28000, scoped, tag = 'input window, operand 4, single buffered']
    #allocation3 [shape = 's32[2]{0}', space=sflag, size = 0x8, scoped, tag = 'scoped memory for gnn_like_processor_forward.6']
    #allocation4 [shape = 'u8[32768]{0}', space=vmem, size = 0x8000, scoped, tag = 'input window, operand 8, single buffered']
    #allocation5 [shape = 's32[1]{0}', space=sflag, size = 0x4, scoped, tag = 'scoped memory for gnn_like_processor_forward.6']
    #allocation6 [shape = 'u8[32768]{0}', space=vmem, size = 0x8000, scoped, tag = 'input window, operand 9, single buffered']
    %16 = vsyncpa [#allocation3], 0
    %17 = vsyncpa [#allocation5], 0
    loop: start=0, step=1, limit=10
    $region2: #{gnn_like_processor_forward.6} parent=1 // loop_pre_header
      _
    $region3: #{gnn_like_processor_forward.6} parent=1 // loop_header
      %s19 = sphi 0, %s23
      %p20 = scmp.ge.s32.totalorder %s19, 10
      %s26 = sphi 0, %s38
      %s27 = sphi 0, %s34
      %s28 = sphi 0, %s26
      %s29 = sphi 0, %s27
      %s30 = sphi 0, %s28
      %s31 = sphi 0, %s29
      %s43 = sphi 0, %s45
      %s46 = sphi 0, %s43
      %s47 = sphi 0, %s46
      %s63 = sphi 0, %s47
      %s77 = sphi 0, %s79
      %s80 = sphi 0, %s77
      %s81 = sphi 0, %s80
      %s97 = sphi 0, %s81
      %s111 = sphi 0, %s113
      %s114 = sphi 0, %s111
      %s115 = sphi 0, %s114
      %s131 = sphi 0, %s115
      %s137 = sphi 0, %s139
      %s140 = sphi 0, %s137
      %s141 = sphi 0, %s140
      %s157 = sphi 0, %s141
      %s161 = sphi 0, %s161
      %s163 = sphi 0, %s161
      %s164 = sphi 0, %s163
      %s178 = sphi 0, %s164
      %s182 = sphi 0, %s182
      %s184 = sphi 0, %s182
      %s185 = sphi 0, %s184
      %s199 = sphi 0, %s185
      %s203 = sphi 0, %s203
      %s205 = sphi 0, %s203
      %s206 = sphi 0, %s205
      %s220 = sphi 0, %s206
      %s224 = sphi 0, %s224
      %s226 = sphi 0, %s224
      %s227 = sphi 0, %s226
      %s241 = sphi 0, %s227
      %s245 = sphi 0, %s245
      %s247 = sphi 0, %s245
      %s248 = sphi 0, %s247
      %s262 = sphi 0, %s248
      %s266 = sphi 0, %s266
      %s268 = sphi 0, %s266
      %s269 = sphi 0, %s268
      %s283 = sphi 0, %s269
      %s287 = sphi 0, %s287
      %s289 = sphi 0, %s287
      %s290 = sphi 0, %s289
      %s304 = sphi 0, %s290
      %s312 = sphi 0, %s314
      %s315 = sphi 0, %s312
      %s316 = sphi 0, %s315
      %s332 = sphi 0, %s316
    $region4: #{gnn_like_processor_forward.6} parent=1 // loop_header_branch
      %22 = sbr.rel (%p20) target = $region8
    $region5: #{gnn_like_processor_forward.6} parent=1 // loop_body
      %s24 = ssub.s32 %s19, 1
      %s25 = ssub.s32 %s19, 2
      %s32 = sadd.s32 1, %s27
      %p33 = scmp.ge.s32.totalorder %s32, 4
      %s34 = scalar_select %p33, 0, %s32
      %s35 = sadd.s32 1, %s26
      %s36 = scalar_select %p33, %s35, %s26
      %p37 = scmp.ge.s32.totalorder %s36, 2
      %s38 = scalar_select %p37, 0, %s36
      %s39 = ssub.s32 %s26, %s38
      %s40 = ssub.s32 %s27, %s34
      %s41 = sor.u32 %s39, %s40
      %p42 = scmp.eq.s32.totalorder %s41, 0
      %s44 = sadd.s32 %s43, 1
      %s45 = scalar_select %p42, %s43, %s44
      %p48 = pneg %p42
      %p49 = scmp.eq.s32.totalorder %s19, 7
      %p50 = por %p48, %p49
      %p51 = scmp.ne.s32.totalorder %s43, %s46
      %p52 = scmp.eq.s32.totalorder %s19, 0
      %p53 = por %p51, %p52
      %p54 = scmp.ne.s32.totalorder %s43, %s46
      %p55 = scmp.eq.s32.totalorder %s24, 7
      %p56 = por %p54, %p55
      %p57 = scmp.ne.s32.totalorder %s46, %s47
      %p58 = scmp.eq.s32.totalorder %s24, 0
      %p59 = por %p57, %p58
      %p60 = scmp.ne.s32.totalorder %s46, %s47
      %p61 = scmp.eq.s32.totalorder %s25, 7
      %p62 = por %p60, %p61
      %p64 = scmp.ne.s32.totalorder %s47, %s63
      %p65 = scmp.eq.s32.totalorder %s25, 0
      %p66 = por %p64, %p65
      %s67 = ssub.s32 %s27, 1
      %p68 = scmp.gt.s32.totalorder %s67, 0
      %s69 = scalar_select %p68, %s67, 0
      %s70 = ssub.s32 %s34, 1
      %p71 = scmp.gt.s32.totalorder %s70, 0
      %s72 = scalar_select %p71, %s70, 0
      %s73 = ssub.s32 %s26, %s38
      %s74 = ssub.s32 %s69, %s72
      %s75 = sor.u32 %s73, %s74
      %p76 = scmp.eq.s32.totalorder %s75, 0
      %s78 = sadd.s32 %s77, 1
      %s79 = scalar_select %p76, %s77, %s78
      %p82 = pneg %p76
      %p83 = scmp.eq.s32.totalorder %s19, 7
      %p84 = por %p82, %p83
      %p85 = scmp.ne.s32.totalorder %s77, %s80
      %p86 = scmp.eq.s32.totalorder %s19, 0
      %p87 = por %p85, %p86
      %p88 = scmp.ne.s32.totalorder %s77, %s80
      %p89 = scmp.eq.s32.totalorder %s24, 7
      %p90 = por %p88, %p89
      %p91 = scmp.ne.s32.totalorder %s80, %s81
      %p92 = scmp.eq.s32.totalorder %s24, 0
      %p93 = por %p91, %p92
      %p94 = scmp.ne.s32.totalorder %s80, %s81
      %p95 = scmp.eq.s32.totalorder %s25, 7
      %p96 = por %p94, %p95
      %p98 = scmp.ne.s32.totalorder %s81, %s97
      %p99 = scmp.eq.s32.totalorder %s25, 0
      %p100 = por %p98, %p99
      %s101 = sadd.s32 %s27, 1
      %p102 = scmp.lt.s32.totalorder %s101, 3
      %s103 = scalar_select %p102, %s101, 3
      %s104 = sadd.s32 %s34, 1
      %p105 = scmp.lt.s32.totalorder %s104, 3
      %s106 = scalar_select %p105, %s104, 3
      %s107 = ssub.s32 %s26, %s38
      %s108 = ssub.s32 %s103, %s106
      %s109 = sor.u32 %s107, %s108
      %p110 = scmp.eq.s32.totalorder %s109, 0
      %s112 = sadd.s32 %s111, 1
      %s113 = scalar_select %p110, %s111, %s112
      %p116 = pneg %p110
      %p117 = scmp.eq.s32.totalorder %s19, 7
      %p118 = por %p116, %p117
      %p119 = scmp.ne.s32.totalorder %s111, %s114
      %p120 = scmp.eq.s32.totalorder %s19, 0
      %p121 = por %p119, %p120
      %p122 = scmp.ne.s32.totalorder %s111, %s114
      %p123 = scmp.eq.s32.totalorder %s24, 7
      %p124 = por %p122, %p123
      %p125 = scmp.ne.s32.totalorder %s114, %s115
      %p126 = scmp.eq.s32.totalorder %s24, 0
      %p127 = por %p125, %p126
      %p128 = scmp.ne.s32.totalorder %s114, %s115
      %p129 = scmp.eq.s32.totalorder %s25, 7
      %p130 = por %p128, %p129
      %p132 = scmp.ne.s32.totalorder %s115, %s131
      %p133 = scmp.eq.s32.totalorder %s25, 0
      %p134 = por %p132, %p133
      %s135 = ssub.s32 %s26, %s38
      %p136 = scmp.eq.s32.totalorder %s135, 0
      %s138 = sadd.s32 %s137, 1
      %s139 = scalar_select %p136, %s137, %s138
      %p142 = pneg %p136
      %p143 = scmp.eq.s32.totalorder %s19, 7
      %p144 = por %p142, %p143
      %p145 = scmp.ne.s32.totalorder %s137, %s140
      %p146 = scmp.eq.s32.totalorder %s19, 0
      %p147 = por %p145, %p146
      %p148 = scmp.ne.s32.totalorder %s137, %s140
      %p149 = scmp.eq.s32.totalorder %s24, 7
      %p150 = por %p148, %p149
      %p151 = scmp.ne.s32.totalorder %s140, %s141
      %p152 = scmp.eq.s32.totalorder %s24, 0
      %p153 = por %p151, %p152
      %p154 = scmp.ne.s32.totalorder %s140, %s141
      %p155 = scmp.eq.s32.totalorder %s25, 7
      %p156 = por %p154, %p155
      %p158 = scmp.ne.s32.totalorder %s141, %s157
      %p159 = scmp.eq.s32.totalorder %s25, 0
      %p160 = por %p158, %p159
      %s162 = sadd.s32 %s161, 1
      %p165 = scmp.eq.s32.totalorder %s19, 7
      %p166 = scmp.ne.s32.totalorder %s161, %s163
      %p167 = scmp.eq.s32.totalorder %s19, 0
      %p168 = por %p166, %p167
      %p169 = scmp.ne.s32.totalorder %s161, %s163
      %p170 = scmp.eq.s32.totalorder %s24, 7
      %p171 = por %p169, %p170
      %p172 = scmp.ne.s32.totalorder %s163, %s164
      %p173 = scmp.eq.s32.totalorder %s24, 0
      %p174 = por %p172, %p173
      %p175 = scmp.ne.s32.totalorder %s163, %s164
      %p176 = scmp.eq.s32.totalorder %s25, 7
      %p177 = por %p175, %p176
      %p179 = scmp.ne.s32.totalorder %s164, %s178
      %p180 = scmp.eq.s32.totalorder %s25, 0
      %p181 = por %p179, %p180
      %s183 = sadd.s32 %s182, 1
      %p186 = scmp.eq.s32.totalorder %s19, 7
      %p187 = scmp.ne.s32.totalorder %s182, %s184
      %p188 = scmp.eq.s32.totalorder %s19, 0
      %p189 = por %p187, %p188
      %p190 = scmp.ne.s32.totalorder %s182, %s184
      %p191 = scmp.eq.s32.totalorder %s24, 7
      %p192 = por %p190, %p191
      %p193 = scmp.ne.s32.totalorder %s184, %s185
      %p194 = scmp.eq.s32.totalorder %s24, 0
      %p195 = por %p193, %p194
      %p196 = scmp.ne.s32.totalorder %s184, %s185
      %p197 = scmp.eq.s32.totalorder %s25, 7
      %p198 = por %p196, %p197
      %p200 = scmp.ne.s32.totalorder %s185, %s199
      %p201 = scmp.eq.s32.totalorder %s25, 0
      %p202 = por %p200, %p201
      %s204 = sadd.s32 %s203, 1
      %p207 = scmp.eq.s32.totalorder %s19, 7
      %p208 = scmp.ne.s32.totalorder %s203, %s205
      %p209 = scmp.eq.s32.totalorder %s19, 0
      %p210 = por %p208, %p209
      %p211 = scmp.ne.s32.totalorder %s203, %s205
      %p212 = scmp.eq.s32.totalorder %s24, 7
      %p213 = por %p211, %p212
      %p214 = scmp.ne.s32.totalorder %s205, %s206
      %p215 = scmp.eq.s32.totalorder %s24, 0
      %p216 = por %p214, %p215
      %p217 = scmp.ne.s32.totalorder %s205, %s206
      %p218 = scmp.eq.s32.totalorder %s25, 7
      %p219 = por %p217, %p218
      %p221 = scmp.ne.s32.totalorder %s206, %s220
      %p222 = scmp.eq.s32.totalorder %s25, 0
      %p223 = por %p221, %p222
      %s225 = sadd.s32 %s224, 1
      %p228 = scmp.eq.s32.totalorder %s19, 7
      %p229 = scmp.ne.s32.totalorder %s224, %s226
      %p230 = scmp.eq.s32.totalorder %s19, 0
      %p231 = por %p229, %p230
      %p232 = scmp.ne.s32.totalorder %s224, %s226
      %p233 = scmp.eq.s32.totalorder %s24, 7
      %p234 = por %p232, %p233
      %p235 = scmp.ne.s32.totalorder %s226, %s227
      %p236 = scmp.eq.s32.totalorder %s24, 0
      %p237 = por %p235, %p236
      %p238 = scmp.ne.s32.totalorder %s226, %s227
      %p239 = scmp.eq.s32.totalorder %s25, 7
      %p240 = por %p238, %p239
      %p242 = scmp.ne.s32.totalorder %s227, %s241
      %p243 = scmp.eq.s32.totalorder %s25, 0
      %p244 = por %p242, %p243
      %s246 = sadd.s32 %s245, 1
      %p249 = scmp.eq.s32.totalorder %s19, 7
      %p250 = scmp.ne.s32.totalorder %s245, %s247
      %p251 = scmp.eq.s32.totalorder %s19, 0
      %p252 = por %p250, %p251
      %p253 = scmp.ne.s32.totalorder %s245, %s247
      %p254 = scmp.eq.s32.totalorder %s24, 7
      %p255 = por %p253, %p254
      %p256 = scmp.ne.s32.totalorder %s247, %s248
      %p257 = scmp.eq.s32.totalorder %s24, 0
      %p258 = por %p256, %p257
      %p259 = scmp.ne.s32.totalorder %s247, %s248
      %p260 = scmp.eq.s32.totalorder %s25, 7
      %p261 = por %p259, %p260
      %p263 = scmp.ne.s32.totalorder %s248, %s262
      %p264 = scmp.eq.s32.totalorder %s25, 0
      %p265 = por %p263, %p264
      %s267 = sadd.s32 %s266, 1
      %p270 = scmp.eq.s32.totalorder %s19, 7
      %p271 = scmp.ne.s32.totalorder %s266, %s268
      %p272 = scmp.eq.s32.totalorder %s19, 0
      %p273 = por %p271, %p272
      %p274 = scmp.ne.s32.totalorder %s266, %s268
      %p275 = scmp.eq.s32.totalorder %s24, 7
      %p276 = por %p274, %p275
      %p277 = scmp.ne.s32.totalorder %s268, %s269
      %p278 = scmp.eq.s32.totalorder %s24, 0
      %p279 = por %p277, %p278
      %p280 = scmp.ne.s32.totalorder %s268, %s269
      %p281 = scmp.eq.s32.totalorder %s25, 7
      %p282 = por %p280, %p281
      %p284 = scmp.ne.s32.totalorder %s269, %s283
      %p285 = scmp.eq.s32.totalorder %s25, 0
      %p286 = por %p284, %p285
      %s288 = sadd.s32 %s287, 1
      %p291 = scmp.eq.s32.totalorder %s19, 7
      %p292 = scmp.ne.s32.totalorder %s287, %s289
      %p293 = scmp.eq.s32.totalorder %s19, 0
      %p294 = por %p292, %p293
      %p295 = scmp.ne.s32.totalorder %s287, %s289
      %p296 = scmp.eq.s32.totalorder %s24, 7
      %p297 = por %p295, %p296
      %p298 = scmp.ne.s32.totalorder %s289, %s290
      %p299 = scmp.eq.s32.totalorder %s24, 0
      %p300 = por %p298, %p299
      %p301 = scmp.ne.s32.totalorder %s289, %s290
      %p302 = scmp.eq.s32.totalorder %s25, 7
      %p303 = por %p301, %p302
      %p305 = scmp.ne.s32.totalorder %s290, %s304
      %p306 = scmp.eq.s32.totalorder %s25, 0
      %p307 = por %p305, %p306
      %s308 = ssub.s32 %s26, %s38
      %s309 = ssub.s32 %s27, %s34
      %s310 = sor.u32 %s308, %s309
      %p311 = scmp.eq.s32.totalorder %s310, 0
      %s313 = sadd.s32 %s312, 1
      %s314 = scalar_select %p311, %s312, %s313
      %p317 = pneg %p311
      %p318 = scmp.eq.s32.totalorder %s19, 7
      %p319 = por %p317, %p318
      %p320 = scmp.ne.s32.totalorder %s312, %s315
      %p321 = scmp.eq.s32.totalorder %s19, 0
      %p322 = por %p320, %p321
      %p323 = scmp.ne.s32.totalorder %s312, %s315
      %p324 = scmp.eq.s32.totalorder %s24, 7
      %p325 = por %p323, %p324
      %p326 = scmp.ne.s32.totalorder %s315, %s316
      %p327 = scmp.eq.s32.totalorder %s24, 0
      %p328 = por %p326, %p327
      %p329 = scmp.ne.s32.totalorder %s315, %s316
      %p330 = scmp.eq.s32.totalorder %s25, 7
      %p331 = por %p329, %p330
      %p333 = scmp.ne.s32.totalorder %s316, %s332
      %p334 = scmp.eq.s32.totalorder %s25, 0
      %p335 = por %p333, %p334
      %p336 = scmp.le.s32.totalorder 1, %s19
      %p337 = scmp.lt.s32.totalorder %s19, 9
      %p338 = pnand %p336, %p337
      %p339 = pneg %p338
      // Predicated region
      $region9: #{gnn_like_processor_forward.6} parent=5 // pred_check
        _
      $region10: #{gnn_like_processor_forward.6} parent=5 // pred_check_branch
        %341 = sbr.rel (%p338) target = $region12
      $region11: #{gnn_like_processor_forward.6} parent=5 // pred_region
        %s342 = ssub.s32 %s19, 1
        // Predicated region
        $region13: #{gnn_like_processor_forward.6} parent=11 // pred_check
          %p343 = pneg %p174
        $region14: #{gnn_like_processor_forward.6} parent=11 // pred_check_branch
          %345 = sbr.rel (%p343) target = $region16
        $region15: #{gnn_like_processor_forward.6} parent=11 // pred_region
          %347 = vsyncadd [#allocation3], 0
          %s348 = sshll.u32 %s4, 4
          %s349 = int_to_ptr.hbm [resolvable:$true] %s348
          %s350 = sshll.u32 [#allocation2], 4
          %s351 = int_to_ptr.vmem [resolvable:$true] %s350
          %356 = dma.hbm_to_vmem [thread:$0]  %s349, 5120, %s351, [#allocation3], 64, 64, 4
        $region16: #{gnn_like_processor_forward.6} parent=11 // pred_fallthru
          _
        // Predicated region
        $region17: #{gnn_like_processor_forward.6} parent=11 // pred_check
          %p357 = pneg %p195
        $region18: #{gnn_like_processor_forward.6} parent=11 // pred_check_branch
          %359 = sbr.rel (%p357) target = $region20
        $region19: #{gnn_like_processor_forward.6} parent=11 // pred_region
          _
        $region20: #{gnn_like_processor_forward.6} parent=11 // pred_fallthru
          _
        // Predicated region
        $region21: #{gnn_like_processor_forward.6} parent=11 // pred_check
          %p360 = pneg %p216
        $region22: #{gnn_like_processor_forward.6} parent=11 // pred_check_branch
          %362 = sbr.rel (%p360) target = $region24
        $region23: #{gnn_like_processor_forward.6} parent=11 // pred_region
          _
        $region24: #{gnn_like_processor_forward.6} parent=11 // pred_fallthru
          _
        // Predicated region
        $region25: #{gnn_like_processor_forward.6} parent=11 // pred_check
          %p363 = pneg %p237
        $region26: #{gnn_like_processor_forward.6} parent=11 // pred_check_branch
          %365 = sbr.rel (%p363) target = $region28
        $region27: #{gnn_like_processor_forward.6} parent=11 // pred_region
          _
        $region28: #{gnn_like_processor_forward.6} parent=11 // pred_fallthru
          _
        // Predicated region
        $region29: #{gnn_like_processor_forward.6} parent=11 // pred_check
          %p366 = pneg %p258
        $region30: #{gnn_like_processor_forward.6} parent=11 // pred_check_branch
          %368 = sbr.rel (%p366) target = $region32
        $region31: #{gnn_like_processor_forward.6} parent=11 // pred_region
          %370 = vsyncadd [#allocation5], 0
          %s371 = sshll.u32 %s8, 4
          %s372 = int_to_ptr.hbm [resolvable:$true] %s371
          %s373 = sshll.u32 [#allocation4], 4
          %s374 = int_to_ptr.vmem [resolvable:$true] %s373
          %379 = dma.hbm_to_vmem [thread:$0]  %s372, 1024, %s374, [#allocation5], 64, 64, 4
        $region32: #{gnn_like_processor_forward.6} parent=11 // pred_fallthru
          _
        // Predicated region
        $region33: #{gnn_like_processor_forward.6} parent=11 // pred_check
          %p380 = pneg %p279
        $region34: #{gnn_like_processor_forward.6} parent=11 // pred_check_branch
          %382 = sbr.rel (%p380) target = $region36
        $region35: #{gnn_like_processor_forward.6} parent=11 // pred_region
          %384 = vsyncadd [#allocation5], 0
          %s385 = sshll.u32 %s9, 4
          %s386 = int_to_ptr.hbm [resolvable:$true] %s385
          %s387 = sshll.u32 [#allocation6], 4
          %s388 = int_to_ptr.vmem [resolvable:$true] %s387
          %393 = dma.hbm_to_vmem [thread:$0]  %s386, 1024, %s388, [#allocation5], 64, 64, 4
        $region36: #{gnn_like_processor_forward.6} parent=11 // pred_fallthru
          _
        // Predicated region
        $region37: #{gnn_like_processor_forward.6} parent=11 // pred_check
          %p394 = pneg %p300
        $region38: #{gnn_like_processor_forward.6} parent=11 // pred_check_branch
          %396 = sbr.rel (%p394) target = $region40
        $region39: #{gnn_like_processor_forward.6} parent=11 // pred_region
          _
        $region40: #{gnn_like_processor_forward.6} parent=11 // pred_fallthru
          _
      $region12: #{gnn_like_processor_forward.6} parent=5 // pred_fallthru
        _
      %p397 = scmp.lt.s32.totalorder %s19, 8
      // Predicated region
      $region41: #{gnn_like_processor_forward.6} parent=5 // pred_check
        %p398 = pneg %p397
      $region42: #{gnn_like_processor_forward.6} parent=5 // pred_check_branch
        %400 = sbr.rel (%p398) target = $region44
      $region43: #{gnn_like_processor_forward.6} parent=5 // pred_region
        // Predicated region
        $region45: #{gnn_like_processor_forward.6} parent=43 // pred_check
          %p401 = pneg %p53
        $region46: #{gnn_like_processor_forward.6} parent=43 // pred_check_branch
          %403 = sbr.rel (%p401) target = $region48
        $region47: #{gnn_like_processor_forward.6} parent=43 // pred_region
          %s404 = smul.u32 2, %s27
          %p405 = scmp.lt.s32.totalorder %s26, 1
          %s406 = scalar_select %p405, %s26, 1
          %p407 = scmp.lt.s32.totalorder %s404, 7
          %s408 = scalar_select %p407, %s404, 7
          %s409 = smul.addr %s406, 8
          %s410 = sadd.s32 %s408, %s409
          %s411 = smul.addr %s410, 4
          %s412 = scalar_lea.vmem %s0, %s411
          %s413 = smul.u32 2, %s27
        $region48: #{gnn_like_processor_forward.6} parent=43 // pred_fallthru
          _
        // Predicated region
        $region49: #{gnn_like_processor_forward.6} parent=43 // pred_check
          %p414 = pneg %p87
        $region50: #{gnn_like_processor_forward.6} parent=43 // pred_check_branch
          %416 = sbr.rel (%p414) target = $region52
        $region51: #{gnn_like_processor_forward.6} parent=43 // pred_region
          %s417 = ssub.s32 %s27, 1
          %p418 = scmp.gt.s32.totalorder %s417, 0
          %s419 = scalar_select %p418, %s417, 0
          %s420 = smul.u32 2, %s419
          %p421 = scmp.lt.s32.totalorder %s26, 1
          %s422 = scalar_select %p421, %s26, 1
          %p423 = scmp.lt.s32.totalorder %s420, 7
          %s424 = scalar_select %p423, %s420, 7
          %s425 = smul.addr %s422, 8
          %s426 = sadd.s32 %s424, %s425
          %s427 = smul.addr %s426, 4
          %s428 = scalar_lea.vmem %s1, %s427
          %s429 = ssub.s32 %s27, 1
          %p430 = scmp.gt.s32.totalorder %s429, 0
          %s431 = scalar_select %p430, %s429, 0
          %s432 = smul.u32 2, %s431
        $region52: #{gnn_like_processor_forward.6} parent=43 // pred_fallthru
          _
        // Predicated region
        $region53: #{gnn_like_processor_forward.6} parent=43 // pred_check
          %p433 = pneg %p121
        $region54: #{gnn_like_processor_forward.6} parent=43 // pred_check_branch
          %435 = sbr.rel (%p433) target = $region56
        $region55: #{gnn_like_processor_forward.6} parent=43 // pred_region
          %s436 = sadd.s32 %s27, 1
          %p437 = scmp.lt.s32.totalorder %s436, 3
          %s438 = scalar_select %p437, %s436, 3
          %s439 = smul.u32 2, %s438
          %p440 = scmp.lt.s32.totalorder %s26, 1
          %s441 = scalar_select %p440, %s26, 1
          %p442 = scmp.lt.s32.totalorder %s439, 7
          %s443 = scalar_select %p442, %s439, 7
          %s444 = smul.addr %s441, 8
          %s445 = sadd.s32 %s443, %s444
          %s446 = smul.addr %s445, 4
          %s447 = scalar_lea.vmem %s2, %s446
          %s448 = sadd.s32 %s27, 1
          %p449 = scmp.lt.s32.totalorder %s448, 3
          %s450 = scalar_select %p449, %s448, 3
          %s451 = smul.u32 2, %s450
        $region56: #{gnn_like_processor_forward.6} parent=43 // pred_fallthru
          _
        // Predicated region
        $region57: #{gnn_like_processor_forward.6} parent=43 // pred_check
          %p452 = pneg %p147
        $region58: #{gnn_like_processor_forward.6} parent=43 // pred_check_branch
          %454 = sbr.rel (%p452) target = $region60
        $region59: #{gnn_like_processor_forward.6} parent=43 // pred_region
          %p455 = scmp.lt.s32.totalorder %s26, 1
          %s456 = scalar_select %p455, %s26, 1
          %s457 = scalar_lea.vmem %s3, %s456
        $region60: #{gnn_like_processor_forward.6} parent=43 // pred_fallthru
          _
      $region44: #{gnn_like_processor_forward.6} parent=5 // pred_fallthru
        _
      %p458 = scmp.le.s32.totalorder 1, %s19
      %p459 = scmp.lt.s32.totalorder %s19, 9
      %p460 = pnand %p458, %p459
      %p461 = pneg %p460
      // Predicated region
      $region61: #{gnn_like_processor_forward.6} parent=5 // pred_check
        _
      $region62: #{gnn_like_processor_forward.6} parent=5 // pred_check_branch
        %463 = sbr.rel (%p460) target = $region64
      $region63: #{gnn_like_processor_forward.6} parent=5 // pred_region
        %s464 = ssub.s32 %s19, 1
        // Predicated region
        $region65: #{gnn_like_processor_forward.6} parent=63 // pred_check
          %p465 = pneg %p174
        $region66: #{gnn_like_processor_forward.6} parent=63 // pred_check_branch
          %467 = sbr.rel (%p465) target = $region68
        $region67: #{gnn_like_processor_forward.6} parent=63 // pred_region
          %469 = dma.done [#allocation3], 5120
        $region68: #{gnn_like_processor_forward.6} parent=63 // pred_fallthru
          _
        // Predicated region
        $region69: #{gnn_like_processor_forward.6} parent=63 // pred_check
          %p470 = pneg %p258
        $region70: #{gnn_like_processor_forward.6} parent=63 // pred_check_branch
          %472 = sbr.rel (%p470) target = $region72
        $region71: #{gnn_like_processor_forward.6} parent=63 // pred_region
          %474 = dma.done [#allocation5], 1024
        $region72: #{gnn_like_processor_forward.6} parent=63 // pred_fallthru
          _
        // Predicated region
        $region73: #{gnn_like_processor_forward.6} parent=63 // pred_check
          %p475 = pneg %p279
        $region74: #{gnn_like_processor_forward.6} parent=63 // pred_check_branch
          %477 = sbr.rel (%p475) target = $region76
        $region75: #{gnn_like_processor_forward.6} parent=63 // pred_region
          %479 = dma.done [#allocation5], 1024
        $region76: #{gnn_like_processor_forward.6} parent=63 // pred_fallthru
          _
        %s480 = smul.u32 2, %s29
        %p481 = scmp.lt.s32.totalorder %s28, 1
        %s482 = scalar_select %p481, %s28, 1
        %p483 = scmp.lt.s32.totalorder %s480, 7
        %s484 = scalar_select %p483, %s480, 7
        %s485 = smul.addr %s482, 8
        %s486 = sadd.s32 %s484, %s485
        %s487 = smul.addr %s486, 4
        %s488 = scalar_lea.vmem %s0, %s487
        %p489 = pneg %p59
        %p490 = pneg %p56
        %s491 = ssub.s32 %s29, 1
        %p492 = scmp.gt.s32.totalorder %s491, 0
        %s493 = scalar_select %p492, %s491, 0
        %s494 = smul.u32 2, %s493
        %p495 = scmp.lt.s32.totalorder %s28, 1
        %s496 = scalar_select %p495, %s28, 1
        %p497 = scmp.lt.s32.totalorder %s494, 7
        %s498 = scalar_select %p497, %s494, 7
        %s499 = smul.addr %s496, 8
        %s500 = sadd.s32 %s498, %s499
        %s501 = smul.addr %s500, 4
        %s502 = scalar_lea.vmem %s1, %s501
        %p503 = pneg %p93
        %p504 = pneg %p90
        %s505 = sadd.s32 %s29, 1
        %p506 = scmp.lt.s32.totalorder %s505, 3
        %s507 = scalar_select %p506, %s505, 3
        %s508 = smul.u32 2, %s507
        %p509 = scmp.lt.s32.totalorder %s28, 1
        %s510 = scalar_select %p509, %s28, 1
        %p511 = scmp.lt.s32.totalorder %s508, 7
        %s512 = scalar_select %p511, %s508, 7
        %s513 = smul.addr %s510, 8
        %s514 = sadd.s32 %s512, %s513
        %s515 = smul.addr %s514, 4
        %s516 = scalar_lea.vmem %s2, %s515
        %p517 = pneg %p127
        %p518 = pneg %p124
        %p519 = scmp.lt.s32.totalorder %s28, 1
        %s520 = scalar_select %p519, %s28, 1
        %s521 = scalar_lea.vmem %s3, %s520
        %p522 = pneg %p153
        %p523 = pneg %p150
        %p524 = pneg %p174
        %p525 = pneg %p171
        %p526 = pneg %p195
        %p527 = pneg %p192
        %p528 = pneg %p216
        %p529 = pneg %p213
        %p530 = pneg %p237
        %p531 = pneg %p234
        %p532 = pneg %p258
        %p533 = pneg %p255
        %p534 = pneg %p279
        %p535 = pneg %p276
        %p536 = pneg %p300
        %p537 = pneg %p297
        %p538 = pneg %p328
        %p539 = pneg %p325
        %s540 = smul.u32 2, %s29
        %p541 = scmp.lt.s32.totalorder %s28, 1
        %s542 = scalar_select %p541, %s28, 1
        %p543 = scmp.lt.s32.totalorder %s540, 7
        %s544 = scalar_select %p543, %s540, 7
        %s545 = smul.addr %s542, 8
        %s546 = sadd.s32 %s544, %s545
        %s547 = smul.addr %s546, 4
        %s548 = scalar_lea.vmem %s11, %s547
        %s549 = smul.u32 2, %s29
        %p550 = scmp.lt.s32.totalorder %s28, 1
        %s551 = scalar_select %p550, %s28, 1
        %p552 = scmp.lt.s32.totalorder %s549, 7
        %s553 = scalar_select %p552, %s549, 7
        %s554 = smul.addr %s551, 8
        %s555 = sadd.s32 %s553, %s554
        %s556 = smul.addr %s555, 4
        %s557 = scalar_lea.vmem %s0, %s556
        %s558 = smul.u32 2, %s29
        %s559 = ssub.s32 %s29, 1
        %p560 = scmp.gt.s32.totalorder %s559, 0
        %s561 = scalar_select %p560, %s559, 0
        %s562 = smul.u32 2, %s561
        %p563 = scmp.lt.s32.totalorder %s28, 1
        %s564 = scalar_select %p563, %s28, 1
        %p565 = scmp.lt.s32.totalorder %s562, 7
        %s566 = scalar_select %p565, %s562, 7
        %s567 = smul.addr %s564, 8
        %s568 = sadd.s32 %s566, %s567
        %s569 = smul.addr %s568, 4
        %s570 = scalar_lea.vmem %s1, %s569
        %s571 = ssub.s32 %s29, 1
        %p572 = scmp.gt.s32.totalorder %s571, 0
        %s573 = scalar_select %p572, %s571, 0
        %s574 = smul.u32 2, %s573
        %s575 = sadd.s32 %s29, 1
        %p576 = scmp.lt.s32.totalorder %s575, 3
        %s577 = scalar_select %p576, %s575, 3
        %s578 = smul.u32 2, %s577
        %p579 = scmp.lt.s32.totalorder %s28, 1
        %s580 = scalar_select %p579, %s28, 1
        %p581 = scmp.lt.s32.totalorder %s578, 7
        %s582 = scalar_select %p581, %s578, 7
        %s583 = smul.addr %s580, 8
        %s584 = sadd.s32 %s582, %s583
        %s585 = smul.addr %s584, 4
        %s586 = scalar_lea.vmem %s2, %s585
        %s587 = sadd.s32 %s29, 1
        %p588 = scmp.lt.s32.totalorder %s587, 3
        %s589 = scalar_select %p588, %s587, 3
        %s590 = smul.u32 2, %s589
        %p591 = scmp.lt.s32.totalorder %s28, 1
        %s592 = scalar_select %p591, %s28, 1
        %s593 = scalar_lea.vmem %s3, %s592
        %s594 = smul.u32 2, %s29
        %p595 = scmp.lt.s32.totalorder %s28, 1
        %s596 = scalar_select %p595, %s28, 1
        %p597 = scmp.lt.s32.totalorder %s594, 7
        %s598 = scalar_select %p597, %s594, 7
        %s599 = smul.addr %s596, 8
        %s600 = sadd.s32 %s598, %s599
        %s601 = smul.addr %s600, 4
        %s602 = scalar_lea.vmem %s11, %s601
        %s603 = smul.u32 2, %s29
        %v604 = vld [vmem:[%s557] sm:$0xf]
        %v605 = vld [vmem:[%s557 + $0x4] sm:$0xf]
        %p606 = scmp.eq.s32.totalorder %s29, 0
        %v608 = vpack.i.b16 %v604, %v604
        %v610 = vperm.slane %v608, 0
        %v611 = vld [vmem:[%s570 + $0x4] sm:$0x8]
        %s612 = scalar_select %p606, 1, 0
        %v613 = vstv %s612
        %vm614 = vcmp.eq.s32.totalorder %v613, 1
        %v616 = vunpack.c.l.b16 %v611
        %v617 = vpack.c.b16 %v616, %v616
        %v618 = vrot.slane %v617, 3
        %v620 = vsel %vm614, %v610, %v618
        %p621 = scmp.eq.s32.totalorder %s29, 3
        %v623 = vshrl.u32 %v605, 16
        %v624 = vpack.i.b16 %v623, %v623
        %v626 = vperm.slane %v624, 3
        %v627 = vld [vmem:[%s586] sm:$0x1]
        %s628 = scalar_select %p621, 1, 0
        %v629 = vstv %s628
        %vm630 = vcmp.eq.s32.totalorder %v629, 1
        %v631 = vsel %vm630, %v626, %v627
        %v634 = vunpack.c.l.b16 %v604
        %v635 = vunpack.c.l.b16 %v605
        %v636 = vpack.c.b16 %v635, %v634
        %v637 = vrot.slane %v636, 7
        %v639 = vrot.slane %v631, 7
        %vm640 = vcmask 1040384
        %v643 = vsel %vm640, %v620, %v637
        %v646 = vsel %vm640, %v637, %v639
        %vm647 = vsmask.f32 7424
        %v648 = vshrl.u32 %v643, 16
        %v650 = vshll.u32 %v643, 16
        %v652 = vrot.slane %v650, 1
        %v653 = vor.u32 %v648, %v652
        %v654 = vshll.u32 %v646, 16
        %v656 = vrot.slane %v654, 1
        %v657 = vsel %vm647, %v653, %v656
        %vm661 = vcmask 1046528
        %v662 = vrot.slane %v643, 1
        %v663 = vrot.slane %v646, 1
        %v664 = vsel %vm661, %v662, %v663
        %vm666 = vsmask.f32 6400
        %v667 = vrot.slane %v648, 1
        %v668 = vrot.slane %v650, 2
        %v669 = vor.u32 %v667, %v668
        %v670 = vshrl.u32 %v646, 16
        %v672 = vrot.slane %v670, 1
        %v673 = vrot.slane %v654, 2
        %v674 = vor.u32 %v672, %v673
        %v675 = vsel %vm666, %v669, %v674
        %vm677 = vcmask 1045504
        %v678 = vrot.slane %v643, 2
        %v679 = vrot.slane %v646, 2
        %v680 = vsel %vm677, %v678, %v679
        %v682 = vld [vmem:[#allocation2] sm:$0xf]
        %v683 = vld [vmem:[#allocation2 + $0x4] sm:$0xf]
        %v684 = vld [vmem:[#allocation2 + $0x8] sm:$0xf]
        %v685 = vld [vmem:[#allocation2 + $0xc] sm:$0xf]
        %v686 = vld [vmem:[#allocation2 + $0x10] sm:$0xf]
        %v687 = vld [vmem:[#allocation2 + $0x14] sm:$0xf]
        %v688 = vld [vmem:[#allocation2 + $0x18] sm:$0xf]
        %v689 = vld [vmem:[#allocation2 + $0x1c] sm:$0xf]
        %v690 = vld [vmem:[#allocation2 + $0x20] sm:$0xf]
        %v691 = vld [vmem:[#allocation2 + $0x24] sm:$0xf]
        %v692 = vld [vmem:[#allocation2 + $0x28] sm:$0xf]
        %v693 = vld [vmem:[#allocation2 + $0x2c] sm:$0xf]
        %v694 = vld [vmem:[#allocation2 + $0x30] sm:$0xf]
        %v695 = vld [vmem:[#allocation2 + $0x34] sm:$0xf]
        %v696 = vld [vmem:[#allocation2 + $0x38] sm:$0xf]
        %v697 = vld [vmem:[#allocation2 + $0x3c] sm:$0xf]
        %v698 = vld [vmem:[#allocation2 + $0x40] sm:$0xf]
        %v699 = vld [vmem:[#allocation2 + $0x44] sm:$0xf]
        %v700 = vld [vmem:[#allocation2 + $0x48] sm:$0xf]
        %v701 = vld [vmem:[#allocation2 + $0x4c] sm:$0xf]
        %v702 = vld [vmem:[#allocation2 + $0x50] sm:$0xf]
        %v703 = vld [vmem:[#allocation2 + $0x54] sm:$0xf]
        %v704 = vld [vmem:[#allocation2 + $0x58] sm:$0xf]
        %v705 = vld [vmem:[#allocation2 + $0x5c] sm:$0xf]
        %v706 = vld [vmem:[#allocation2 + $0x60] sm:$0xf]
        %v707 = vld [vmem:[#allocation2 + $0x64] sm:$0xf]
        %v708 = vld [vmem:[#allocation2 + $0x68] sm:$0xf]
        %v709 = vld [vmem:[#allocation2 + $0x6c] sm:$0xf]
        %v710 = vld [vmem:[#allocation2 + $0x70] sm:$0xf]
        %v711 = vld [vmem:[#allocation2 + $0x74] sm:$0xf]
        %v712 = vld [vmem:[#allocation2 + $0x78] sm:$0xf]
        %v713 = vld [vmem:[#allocation2 + $0x7c] sm:$0xf]
        %v714 = vld [vmem:[#allocation2 + $0x80] sm:$0xf]
        %v715 = vld [vmem:[#allocation2 + $0x84] sm:$0xf]
        %v716 = vld [vmem:[#allocation2 + $0x88] sm:$0xf]
        %v717 = vld [vmem:[#allocation2 + $0x8c] sm:$0xf]
        %v718 = vld [vmem:[#allocation2 + $0x90] sm:$0xf]
        %v719 = vld [vmem:[#allocation2 + $0x94] sm:$0xf]
        %v720 = vld [vmem:[#allocation2 + $0x98] sm:$0xf]
        %v721 = vld [vmem:[#allocation2 + $0x9c] sm:$0xf]
        %v722 = vld [vmem:[#allocation2 + $0xa0] sm:$0xf]
        %v723 = vld [vmem:[#allocation2 + $0xa4] sm:$0xf]
        %v724 = vld [vmem:[#allocation2 + $0xa8] sm:$0xf]
        %v725 = vld [vmem:[#allocation2 + $0xac] sm:$0xf]
        %v726 = vld [vmem:[#allocation2 + $0xb0] sm:$0xf]
        %v727 = vld [vmem:[#allocation2 + $0xb4] sm:$0xf]
        %v728 = vld [vmem:[#allocation2 + $0xb8] sm:$0xf]
        %v729 = vld [vmem:[#allocation2 + $0xbc] sm:$0xf]
        %v730 = vld [vmem:[#allocation2 + $0xc0] sm:$0xf]
        %v731 = vld [vmem:[#allocation2 + $0xc4] sm:$0xf]
        %v732 = vld [vmem:[#allocation2 + $0xc8] sm:$0xf]
        %v733 = vld [vmem:[#allocation2 + $0xcc] sm:$0xf]
        %v734 = vld [vmem:[#allocation2 + $0xd0] sm:$0xf]
        %v735 = vld [vmem:[#allocation2 + $0xd4] sm:$0xf]
        %v736 = vld [vmem:[#allocation2 + $0xd8] sm:$0xf]
        %v737 = vld [vmem:[#allocation2 + $0xdc] sm:$0xf]
        %v738 = vld [vmem:[#allocation2 + $0xe0] sm:$0xf]
        %v739 = vld [vmem:[#allocation2 + $0xe4] sm:$0xf]
        %v740 = vld [vmem:[#allocation2 + $0xe8] sm:$0xf]
        %v741 = vld [vmem:[#allocation2 + $0xec] sm:$0xf]
        %v742 = vld [vmem:[#allocation2 + $0xf0] sm:$0xf]
        %v743 = vld [vmem:[#allocation2 + $0xf4] sm:$0xf]
        %v744 = vld [vmem:[#allocation2 + $0xf8] sm:$0xf]
        %v745 = vld [vmem:[#allocation2 + $0xfc] sm:$0xf]
        %v746 = vld [vmem:[#allocation2 + $0x100] sm:$0xf]
        %v747 = vld [vmem:[#allocation2 + $0x104] sm:$0xf]
        %v748 = vld [vmem:[#allocation2 + $0x108] sm:$0xf]
        %v749 = vld [vmem:[#allocation2 + $0x10c] sm:$0xf]
        %v750 = vld [vmem:[#allocation2 + $0x110] sm:$0xf]
        %v751 = vld [vmem:[#allocation2 + $0x114] sm:$0xf]
        %v752 = vld [vmem:[#allocation2 + $0x118] sm:$0xf]
        %v753 = vld [vmem:[#allocation2 + $0x11c] sm:$0xf]
        %v754 = vld [vmem:[#allocation2 + $0x120] sm:$0xf]
        %v755 = vld [vmem:[#allocation2 + $0x124] sm:$0xf]
        %v756 = vld [vmem:[#allocation2 + $0x128] sm:$0xf]
        %v757 = vld [vmem:[#allocation2 + $0x12c] sm:$0xf]
        %v758 = vld [vmem:[#allocation2 + $0x130] sm:$0xf]
        %v759 = vld [vmem:[#allocation2 + $0x134] sm:$0xf]
        %v760 = vld [vmem:[#allocation2 + $0x138] sm:$0xf]
        %v761 = vld [vmem:[#allocation2 + $0x13c] sm:$0xf]
        %v762 = vld [vmem:[%s5] sm:$0x1]
        %v764 = vperm.slane %v762, 0
        %v846 = vunpack.c.l.b16 %v682
        %v847 = vunpack.c.l.b16 %v683
        %v848 = vunpack.c.l.b16 %v684
        %v849 = vunpack.c.l.b16 %v685
        %v850 = vunpack.c.l.b16 %v686
        %v851 = vunpack.c.l.b16 %v687
        %v852 = vunpack.c.l.b16 %v688
        %v853 = vunpack.c.l.b16 %v689
        %v854 = vunpack.c.l.b16 %v690
        %v855 = vunpack.c.l.b16 %v691
        %v856 = vunpack.c.l.b16 %v692
        %v857 = vunpack.c.l.b16 %v693
        %v858 = vunpack.c.l.b16 %v694
        %v859 = vunpack.c.l.b16 %v695
        %v860 = vunpack.c.l.b16 %v696
        %v861 = vunpack.c.l.b16 %v697
        %v862 = vunpack.c.l.b16 %v698
        %v863 = vunpack.c.l.b16 %v699
        %v864 = vunpack.c.l.b16 %v700
        %v865 = vunpack.c.l.b16 %v701
        %v866 = vunpack.c.l.b16 %v702
        %v867 = vunpack.c.l.b16 %v703
        %v868 = vunpack.c.l.b16 %v704
        %v869 = vunpack.c.l.b16 %v705
        %v870 = vunpack.c.l.b16 %v706
        %v871 = vunpack.c.l.b16 %v707
        %v872 = vunpack.c.l.b16 %v708
        %v873 = vunpack.c.l.b16 %v709
        %v874 = vunpack.c.l.b16 %v710
        %v875 = vunpack.c.l.b16 %v711
        %v876 = vunpack.c.l.b16 %v712
        %v877 = vunpack.c.l.b16 %v713
        %v878 = vunpack.c.l.b16 %v714
        %v879 = vunpack.c.l.b16 %v715
        %v880 = vunpack.c.l.b16 %v716
        %v881 = vunpack.c.l.b16 %v717
        %v882 = vunpack.c.l.b16 %v718
        %v883 = vunpack.c.l.b16 %v719
        %v884 = vunpack.c.l.b16 %v720
        %v885 = vunpack.c.l.b16 %v721
        %v886 = vunpack.c.l.b16 %v722
        %v887 = vunpack.c.l.b16 %v723
        %v888 = vunpack.c.l.b16 %v724
        %v889 = vunpack.c.l.b16 %v725
        %v890 = vunpack.c.l.b16 %v726
        %v891 = vunpack.c.l.b16 %v727
        %v892 = vunpack.c.l.b16 %v728
        %v893 = vunpack.c.l.b16 %v729
        %v894 = vunpack.c.l.b16 %v730
        %v895 = vunpack.c.l.b16 %v731
        %v896 = vunpack.c.l.b16 %v732
        %v897 = vunpack.c.l.b16 %v733
        %v898 = vunpack.c.l.b16 %v734
        %v899 = vunpack.c.l.b16 %v735
        %v900 = vunpack.c.l.b16 %v736
        %v901 = vunpack.c.l.b16 %v737
        %v902 = vunpack.c.l.b16 %v738
        %v903 = vunpack.c.l.b16 %v739
        %v904 = vunpack.c.l.b16 %v740
        %v905 = vunpack.c.l.b16 %v741
        %v906 = vunpack.c.l.b16 %v742
        %v907 = vunpack.c.l.b16 %v743
        %v908 = vunpack.c.l.b16 %v744
        %v909 = vunpack.c.l.b16 %v745
        %v910 = vunpack.c.l.b16 %v746
        %v911 = vunpack.c.l.b16 %v747
        %v912 = vunpack.c.l.b16 %v748
        %v913 = vunpack.c.l.b16 %v749
        %v914 = vunpack.c.l.b16 %v750
        %v915 = vunpack.c.l.b16 %v751
        %v916 = vunpack.c.l.b16 %v752
        %v917 = vunpack.c.l.b16 %v753
        %v918 = vunpack.c.l.b16 %v754
        %v919 = vunpack.c.l.b16 %v755
        %v920 = vunpack.c.l.b16 %v756
        %v921 = vunpack.c.l.b16 %v757
        %v922 = vunpack.c.l.b16 %v758
        %v923 = vunpack.c.l.b16 %v759
        %v924 = vunpack.c.l.b16 %v760
        %v925 = vunpack.c.l.b16 %v761
        %v926 = vpack.c.b16 %v847, %v846
        %v927 = vpack.c.b16 %v849, %v848
        %v928 = vpack.c.b16 %v851, %v850
        %v929 = vpack.c.b16 %v853, %v852
        %v930 = vpack.c.b16 %v855, %v854
        %v931 = vpack.c.b16 %v857, %v856
        %v932 = vpack.c.b16 %v859, %v858
        %v933 = vpack.c.b16 %v861, %v860
        %v934 = vpack.c.b16 %v863, %v862
        %v935 = vpack.c.b16 %v865, %v864
        %v936 = vpack.c.b16 %v867, %v866
        %v937 = vpack.c.b16 %v869, %v868
        %v938 = vpack.c.b16 %v871, %v870
        %v939 = vpack.c.b16 %v873, %v872
        %v940 = vpack.c.b16 %v875, %v874
        %v941 = vpack.c.b16 %v877, %v876
        %v942 = vpack.c.b16 %v879, %v878
        %v943 = vpack.c.b16 %v881, %v880
        %v944 = vpack.c.b16 %v883, %v882
        %v945 = vpack.c.b16 %v885, %v884
        %v946 = vpack.c.b16 %v887, %v886
        %v947 = vpack.c.b16 %v889, %v888
        %v948 = vpack.c.b16 %v891, %v890
        %v949 = vpack.c.b16 %v893, %v892
        %v950 = vpack.c.b16 %v895, %v894
        %v951 = vpack.c.b16 %v897, %v896
        %v952 = vpack.c.b16 %v899, %v898
        %v953 = vpack.c.b16 %v901, %v900
        %v954 = vpack.c.b16 %v903, %v902
        %v955 = vpack.c.b16 %v905, %v904
        %v956 = vpack.c.b16 %v907, %v906
        %v957 = vpack.c.b16 %v909, %v908
        %v958 = vpack.c.b16 %v911, %v910
        %v959 = vpack.c.b16 %v913, %v912
        %v960 = vpack.c.b16 %v915, %v914
        %v961 = vpack.c.b16 %v917, %v916
        %v962 = vpack.c.b16 %v919, %v918
        %v963 = vpack.c.b16 %v921, %v920
        %v964 = vpack.c.b16 %v923, %v922
        %v965 = vpack.c.b16 %v925, %v924
        %1006 = vmatpush.bf16.msra.mxu0 %v933
        %1007 = vmatpush.bf16.msra.mxu0 %v932
        %1008 = vmatpush.bf16.msra.mxu0 %v931
        %1009 = vmatpush.bf16.msra.mxu0 %v930
        %1010 = vmatpush.bf16.msra.mxu0 %v929
        %1011 = vmatpush.bf16.msra.mxu0 %v928
        %1012 = vmatpush.bf16.msra.mxu0 %v927
        %1013 = vmatpush.bf16.msra.mxu0 %v926
        %1014 = vmatmul.bf16.gmra.mxu0 %v643
        %v1015 = vpop.f32.mrf.mxu0
        %v1016 = vadd.f32 %v764, %v1015
        %v1017 = vpop.f32.mrf.mxu0
        %v1018 = vadd.f32 %v764, %v1017
        %1019 = vdwg.mxu0
        %1020 = vmatpush.bf16.msra.mxu0 %v941
        %1021 = vmatpush.bf16.msra.mxu0 %v940
        %1022 = vmatpush.bf16.msra.mxu0 %v939
        %1023 = vmatpush.bf16.msra.mxu0 %v938
        %1024 = vmatpush.bf16.msra.mxu0 %v937
        %1025 = vmatpush.bf16.msra.mxu0 %v936
        %1026 = vmatpush.bf16.msra.mxu0 %v935
        %1027 = vmatpush.bf16.msra.mxu0 %v934
        %1028 = vmatmul.bf16.gmra.mxu0 %v657
        %v1029 = vpop.f32.mrf.mxu0
        %v1030 = vadd.f32 %v1016, %v1029
        %v1031 = vpop.f32.mrf.mxu0
        %v1032 = vadd.f32 %v1018, %v1031
        %1033 = vdwg.mxu0
        %1034 = vmatpush.bf16.msra.mxu0 %v949
        %1035 = vmatpush.bf16.msra.mxu0 %v948
        %1036 = vmatpush.bf16.msra.mxu0 %v947
        %1037 = vmatpush.bf16.msra.mxu0 %v946
        %1038 = vmatpush.bf16.msra.mxu0 %v945
        %1039 = vmatpush.bf16.msra.mxu0 %v944
        %1040 = vmatpush.bf16.msra.mxu0 %v943
        %1041 = vmatpush.bf16.msra.mxu0 %v942
        %1042 = vmatmul.bf16.gmra.mxu0 %v664
        %v1043 = vpop.f32.mrf.mxu0
        %v1044 = vadd.f32 %v1030, %v1043
        %v1045 = vpop.f32.mrf.mxu0
        %v1046 = vadd.f32 %v1032, %v1045
        %1047 = vdwg.mxu0
        %1048 = vmatpush.bf16.msra.mxu0 %v957
        %1049 = vmatpush.bf16.msra.mxu0 %v956
        %1050 = vmatpush.bf16.msra.mxu0 %v955
        %1051 = vmatpush.bf16.msra.mxu0 %v954
        %1052 = vmatpush.bf16.msra.mxu0 %v953
        %1053 = vmatpush.bf16.msra.mxu0 %v952
        %1054 = vmatpush.bf16.msra.mxu0 %v951
        %1055 = vmatpush.bf16.msra.mxu0 %v950
        %1056 = vmatmul.bf16.gmra.mxu0 %v675
        %v1057 = vpop.f32.mrf.mxu0
        %v1058 = vadd.f32 %v1044, %v1057
        %v1059 = vpop.f32.mrf.mxu0
        %v1060 = vadd.f32 %v1046, %v1059
        %1061 = vdwg.mxu0
        %1062 = vmatpush.bf16.msra.mxu0 %v965
        %1063 = vmatpush.bf16.msra.mxu0 %v964
        %1064 = vmatpush.bf16.msra.mxu0 %v963
        %1065 = vmatpush.bf16.msra.mxu0 %v962
        %1066 = vmatpush.bf16.msra.mxu0 %v961
        %1067 = vmatpush.bf16.msra.mxu0 %v960
        %1068 = vmatpush.bf16.msra.mxu0 %v959
        %1069 = vmatpush.bf16.msra.mxu0 %v958
        %1070 = vmatmul.bf16.gmra.mxu0 %v680
        %v1071 = vpop.f32.mrf.mxu0
        %v1072 = vadd.f32 %v1058, %v1071
        %v1073 = vpop.f32.mrf.mxu0
        %v1074 = vadd.f32 %v1060, %v1073
        %1075 = vdwg.mxu0
        %1076 = vadd.xlane.f32.xlu0 %v1072
        %v1077 = vpop.xlane.xlu0 %1076
        %1078 = vadd.xlane.f32.xlu0 %v1074
        %v1079 = vpop.xlane.xlu0 %1078
        %v1080 = vrcp.pop 128.0
        %v1081 = vmul.f32 128.0, %v1080
        %v1082 = vsub.f32 1.0, %v1081
        %v1083 = vmul.f32 %v1080, %v1082
        %v1084 = vadd.f32 %v1080, %v1083
        %vm1085 = vweird.f32 %v1080
        %v1086 = vsel %vm1085, %v1080, %v1084
        %v1087 = vmul.f32 %v1077, %v1086
        %v1088 = vmul.f32 %v1079, %v1086
        %v1089 = vmul.f32 %v1072, %v1072
        %v1090 = vmul.f32 %v1074, %v1074
        %1091 = vadd.xlane.f32.xlu0 %v1089
        %v1092 = vpop.xlane.xlu0 %1091
        %1093 = vadd.xlane.f32.xlu0 %v1090
        %v1094 = vpop.xlane.xlu0 %1093
        %v1095 = vmul.f32 %v1092, %v1086
        %v1096 = vmul.f32 %v1094, %v1086
        %v1097 = vmul.f32 %v1087, %v1087
        %v1098 = vmul.f32 %v1088, %v1088
        %v1099 = vsub.f32 %v1095, %v1097
        %v1100 = vsub.f32 %v1096, %v1098
        %v1101 = vmax.f32 %v1099, 0.0
        %v1102 = vmax.f32 %v1100, 0.0
        %v1103 = vsub.f32 %v1072, %v1087
        %v1104 = vsub.f32 %v1074, %v1088
        %v1105 = vadd.f32 %v1101, 1e-05
        %v1106 = vadd.f32 %v1102, 1e-05
        %v1107 = vrsqrt.pop %v1105
        %v1108 = vmul.f32 %v1107, %v1105
        %v1109 = vmul.f32 %v1108, %v1107
        %v1110 = vmul.f32 0.5, %v1109
        %v1111 = vsub.f32 1.5, %v1110
        %v1112 = vmul.f32 %v1107, %v1111
        %vm1113 = vweird.f32 %v1105
        %vm1114 = vweird.f32 %v1107
        %vm1115 = vmor %vm1113, %vm1114
        %v1116 = vsel %vm1115, %v1107, %v1112
        %v1117 = vrsqrt.pop %v1106
        %v1118 = vmul.f32 %v1117, %v1106
        %v1119 = vmul.f32 %v1118, %v1117
        %v1120 = vmul.f32 0.5, %v1119
        %v1121 = vsub.f32 1.5, %v1120
        %v1122 = vmul.f32 %v1117, %v1121
        %vm1123 = vweird.f32 %v1106
        %vm1124 = vweird.f32 %v1117
        %vm1125 = vmor %vm1123, %vm1124
        %v1126 = vsel %vm1125, %v1117, %v1122
        %v1127 = vmul.f32 %v1103, %v1116
        %v1128 = vmul.f32 %v1104, %v1126
        %v1129 = vld [vmem:[%s6] sm:$0x1]
        %v1131 = vperm.slane %v1129, 0
        %v1133 = vmul.f32 %v1127, %v1131
        %v1134 = vmul.f32 %v1128, %v1131
        %v1135 = vld [vmem:[%s7] sm:$0x1]
        %v1137 = vperm.slane %v1135, 0
        %v1139 = vadd.f32 %v1133, %v1137
        %v1140 = vadd.f32 %v1134, %v1137
        %v1141 = vmul.f32 %v1139, 0.5
        %v1142 = vmul.f32 %v1140, 0.5
        %v1143 = vmul.f32 %v1139, 0.044715
        %v1144 = vmul.f32 %v1140, 0.044715
        %v1145 = vmul.f32 %v1143, %v1139
        %v1146 = vmul.f32 %v1144, %v1140
        %v1147 = vmul.f32 %v1145, %v1139
        %v1148 = vmul.f32 %v1146, %v1140
        %v1149 = vadd.f32 %v1139, %v1147
        %v1150 = vadd.f32 %v1140, %v1148
        %v1151 = vmul.f32 %v1149, 0.7978846
        %v1152 = vmul.f32 %v1150, 0.7978846
        %v1153 = vtanh.pop %v1151
        %v1154 = vtanh.pop %v1152
        %v1155 = vadd.f32 %v1153, 1.0
        %v1156 = vadd.f32 %v1154, 1.0
        %v1157 = vmul.f32 %v1141, %v1155
        %v1158 = vmul.f32 %v1142, %v1156
        %v1159 = vpack.c.bf16 %v1158, %v1157
        %v1160 = vld [vmem:[#allocation4] sm:$0xf]
        %v1161 = vld [vmem:[#allocation4 + $0x4] sm:$0xf]
        %v1162 = vld [vmem:[#allocation4 + $0x8] sm:$0xf]
        %v1163 = vld [vmem:[#allocation4 + $0xc] sm:$0xf]
        %v1164 = vld [vmem:[#allocation4 + $0x10] sm:$0xf]
        %v1165 = vld [vmem:[#allocation4 + $0x14] sm:$0xf]
        %v1166 = vld [vmem:[#allocation4 + $0x18] sm:$0xf]
        %v1167 = vld [vmem:[#allocation4 + $0x1c] sm:$0xf]
        %v1168 = vld [vmem:[#allocation4 + $0x20] sm:$0xf]
        %v1169 = vld [vmem:[#allocation4 + $0x24] sm:$0xf]
        %v1170 = vld [vmem:[#allocation4 + $0x28] sm:$0xf]
        %v1171 = vld [vmem:[#allocation4 + $0x2c] sm:$0xf]
        %v1172 = vld [vmem:[#allocation4 + $0x30] sm:$0xf]
        %v1173 = vld [vmem:[#allocation4 + $0x34] sm:$0xf]
        %v1174 = vld [vmem:[#allocation4 + $0x38] sm:$0xf]
        %v1175 = vld [vmem:[#allocation4 + $0x3c] sm:$0xf]
        %v1176 = vld [vmem:[%s593] sm:$0x1]
        %v1178 = vperm.slane %v1176, 0
        %v1196 = vunpack.c.l.b16 %v1160
        %v1197 = vunpack.c.l.b16 %v1161
        %v1198 = vunpack.c.l.b16 %v1162
        %v1199 = vunpack.c.l.b16 %v1163
        %v1200 = vunpack.c.l.b16 %v1164
        %v1201 = vunpack.c.l.b16 %v1165
        %v1202 = vunpack.c.l.b16 %v1166
        %v1203 = vunpack.c.l.b16 %v1167
        %v1204 = vunpack.c.l.b16 %v1168
        %v1205 = vunpack.c.l.b16 %v1169
        %v1206 = vunpack.c.l.b16 %v1170
        %v1207 = vunpack.c.l.b16 %v1171
        %v1208 = vunpack.c.l.b16 %v1172
        %v1209 = vunpack.c.l.b16 %v1173
        %v1210 = vunpack.c.l.b16 %v1174
        %v1211 = vunpack.c.l.b16 %v1175
        %v1212 = vpack.c.b16 %v1197, %v1196
        %v1213 = vpack.c.b16 %v1199, %v1198
        %v1214 = vpack.c.b16 %v1201, %v1200
        %v1215 = vpack.c.b16 %v1203, %v1202
        %v1216 = vpack.c.b16 %v1205, %v1204
        %v1217 = vpack.c.b16 %v1207, %v1206
        %v1218 = vpack.c.b16 %v1209, %v1208
        %v1219 = vpack.c.b16 %v1211, %v1210
        %1228 = vmatpush.bf16.msra.mxu0 %v1219
        %1229 = vmatpush.bf16.msra.mxu0 %v1218
        %1230 = vmatpush.bf16.msra.mxu0 %v1217
        %1231 = vmatpush.bf16.msra.mxu0 %v1216
        %1232 = vmatpush.bf16.msra.mxu0 %v1215
        %1233 = vmatpush.bf16.msra.mxu0 %v1214
        %1234 = vmatpush.bf16.msra.mxu0 %v1213
        %1235 = vmatpush.bf16.msra.mxu0 %v1212
        %1236 = vmatmul.bf16.gmra.mxu0 %v1159
        %v1237 = vpop.f32.mrf.mxu0
        %v1238 = vadd.f32 %v1178, %v1237
        %v1239 = vpop.f32.mrf.mxu0
        %v1240 = vadd.f32 %v1178, %v1239
        %1241 = vdwg.mxu0
        %v1242 = vmul.f32 %v1238, 0.5
        %v1243 = vmul.f32 %v1240, 0.5
        %v1244 = vmul.f32 %v1238, 0.044715
        %v1245 = vmul.f32 %v1240, 0.044715
        %v1246 = vmul.f32 %v1244, %v1238
        %v1247 = vmul.f32 %v1245, %v1240
        %v1248 = vmul.f32 %v1246, %v1238
        %v1249 = vmul.f32 %v1247, %v1240
        %v1250 = vadd.f32 %v1238, %v1248
        %v1251 = vadd.f32 %v1240, %v1249
        %v1252 = vmul.f32 %v1250, 0.7978846
        %v1253 = vmul.f32 %v1251, 0.7978846
        %v1254 = vtanh.pop %v1252
        %v1255 = vtanh.pop %v1253
        %v1256 = vadd.f32 %v1254, 1.0
        %v1257 = vadd.f32 %v1255, 1.0
        %v1258 = vmul.f32 %v1242, %v1256
        %v1259 = vmul.f32 %v1243, %v1257
        %v1260 = vpack.c.bf16 %v1259, %v1258
        %v1261 = vld [vmem:[#allocation6] sm:$0xf]
        %v1262 = vld [vmem:[#allocation6 + $0x4] sm:$0xf]
        %v1263 = vld [vmem:[#allocation6 + $0x8] sm:$0xf]
        %v1264 = vld [vmem:[#allocation6 + $0xc] sm:$0xf]
        %v1265 = vld [vmem:[#allocation6 + $0x10] sm:$0xf]
        %v1266 = vld [vmem:[#allocation6 + $0x14] sm:$0xf]
        %v1267 = vld [vmem:[#allocation6 + $0x18] sm:$0xf]
        %v1268 = vld [vmem:[#allocation6 + $0x1c] sm:$0xf]
        %v1269 = vld [vmem:[#allocation6 + $0x20] sm:$0xf]
        %v1270 = vld [vmem:[#allocation6 + $0x24] sm:$0xf]
        %v1271 = vld [vmem:[#allocation6 + $0x28] sm:$0xf]
        %v1272 = vld [vmem:[#allocation6 + $0x2c] sm:$0xf]
        %v1273 = vld [vmem:[#allocation6 + $0x30] sm:$0xf]
        %v1274 = vld [vmem:[#allocation6 + $0x34] sm:$0xf]
        %v1275 = vld [vmem:[#allocation6 + $0x38] sm:$0xf]
        %v1276 = vld [vmem:[#allocation6 + $0x3c] sm:$0xf]
        %v1277 = vld [vmem:[%s10] sm:$0x1]
        %v1279 = vperm.slane %v1277, 0
        %v1297 = vunpack.c.l.b16 %v1261
        %v1298 = vunpack.c.l.b16 %v1262
        %v1299 = vunpack.c.l.b16 %v1263
        %v1300 = vunpack.c.l.b16 %v1264
        %v1301 = vunpack.c.l.b16 %v1265
        %v1302 = vunpack.c.l.b16 %v1266
        %v1303 = vunpack.c.l.b16 %v1267
        %v1304 = vunpack.c.l.b16 %v1268
        %v1305 = vunpack.c.l.b16 %v1269
        %v1306 = vunpack.c.l.b16 %v1270
        %v1307 = vunpack.c.l.b16 %v1271
        %v1308 = vunpack.c.l.b16 %v1272
        %v1309 = vunpack.c.l.b16 %v1273
        %v1310 = vunpack.c.l.b16 %v1274
        %v1311 = vunpack.c.l.b16 %v1275
        %v1312 = vunpack.c.l.b16 %v1276
        %v1313 = vpack.c.b16 %v1298, %v1297
        %v1314 = vpack.c.b16 %v1300, %v1299
        %v1315 = vpack.c.b16 %v1302, %v1301
        %v1316 = vpack.c.b16 %v1304, %v1303
        %v1317 = vpack.c.b16 %v1306, %v1305
        %v1318 = vpack.c.b16 %v1308, %v1307
        %v1319 = vpack.c.b16 %v1310, %v1309
        %v1320 = vpack.c.b16 %v1312, %v1311
        %1329 = vmatpush.bf16.msra.mxu0 %v1320
        %1330 = vmatpush.bf16.msra.mxu0 %v1319
        %1331 = vmatpush.bf16.msra.mxu0 %v1318
        %1332 = vmatpush.bf16.msra.mxu0 %v1317
        %1333 = vmatpush.bf16.msra.mxu0 %v1316
        %1334 = vmatpush.bf16.msra.mxu0 %v1315
        %1335 = vmatpush.bf16.msra.mxu0 %v1314
        %1336 = vmatpush.bf16.msra.mxu0 %v1313
        %1337 = vmatmul.bf16.gmra.mxu0 %v1260
        %v1338 = vpop.f32.mrf.mxu0
        %v1339 = vadd.f32 %v1279, %v1338
        %v1340 = vpop.f32.mrf.mxu0
        %v1341 = vadd.f32 %v1279, %v1340
        %1342 = vdwg.mxu0
        %v1343 = vunpack.c.l.bf16 %v604
        %v1344 = vunpack.c.l.bf16 %v605
        %v1345 = vadd.f32 %v1343, %v1339
        %v1346 = vadd.f32 %v1344, %v1341
        %v1347 = vpack.c.bf16 %v1345, %v1345
        %v1348 = vpack.c.bf16 %v1346, %v1346
        %1349 = vst [vmem:[%s602] sm:$0xf] %v1347
        %1350 = vst [vmem:[%s602 + $0x4] sm:$0xf] %v1348
        %s1351 = smul.u32 2, %s29
        %p1352 = scmp.lt.s32.totalorder %s28, 1
        %s1353 = scalar_select %p1352, %s28, 1
        %p1354 = scmp.lt.s32.totalorder %s1351, 7
        %s1355 = scalar_select %p1354, %s1351, 7
        %s1356 = smul.addr %s1353, 8
        %s1357 = sadd.s32 %s1355, %s1356
        %s1358 = smul.addr %s1357, 4
        %s1359 = scalar_lea.vmem %s11, %s1358
        // Predicated region
        $region77: #{gnn_like_processor_forward.6} parent=63 // pred_check
          %p1360 = pneg %p325
        $region78: #{gnn_like_processor_forward.6} parent=63 // pred_check_branch
          %1362 = sbr.rel (%p1360) target = $region80
        $region79: #{gnn_like_processor_forward.6} parent=63 // pred_region
          %s1363 = smul.u32 2, %s29
        $region80: #{gnn_like_processor_forward.6} parent=63 // pred_fallthru
          _
      $region64: #{gnn_like_processor_forward.6} parent=5 // pred_fallthru
        _
      %p1364 = scmp.le.s32.totalorder 2, %s19
      // Predicated region
      $region81: #{gnn_like_processor_forward.6} parent=5 // pred_check
        %p1365 = pneg %p1364
      $region82: #{gnn_like_processor_forward.6} parent=5 // pred_check_branch
        %1367 = sbr.rel (%p1365) target = $region84
      $region83: #{gnn_like_processor_forward.6} parent=5 // pred_region
        %s1368 = ssub.s32 %s19, 2
        // Predicated region
        $region85: #{gnn_like_processor_forward.6} parent=83 // pred_check
          %p1369 = pneg %p331
        $region86: #{gnn_like_processor_forward.6} parent=83 // pred_check_branch
          %1371 = sbr.rel (%p1369) target = $region88
        $region87: #{gnn_like_processor_forward.6} parent=83 // pred_region
          %s1372 = smul.u32 2, %s31
          %p1373 = scmp.lt.s32.totalorder %s30, 1
          %s1374 = scalar_select %p1373, %s30, 1
          %p1375 = scmp.lt.s32.totalorder %s1372, 7
          %s1376 = scalar_select %p1375, %s1372, 7
          %s1377 = smul.addr %s1374, 8
          %s1378 = sadd.s32 %s1376, %s1377
          %s1379 = smul.addr %s1378, 4
          %s1380 = scalar_lea.vmem %s11, %s1379
        $region88: #{gnn_like_processor_forward.6} parent=83 // pred_fallthru
          _
      $region84: #{gnn_like_processor_forward.6} parent=5 // pred_fallthru
        _
    $region6: #{gnn_like_processor_forward.6} parent=1 // loop_footer
      %s23 = sadd.s32 1, %s19
    $region7: #{gnn_like_processor_forward.6} parent=1 // loop_footer_branch
      %18 = sbr.rel target = $region3
    $region8: #{gnn_like_processor_forward.6} parent=1 // loop_exit
      _
    %1381 = vsyncpa [#allocation3], 1
    %s1382 = scalar_lea.sflag [#allocation3], 1
    %1383 = vsyncpa %s1382, 1
    %1384 = vsyncpa [#allocation5], 1

</llo_original>
